<compile_context>
chip_gen: v6e
topology: v6e:2x2x1
jax: 0.10.0
libtpu: 0.0.40
codegen_flags: <defaults>
</compile_context>

<pallas_src>
import functools

import jax
import jax.numpy as jnp
from jax.experimental import pallas as pl
from jax.experimental.pallas import tpu as pltpu

EPS = 1e-5


def _round_up(v, m):
    return (v + m - 1) // m * m


def _conv_bn_prelu_kernel(
    x_ref,        # [1, D, Cinp, HWIN]   (current batch element, resident across d)
    w_ref,        # [kd*kh*kw, Cpad, Cinp]
    mask_ref,     # [1, HWLpad]          1.0 on valid (h<Ho, w<Wo) lanes
    gamma_ref,    # [Cpad, 1]
    beta_ref,     # [Cpad, 1]
    alpha_ref,    # [1]  (SMEM)          PReLU slope
    o_ref,        # [N*Do, Cpad, HWLpad] (single resident output block)
    sum_ref,      # [Cpad, 1] scratch    per-channel sum
    sq_ref,       # [Cpad, 1] scratch    per-channel sum of squares
    *, Do, W, kd, kh, kw, HWLpad, Cpad, n_valid, nd_total):
    n = pl.program_id(0)          # batch element
    d = pl.program_id(1)          # output depth slice
    num_n = pl.num_programs(0)
    num_d = pl.num_programs(1)

    # ---- init the BN statistics accumulators on the very first step ----
    @pl.when(jnp.logical_and(n == 0, d == 0))
    def _():
        sum_ref[...] = jnp.zeros_like(sum_ref)
        sq_ref[...] = jnp.zeros_like(sq_ref)

    # ---- Conv3d for this (n, d): 27 statically-shifted matmuls (MXU), ----
    # ---- f32 accumulation, all operands unmasked (8, 128k) tiles.      ----
    acc = jnp.zeros((Cpad, HWLpad), jnp.float32)
    for a in range(kd):
        row = x_ref[0, d + a]                         # [Cinp, HWIN]
        for b in range(kh):
            for c in range(kw):
                off = b * W + c                       # static lane shift
                piece = row[:, off:off + HWLpad]      # [Cinp, HWLpad]
                wk = w_ref[a * kh * kw + b * kw + c]  # [Cpad, Cinp]
                acc = acc + jnp.dot(wk, piece,
                                    preferred_element_type=jnp.float32)

    nd = n * Do + d
    o_ref[nd] = acc               # raw conv, lane-dense full-tile store

    # ---- accumulate BatchNorm batch statistics over valid lanes only ----
    masked = acc * mask_ref[...]
    sum_ref[...] += jnp.sum(masked, axis=-1, keepdims=True)
    sq_ref[...] += jnp.sum(masked * masked, axis=-1, keepdims=True)

    # ---- finalize: BN (training stats, biased var) + PReLU, in place ----
    @pl.when(jnp.logical_and(n == num_n - 1, d == num_d - 1))
    def _():
        inv_m = jnp.float32(1.0 / n_valid)
        mean = sum_ref[...] * inv_m                       # [Cpad, 1]
        var = sq_ref[...] * inv_m - mean * mean           # biased variance
        scale = gamma_ref[...] * jax.lax.rsqrt(var + EPS)
        shift = beta_ref[...] - mean * scale
        alpha = alpha_ref[0]

        def body(j, carry):
            t = o_ref[j]                                  # [Cpad, HWLpad]
            y = t * scale + shift
            o_ref[j] = jnp.where(y >= 0.0, y, alpha * y)
            return carry

        jax.lax.fori_loop(0, nd_total, body, 0)


def conv_bn_prelu_pallas(x, weight, gamma, beta, alpha,
                         *, compute_dtype=jnp.bfloat16):
    """x: [N, Cin, D, H, W] f32, weight: [Cout, Cin, k, k, k] f32 (torch order)."""
    N, Cin, D, H, W = x.shape
    Cout, Cin_w, kd, kh, kw = weight.shape
    assert Cin_w == Cin
    Do, Ho, Wo = D - kd + 1, H - kh + 1, W - kw + 1

    Cpad = _round_up(max(Cout, 8), 8)             # output channels -> sublanes
    Cinp = _round_up(max(Cin, 8), 8)              # contraction channels padded
    HWL = H * W                                   # linearized "full" HW plane
    HWLpad = _round_up(HWL, 128)                  # lane-dense compute width
    HWIN = _round_up(HWLpad + (kh - 1) * W + (kw - 1), 128)   # + shift halo
    ND = N * Do
    n_valid = N * Do * Ho * Wo                    # true BN population size

    # ---- layout glue (no im2col: HBM footprint stays ~= x itself) ----
    # x: [N, Cin, D, H, W] -> [N, D, Cinp, HWIN]  channels-first, HW linearized,
    # zero halo so every static in-kernel lane shift stays in bounds.
    xl = jnp.transpose(x, (0, 2, 1, 3, 4)).reshape(N, D, Cin, HWL)
    xl = jnp.pad(xl, ((0, 0), (0, 0), (0, Cinp - Cin), (0, HWIN - HWL)))
    xl = xl.astype(compute_dtype)

    # weight: [Cout, Cin, kd, kh, kw] -> [kd*kh*kw, Cpad, Cinp] (zero padded)
    wt = jnp.transpose(weight, (2, 3, 4, 0, 1)).reshape(kd * kh * kw, Cout, Cin)
    wt = jnp.pad(wt, ((0, 0), (0, Cpad - Cout), (0, Cinp - Cin)))
    wt = wt.astype(compute_dtype)

    # validity mask over the HWLpad lanes (positions with h < Ho and w < Wo)
    j = jnp.arange(HWLpad, dtype=jnp.int32)
    mask = (((j // W) < Ho) & ((j % W) < Wo)).astype(jnp.float32)
    mask = mask.reshape(1, HWLpad)

    gamma_p = jnp.pad(gamma.astype(jnp.float32).reshape(-1),
                      (0, Cpad - Cout)).reshape(Cpad, 1)
    beta_p = jnp.pad(beta.astype(jnp.float32).reshape(-1),
                     (0, Cpad - Cout)).reshape(Cpad, 1)
    alpha_p = alpha.astype(jnp.float32).reshape(1)

    kernel = functools.partial(
        _conv_bn_prelu_kernel,
        Do=Do, W=W, kd=kd, kh=kh, kw=kw, HWLpad=HWLpad, Cpad=Cpad,
        n_valid=n_valid, nd_total=ND)

    out = pl.pallas_call(
        kernel,
        out_shape=jax.ShapeDtypeStruct((ND, Cpad, HWLpad), jnp.float32),
        grid_spec=pltpu.PrefetchScalarGridSpec(
            num_scalar_prefetch=0,
            grid=(N, Do),
            in_specs=[
                # full-depth volume per batch element, resident across the d axis
                pl.BlockSpec((1, D, Cinp, HWIN), lambda n, d: (n, 0, 0, 0)),
                pl.BlockSpec((kd * kh * kw, Cpad, Cinp), lambda n, d: (0, 0, 0)),
                pl.BlockSpec((1, HWLpad), lambda n, d: (0, 0)),
                pl.BlockSpec((Cpad, 1), lambda n, d: (0, 0)),
                pl.BlockSpec((Cpad, 1), lambda n, d: (0, 0)),
                pl.BlockSpec(memory_space=pltpu.MemorySpace.SMEM),   # PReLU alpha
            ],
            out_specs=pl.BlockSpec((ND, Cpad, HWLpad), lambda n, d: (0, 0, 0)),
            scratch_shapes=[pltpu.VMEM((Cpad, 1), jnp.float32),
                            pltpu.VMEM((Cpad, 1), jnp.float32)],
        ),
        compiler_params=pltpu.CompilerParams(
            # global BN reduction + VMEM-resident output couple all grid steps
            dimension_semantics=("arbitrary", "arbitrary"),
            vmem_limit_bytes=64 * 1024 * 1024,
        ),
    )(xl, wt, mask, gamma_p, beta_p, alpha_p)

    # ---- unpack: [N*Do, Cpad, HWLpad] -> [N, Cout, Do, Ho, Wo] ----
    out = out[:, :Cout, :HWL].reshape(N, Do, Cout, H, W)[:, :, :, :Ho, :Wo]
    return jnp.transpose(out, (0, 2, 1, 3, 4))


def _reference(x, weight, gamma, beta, alpha):
    """Independent pure-JAX reference of Conv3d -> BN3d(train) -> PReLU."""
    conv = jax.lax.conv_general_dilated(
        x, weight, window_strides=(1, 1, 1), padding="VALID",
        dimension_numbers=("NCDHW", "OIDHW", "NCDHW"))
    mean = jnp.mean(conv, axis=(0, 2, 3, 4), keepdims=True)
    var = jnp.mean((conv - mean) ** 2, axis=(0, 2, 3, 4), keepdims=True)
    y = (conv - mean) / jnp.sqrt(var + EPS)
    y = y * gamma.reshape(1, -1, 1, 1, 1) + beta.reshape(1, -1, 1, 1, 1)
    return jnp.where(y >= 0.0, y, alpha[0] * y)


if __name__ == "__main__":
    key = jax.random.PRNGKey(0)
    k_x, k_w, k_g, k_b = jax.random.split(key, 4)

    # ConvolutionalLayer(n_input_chns=4, n_output_chns=4, kernel_size=3)
    N, Cin, Cout, D, H, W, ksz = 2, 4, 4, 8, 8, 8, 3

    x = jax.random.normal(k_x, (N, Cin, D, H, W), dtype=jnp.float32)
    fan_in = Cin * ksz * ksz * ksz
    weight = jax.random.normal(k_w, (Cout, Cin, ksz, ksz, ksz), dtype=jnp.float32)
    weight = weight / jnp.sqrt(jnp.float32(fan_in))
    gamma = 1.0 + 0.1 * jax.random.normal(k_g, (Cout,), dtype=jnp.float32)
    beta = 0.1 * jax.random.normal(k_b, (Cout,), dtype=jnp.float32)
    alpha = jnp.array([0.25], dtype=jnp.float32)   # PReLU default init

    ref = _reference(x, weight, gamma, beta, alpha)

    # f32 MXU path: tight check of the kernel logic against the reference.
    out_f32 = conv_bn_prelu_pallas(x, weight, gamma, beta, alpha,
                                   compute_dtype=jnp.float32)
    out_f32 = jax.block_until_ready(out_f32)
    expected_shape = (N, Cout, D - ksz + 1, H - ksz + 1, W - ksz + 1)
    assert out_f32.shape == expected_shape, out_f32.shape
    assert jnp.allclose(out_f32, ref, rtol=1e-3, atol=1e-3), "f32 mismatch"

    # bf16 MXU path (default, per v6e/v7x guidance): looser numerical tolerance
    # because conv inputs are rounded to bf16 (f32 accumulation is kept).
    out_bf16 = conv_bn_prelu_pallas(x, weight, gamma, beta, alpha)
    out_bf16 = jax.block_until_ready(out_bf16)
    assert out_bf16.shape == expected_shape, out_bf16.shape
    assert jnp.allclose(out_bf16, ref, rtol=5e-2, atol=5e-2), "bf16 mismatch"

    print("KERNEL_OK")
</pallas_src>

<mosaic_0001>
module attributes {stable_mosaic.version = 11 : i64} {
  func.func @_conv_bn_prelu_kernel(%arg0: i32, %arg1: i32, %arg2: memref<1x8x8x256xf32, #tpu.memory_space<vmem>>, %arg3: memref<27x8x8xf32, #tpu.memory_space<vmem>>, %arg4: memref<1x128xf32, #tpu.memory_space<vmem>>, %arg5: memref<8x1xf32, #tpu.memory_space<vmem>>, %arg6: memref<8x1xf32, #tpu.memory_space<vmem>>, %arg7: memref<1xf32, #tpu.memory_space<smem>>, %arg8: memref<12x8x128xf32, #tpu.memory_space<vmem>>, %arg9: memref<8x1xf32, #tpu.memory_space<vmem>>, %arg10: memref<8x1xf32, #tpu.memory_space<vmem>>) attributes {dimension_semantics = [#tpu.dimension_semantics<arbitrary>, #tpu.dimension_semantics<arbitrary>], iteration_bounds = array<i64: 2, 6>, scalar_prefetch = 0 : i64, scratch_operands = 2 : i64, tpu.core_type = #tpu.core_type<tc>, window_params = [{transform_indices = @transform_0, window_bounds = array<i64: 1, 8, 8, 256>}, {pipeline_mode = #tpu.pipeline_mode<synchronous>, transform_indices = @transform_1, window_bounds = array<i64: 27, 8, 8>}, {pipeline_mode = #tpu.pipeline_mode<synchronous>, transform_indices = @transform_2, window_bounds = array<i64: 1, 128>}, {pipeline_mode = #tpu.pipeline_mode<synchronous>, transform_indices = @transform_3, window_bounds = array<i64: 8, 1>}, {pipeline_mode = #tpu.pipeline_mode<synchronous>, transform_indices = @transform_4, window_bounds = array<i64: 8, 1>}, {transform_indices = @transform_5, window_bounds = array<i64: 1>}, {pipeline_mode = #tpu.pipeline_mode<synchronous>, transform_indices = @transform_6, window_bounds = array<i64: 12, 8, 128>}]} {
    %c0_i32 = arith.constant 0 : i32
    %0 = arith.cmpi eq, %arg0, %c0_i32 : i32
    %c0_i32_0 = arith.constant 0 : i32
    %1 = arith.cmpi eq, %arg1, %c0_i32_0 : i32
    %2 = arith.andi %0, %1 : i1
    %3 = arith.extui %2 : i1 to i32
    %c0_i32_1 = arith.constant 0 : i32
    %4 = arith.cmpi ne, %3, %c0_i32_1 : i32
    scf.if %4 {
      %cst_109 = arith.constant 0.000000e+00 : f32
      %178 = vector.broadcast %cst_109 : f32 to vector<8x1xf32>
      %c0_110 = arith.constant 0 : index
      %c0_111 = arith.constant 0 : index
      %179 = vector.load %arg9[%c0_110, %c0_111] : memref<8x1xf32, #tpu.memory_space<vmem>>, vector<8x1xf32>
      tpu.vector_store %arg9[%c0_110, %c0_111], %178 {strides = array<i32>} : memref<8x1xf32, #tpu.memory_space<vmem>>, vector<8x1xf32>,
      %cst_112 = arith.constant 0.000000e+00 : f32
      %180 = vector.broadcast %cst_112 : f32 to vector<8x1xf32>
      %c0_113 = arith.constant 0 : index
      %c0_114 = arith.constant 0 : index
      %181 = vector.load %arg10[%c0_113, %c0_114] : memref<8x1xf32, #tpu.memory_space<vmem>>, vector<8x1xf32>
      tpu.vector_store %arg10[%c0_113, %c0_114], %180 {strides = array<i32>} : memref<8x1xf32, #tpu.memory_space<vmem>>, vector<8x1xf32>,
    } else {
    }
    %cst = arith.constant 0.000000e+00 : f32
    %5 = vector.broadcast %cst : f32 to vector<8x128xf32>
    %c0_i32_2 = arith.constant 0 : i32
    %6 = arith.addi %arg1, %c0_i32_2 : i32
    %c0 = arith.constant 0 : index
    %7 = arith.index_cast %6 : i32 to index
    %c0_3 = arith.constant 0 : index
    %c0_4 = arith.constant 0 : index
    %8 = vector.load %arg2[%c0, %7, %c0_3, %c0_4] : memref<1x8x8x256xf32, #tpu.memory_space<vmem>>, vector<1x1x8x256xf32>
    %9 = vector.shape_cast %8 : vector<1x1x8x256xf32> to vector<8x256xf32>
    %10 = vector.extract_strided_slice %9 {offsets = [0, 0], sizes = [8, 128], strides = [1, 1]} : vector<8x256xf32> to vector<8x128xf32>
    %c0_5 = arith.constant 0 : index
    %c0_6 = arith.constant 0 : index
    %c0_7 = arith.constant 0 : index
    %11 = vector.load %arg3[%c0_5, %c0_6, %c0_7] : memref<27x8x8xf32, #tpu.memory_space<vmem>>, vector<1x8x8xf32>
    %12 = vector.shape_cast %11 : vector<1x8x8xf32> to vector<8x8xf32>
    %cst_8 = arith.constant dense<0.000000e+00> : vector<8x128xf32>
    %13 = tpu.matmul %12, %10, %cst_8 {dimension_numbers = #tpu.dot_dimension_numbers<[1], [0], [0], [1], [0, 0, 1, 1], [], []>} : vector<8x8xf32>, vector<8x128xf32>, vector<8x128xf32> -> vector<8x128xf32>
    %14 = arith.addf %5, %13 : vector<8x128xf32>
    %15 = vector.extract_strided_slice %9 {offsets = [0, 1], sizes = [8, 128], strides = [1, 1]} : vector<8x256xf32> to vector<8x128xf32>
    %c1 = arith.constant 1 : index
    %c0_9 = arith.constant 0 : index
    %c0_10 = arith.constant 0 : index
    %16 = vector.load %arg3[%c1, %c0_9, %c0_10] : memref<27x8x8xf32, #tpu.memory_space<vmem>>, vector<1x8x8xf32>
    %17 = vector.shape_cast %16 : vector<1x8x8xf32> to vector<8x8xf32>
    %cst_11 = arith.constant dense<0.000000e+00> : vector<8x128xf32>
    %18 = tpu.matmul %17, %15, %cst_11 {dimension_numbers = #tpu.dot_dimension_numbers<[1], [0], [0], [1], [0, 0, 1, 1], [], []>} : vector<8x8xf32>, vector<8x128xf32>, vector<8x128xf32> -> vector<8x128xf32>
    %19 = arith.addf %14, %18 : vector<8x128xf32>
    %20 = vector.extract_strided_slice %9 {offsets = [0, 2], sizes = [8, 128], strides = [1, 1]} : vector<8x256xf32> to vector<8x128xf32>
    %c2 = arith.constant 2 : index
    %c0_12 = arith.constant 0 : index
    %c0_13 = arith.constant 0 : index
    %21 = vector.load %arg3[%c2, %c0_12, %c0_13] : memref<27x8x8xf32, #tpu.memory_space<vmem>>, vector<1x8x8xf32>
    %22 = vector.shape_cast %21 : vector<1x8x8xf32> to vector<8x8xf32>
    %cst_14 = arith.constant dense<0.000000e+00> : vector<8x128xf32>
    %23 = tpu.matmul %22, %20, %cst_14 {dimension_numbers = #tpu.dot_dimension_numbers<[1], [0], [0], [1], [0, 0, 1, 1], [], []>} : vector<8x8xf32>, vector<8x128xf32>, vector<8x128xf32> -> vector<8x128xf32>
    %24 = arith.addf %19, %23 : vector<8x128xf32>
    %25 = vector.extract_strided_slice %9 {offsets = [0, 8], sizes = [8, 128], strides = [1, 1]} : vector<8x256xf32> to vector<8x128xf32>
    %c3 = arith.constant 3 : index
    %c0_15 = arith.constant 0 : index
    %c0_16 = arith.constant 0 : index
    %26 = vector.load %arg3[%c3, %c0_15, %c0_16] : memref<27x8x8xf32, #tpu.memory_space<vmem>>, vector<1x8x8xf32>
    %27 = vector.shape_cast %26 : vector<1x8x8xf32> to vector<8x8xf32>
    %cst_17 = arith.constant dense<0.000000e+00> : vector<8x128xf32>
    %28 = tpu.matmul %27, %25, %cst_17 {dimension_numbers = #tpu.dot_dimension_numbers<[1], [0], [0], [1], [0, 0, 1, 1], [], []>} : vector<8x8xf32>, vector<8x128xf32>, vector<8x128xf32> -> vector<8x128xf32>
    %29 = arith.addf %24, %28 : vector<8x128xf32>
    %30 = vector.extract_strided_slice %9 {offsets = [0, 9], sizes = [8, 128], strides = [1, 1]} : vector<8x256xf32> to vector<8x128xf32>
    %c4 = arith.constant 4 : index
    %c0_18 = arith.constant 0 : index
    %c0_19 = arith.constant 0 : index
    %31 = vector.load %arg3[%c4, %c0_18, %c0_19] : memref<27x8x8xf32, #tpu.memory_space<vmem>>, vector<1x8x8xf32>
    %32 = vector.shape_cast %31 : vector<1x8x8xf32> to vector<8x8xf32>
    %cst_20 = arith.constant dense<0.000000e+00> : vector<8x128xf32>
    %33 = tpu.matmul %32, %30, %cst_20 {dimension_numbers = #tpu.dot_dimension_numbers<[1], [0], [0], [1], [0, 0, 1, 1], [], []>} : vector<8x8xf32>, vector<8x128xf32>, vector<8x128xf32> -> vector<8x128xf32>
    %34 = arith.addf %29, %33 : vector<8x128xf32>
    %35 = vector.extract_strided_slice %9 {offsets = [0, 10], sizes = [8, 128], strides = [1, 1]} : vector<8x256xf32> to vector<8x128xf32>
    %c5 = arith.constant 5 : index
    %c0_21 = arith.constant 0 : index
    %c0_22 = arith.constant 0 : index
    %36 = vector.load %arg3[%c5, %c0_21, %c0_22] : memref<27x8x8xf32, #tpu.memory_space<vmem>>, vector<1x8x8xf32>
    %37 = vector.shape_cast %36 : vector<1x8x8xf32> to vector<8x8xf32>
    %cst_23 = arith.constant dense<0.000000e+00> : vector<8x128xf32>
    %38 = tpu.matmul %37, %35, %cst_23 {dimension_numbers = #tpu.dot_dimension_numbers<[1], [0], [0], [1], [0, 0, 1, 1], [], []>} : vector<8x8xf32>, vector<8x128xf32>, vector<8x128xf32> -> vector<8x128xf32>
    %39 = arith.addf %34, %38 : vector<8x128xf32>
    %40 = vector.extract_strided_slice %9 {offsets = [0, 16], sizes = [8, 128], strides = [1, 1]} : vector<8x256xf32> to vector<8x128xf32>
    %c6 = arith.constant 6 : index
    %c0_24 = arith.constant 0 : index
    %c0_25 = arith.constant 0 : index
    %41 = vector.load %arg3[%c6, %c0_24, %c0_25] : memref<27x8x8xf32, #tpu.memory_space<vmem>>, vector<1x8x8xf32>
    %42 = vector.shape_cast %41 : vector<1x8x8xf32> to vector<8x8xf32>
    %cst_26 = arith.constant dense<0.000000e+00> : vector<8x128xf32>
    %43 = tpu.matmul %42, %40, %cst_26 {dimension_numbers = #tpu.dot_dimension_numbers<[1], [0], [0], [1], [0, 0, 1, 1], [], []>} : vector<8x8xf32>, vector<8x128xf32>, vector<8x128xf32> -> vector<8x128xf32>
    %44 = arith.addf %39, %43 : vector<8x128xf32>
    %45 = vector.extract_strided_slice %9 {offsets = [0, 17], sizes = [8, 128], strides = [1, 1]} : vector<8x256xf32> to vector<8x128xf32>
    %c7 = arith.constant 7 : index
    %c0_27 = arith.constant 0 : index
    %c0_28 = arith.constant 0 : index
    %46 = vector.load %arg3[%c7, %c0_27, %c0_28] : memref<27x8x8xf32, #tpu.memory_space<vmem>>, vector<1x8x8xf32>
    %47 = vector.shape_cast %46 : vector<1x8x8xf32> to vector<8x8xf32>
    %cst_29 = arith.constant dense<0.000000e+00> : vector<8x128xf32>
    %48 = tpu.matmul %47, %45, %cst_29 {dimension_numbers = #tpu.dot_dimension_numbers<[1], [0], [0], [1], [0, 0, 1, 1], [], []>} : vector<8x8xf32>, vector<8x128xf32>, vector<8x128xf32> -> vector<8x128xf32>
    %49 = arith.addf %44, %48 : vector<8x128xf32>
    %50 = vector.extract_strided_slice %9 {offsets = [0, 18], sizes = [8, 128], strides = [1, 1]} : vector<8x256xf32> to vector<8x128xf32>
    %c8 = arith.constant 8 : index
    %c0_30 = arith.constant 0 : index
    %c0_31 = arith.constant 0 : index
    %51 = vector.load %arg3[%c8, %c0_30, %c0_31] : memref<27x8x8xf32, #tpu.memory_space<vmem>>, vector<1x8x8xf32>
    %52 = vector.shape_cast %51 : vector<1x8x8xf32> to vector<8x8xf32>
    %cst_32 = arith.constant dense<0.000000e+00> : vector<8x128xf32>
    %53 = tpu.matmul %52, %50, %cst_32 {dimension_numbers = #tpu.dot_dimension_numbers<[1], [0], [0], [1], [0, 0, 1, 1], [], []>} : vector<8x8xf32>, vector<8x128xf32>, vector<8x128xf32> -> vector<8x128xf32>
    %54 = arith.addf %49, %53 : vector<8x128xf32>
    %c1_i32 = arith.constant 1 : i32
    %55 = arith.addi %arg1, %c1_i32 : i32
    %c0_33 = arith.constant 0 : index
    %56 = arith.index_cast %55 : i32 to index
    %c0_34 = arith.constant 0 : index
    %c0_35 = arith.constant 0 : index
    %57 = vector.load %arg2[%c0_33, %56, %c0_34, %c0_35] : memref<1x8x8x256xf32, #tpu.memory_space<vmem>>, vector<1x1x8x256xf32>
    %58 = vector.shape_cast %57 : vector<1x1x8x256xf32> to vector<8x256xf32>
    %59 = vector.extract_strided_slice %58 {offsets = [0, 0], sizes = [8, 128], strides = [1, 1]} : vector<8x256xf32> to vector<8x128xf32>
    %c9 = arith.constant 9 : index
    %c0_36 = arith.constant 0 : index
    %c0_37 = arith.constant 0 : index
    %60 = vector.load %arg3[%c9, %c0_36, %c0_37] : memref<27x8x8xf32, #tpu.memory_space<vmem>>, vector<1x8x8xf32>
    %61 = vector.shape_cast %60 : vector<1x8x8xf32> to vector<8x8xf32>
    %cst_38 = arith.constant dense<0.000000e+00> : vector<8x128xf32>
    %62 = tpu.matmul %61, %59, %cst_38 {dimension_numbers = #tpu.dot_dimension_numbers<[1], [0], [0], [1], [0, 0, 1, 1], [], []>} : vector<8x8xf32>, vector<8x128xf32>, vector<8x128xf32> -> vector<8x128xf32>
    %63 = arith.addf %54, %62 : vector<8x128xf32>
    %64 = vector.extract_strided_slice %58 {offsets = [0, 1], sizes = [8, 128], strides = [1, 1]} : vector<8x256xf32> to vector<8x128xf32>
    %c10 = arith.constant 10 : index
    %c0_39 = arith.constant 0 : index
    %c0_40 = arith.constant 0 : index
    %65 = vector.load %arg3[%c10, %c0_39, %c0_40] : memref<27x8x8xf32, #tpu.memory_space<vmem>>, vector<1x8x8xf32>
    %66 = vector.shape_cast %65 : vector<1x8x8xf32> to vector<8x8xf32>
    %cst_41 = arith.constant dense<0.000000e+00> : vector<8x128xf32>
    %67 = tpu.matmul %66, %64, %cst_41 {dimension_numbers = #tpu.dot_dimension_numbers<[1], [0], [0], [1], [0, 0, 1, 1], [], []>} : vector<8x8xf32>, vector<8x128xf32>, vector<8x128xf32> -> vector<8x128xf32>
    %68 = arith.addf %63, %67 : vector<8x128xf32>
    %69 = vector.extract_strided_slice %58 {offsets = [0, 2], sizes = [8, 128], strides = [1, 1]} : vector<8x256xf32> to vector<8x128xf32>
    %c11 = arith.constant 11 : index
    %c0_42 = arith.constant 0 : index
    %c0_43 = arith.constant 0 : index
    %70 = vector.load %arg3[%c11, %c0_42, %c0_43] : memref<27x8x8xf32, #tpu.memory_space<vmem>>, vector<1x8x8xf32>
    %71 = vector.shape_cast %70 : vector<1x8x8xf32> to vector<8x8xf32>
    %cst_44 = arith.constant dense<0.000000e+00> : vector<8x128xf32>
    %72 = tpu.matmul %71, %69, %cst_44 {dimension_numbers = #tpu.dot_dimension_numbers<[1], [0], [0], [1], [0, 0, 1, 1], [], []>} : vector<8x8xf32>, vector<8x128xf32>, vector<8x128xf32> -> vector<8x128xf32>
    %73 = arith.addf %68, %72 : vector<8x128xf32>
    %74 = vector.extract_strided_slice %58 {offsets = [0, 8], sizes = [8, 128], strides = [1, 1]} : vector<8x256xf32> to vector<8x128xf32>
    %c12 = arith.constant 12 : index
    %c0_45 = arith.constant 0 : index
    %c0_46 = arith.constant 0 : index
    %75 = vector.load %arg3[%c12, %c0_45, %c0_46] : memref<27x8x8xf32, #tpu.memory_space<vmem>>, vector<1x8x8xf32>
    %76 = vector.shape_cast %75 : vector<1x8x8xf32> to vector<8x8xf32>
    %cst_47 = arith.constant dense<0.000000e+00> : vector<8x128xf32>
    %77 = tpu.matmul %76, %74, %cst_47 {dimension_numbers = #tpu.dot_dimension_numbers<[1], [0], [0], [1], [0, 0, 1, 1], [], []>} : vector<8x8xf32>, vector<8x128xf32>, vector<8x128xf32> -> vector<8x128xf32>
    %78 = arith.addf %73, %77 : vector<8x128xf32>
    %79 = vector.extract_strided_slice %58 {offsets = [0, 9], sizes = [8, 128], strides = [1, 1]} : vector<8x256xf32> to vector<8x128xf32>
    %c13 = arith.constant 13 : index
    %c0_48 = arith.constant 0 : index
    %c0_49 = arith.constant 0 : index
    %80 = vector.load %arg3[%c13, %c0_48, %c0_49] : memref<27x8x8xf32, #tpu.memory_space<vmem>>, vector<1x8x8xf32>
    %81 = vector.shape_cast %80 : vector<1x8x8xf32> to vector<8x8xf32>
    %cst_50 = arith.constant dense<0.000000e+00> : vector<8x128xf32>
    %82 = tpu.matmul %81, %79, %cst_50 {dimension_numbers = #tpu.dot_dimension_numbers<[1], [0], [0], [1], [0, 0, 1, 1], [], []>} : vector<8x8xf32>, vector<8x128xf32>, vector<8x128xf32> -> vector<8x128xf32>
    %83 = arith.addf %78, %82 : vector<8x128xf32>
    %84 = vector.extract_strided_slice %58 {offsets = [0, 10], sizes = [8, 128], strides = [1, 1]} : vector<8x256xf32> to vector<8x128xf32>
    %c14 = arith.constant 14 : index
    %c0_51 = arith.constant 0 : index
    %c0_52 = arith.constant 0 : index
    %85 = vector.load %arg3[%c14, %c0_51, %c0_52] : memref<27x8x8xf32, #tpu.memory_space<vmem>>, vector<1x8x8xf32>
    %86 = vector.shape_cast %85 : vector<1x8x8xf32> to vector<8x8xf32>
    %cst_53 = arith.constant dense<0.000000e+00> : vector<8x128xf32>
    %87 = tpu.matmul %86, %84, %cst_53 {dimension_numbers = #tpu.dot_dimension_numbers<[1], [0], [0], [1], [0, 0, 1, 1], [], []>} : vector<8x8xf32>, vector<8x128xf32>, vector<8x128xf32> -> vector<8x128xf32>
    %88 = arith.addf %83, %87 : vector<8x128xf32>
    %89 = vector.extract_strided_slice %58 {offsets = [0, 16], sizes = [8, 128], strides = [1, 1]} : vector<8x256xf32> to vector<8x128xf32>
    %c15 = arith.constant 15 : index
    %c0_54 = arith.constant 0 : index
    %c0_55 = arith.constant 0 : index
    %90 = vector.load %arg3[%c15, %c0_54, %c0_55] : memref<27x8x8xf32, #tpu.memory_space<vmem>>, vector<1x8x8xf32>
    %91 = vector.shape_cast %90 : vector<1x8x8xf32> to vector<8x8xf32>
    %cst_56 = arith.constant dense<0.000000e+00> : vector<8x128xf32>
    %92 = tpu.matmul %91, %89, %cst_56 {dimension_numbers = #tpu.dot_dimension_numbers<[1], [0], [0], [1], [0, 0, 1, 1], [], []>} : vector<8x8xf32>, vector<8x128xf32>, vector<8x128xf32> -> vector<8x128xf32>
    %93 = arith.addf %88, %92 : vector<8x128xf32>
    %94 = vector.extract_strided_slice %58 {offsets = [0, 17], sizes = [8, 128], strides = [1, 1]} : vector<8x256xf32> to vector<8x128xf32>
    %c16 = arith.constant 16 : index
    %c0_57 = arith.constant 0 : index
    %c0_58 = arith.constant 0 : index
    %95 = vector.load %arg3[%c16, %c0_57, %c0_58] : memref<27x8x8xf32, #tpu.memory_space<vmem>>, vector<1x8x8xf32>
    %96 = vector.shape_cast %95 : vector<1x8x8xf32> to vector<8x8xf32>
    %cst_59 = arith.constant dense<0.000000e+00> : vector<8x128xf32>
    %97 = tpu.matmul %96, %94, %cst_59 {dimension_numbers = #tpu.dot_dimension_numbers<[1], [0], [0], [1], [0, 0, 1, 1], [], []>} : vector<8x8xf32>, vector<8x128xf32>, vector<8x128xf32> -> vector<8x128xf32>
    %98 = arith.addf %93, %97 : vector<8x128xf32>
    %99 = vector.extract_strided_slice %58 {offsets = [0, 18], sizes = [8, 128], strides = [1, 1]} : vector<8x256xf32> to vector<8x128xf32>
    %c17 = arith.constant 17 : index
    %c0_60 = arith.constant 0 : index
    %c0_61 = arith.constant 0 : index
    %100 = vector.load %arg3[%c17, %c0_60, %c0_61] : memref<27x8x8xf32, #tpu.memory_space<vmem>>, vector<1x8x8xf32>
    %101 = vector.shape_cast %100 : vector<1x8x8xf32> to vector<8x8xf32>
    %cst_62 = arith.constant dense<0.000000e+00> : vector<8x128xf32>
    %102 = tpu.matmul %101, %99, %cst_62 {dimension_numbers = #tpu.dot_dimension_numbers<[1], [0], [0], [1], [0, 0, 1, 1], [], []>} : vector<8x8xf32>, vector<8x128xf32>, vector<8x128xf32> -> vector<8x128xf32>
    %103 = arith.addf %98, %102 : vector<8x128xf32>
    %c2_i32 = arith.constant 2 : i32
    %104 = arith.addi %arg1, %c2_i32 : i32
    %c0_63 = arith.constant 0 : index
    %105 = arith.index_cast %104 : i32 to index
    %c0_64 = arith.constant 0 : index
    %c0_65 = arith.constant 0 : index
    %106 = vector.load %arg2[%c0_63, %105, %c0_64, %c0_65] : memref<1x8x8x256xf32, #tpu.memory_space<vmem>>, vector<1x1x8x256xf32>
    %107 = vector.shape_cast %106 : vector<1x1x8x256xf32> to vector<8x256xf32>
    %108 = vector.extract_strided_slice %107 {offsets = [0, 0], sizes = [8, 128], strides = [1, 1]} : vector<8x256xf32> to vector<8x128xf32>
    %c18 = arith.constant 18 : index
    %c0_66 = arith.constant 0 : index
    %c0_67 = arith.constant 0 : index
    %109 = vector.load %arg3[%c18, %c0_66, %c0_67] : memref<27x8x8xf32, #tpu.memory_space<vmem>>, vector<1x8x8xf32>
    %110 = vector.shape_cast %109 : vector<1x8x8xf32> to vector<8x8xf32>
    %cst_68 = arith.constant dense<0.000000e+00> : vector<8x128xf32>
    %111 = tpu.matmul %110, %108, %cst_68 {dimension_numbers = #tpu.dot_dimension_numbers<[1], [0], [0], [1], [0, 0, 1, 1], [], []>} : vector<8x8xf32>, vector<8x128xf32>, vector<8x128xf32> -> vector<8x128xf32>
    %112 = arith.addf %103, %111 : vector<8x128xf32>
    %113 = vector.extract_strided_slice %107 {offsets = [0, 1], sizes = [8, 128], strides = [1, 1]} : vector<8x256xf32> to vector<8x128xf32>
    %c19 = arith.constant 19 : index
    %c0_69 = arith.constant 0 : index
    %c0_70 = arith.constant 0 : index
    %114 = vector.load %arg3[%c19, %c0_69, %c0_70] : memref<27x8x8xf32, #tpu.memory_space<vmem>>, vector<1x8x8xf32>
    %115 = vector.shape_cast %114 : vector<1x8x8xf32> to vector<8x8xf32>
    %cst_71 = arith.constant dense<0.000000e+00> : vector<8x128xf32>
    %116 = tpu.matmul %115, %113, %cst_71 {dimension_numbers = #tpu.dot_dimension_numbers<[1], [0], [0], [1], [0, 0, 1, 1], [], []>} : vector<8x8xf32>, vector<8x128xf32>, vector<8x128xf32> -> vector<8x128xf32>
    %117 = arith.addf %112, %116 : vector<8x128xf32>
    %118 = vector.extract_strided_slice %107 {offsets = [0, 2], sizes = [8, 128], strides = [1, 1]} : vector<8x256xf32> to vector<8x128xf32>
    %c20 = arith.constant 20 : index
    %c0_72 = arith.constant 0 : index
    %c0_73 = arith.constant 0 : index
    %119 = vector.load %arg3[%c20, %c0_72, %c0_73] : memref<27x8x8xf32, #tpu.memory_space<vmem>>, vector<1x8x8xf32>
    %120 = vector.shape_cast %119 : vector<1x8x8xf32> to vector<8x8xf32>
    %cst_74 = arith.constant dense<0.000000e+00> : vector<8x128xf32>
    %121 = tpu.matmul %120, %118, %cst_74 {dimension_numbers = #tpu.dot_dimension_numbers<[1], [0], [0], [1], [0, 0, 1, 1], [], []>} : vector<8x8xf32>, vector<8x128xf32>, vector<8x128xf32> -> vector<8x128xf32>
    %122 = arith.addf %117, %121 : vector<8x128xf32>
    %123 = vector.extract_strided_slice %107 {offsets = [0, 8], sizes = [8, 128], strides = [1, 1]} : vector<8x256xf32> to vector<8x128xf32>
    %c21 = arith.constant 21 : index
    %c0_75 = arith.constant 0 : index
    %c0_76 = arith.constant 0 : index
    %124 = vector.load %arg3[%c21, %c0_75, %c0_76] : memref<27x8x8xf32, #tpu.memory_space<vmem>>, vector<1x8x8xf32>
    %125 = vector.shape_cast %124 : vector<1x8x8xf32> to vector<8x8xf32>
    %cst_77 = arith.constant dense<0.000000e+00> : vector<8x128xf32>
    %126 = tpu.matmul %125, %123, %cst_77 {dimension_numbers = #tpu.dot_dimension_numbers<[1], [0], [0], [1], [0, 0, 1, 1], [], []>} : vector<8x8xf32>, vector<8x128xf32>, vector<8x128xf32> -> vector<8x128xf32>
    %127 = arith.addf %122, %126 : vector<8x128xf32>
    %128 = vector.extract_strided_slice %107 {offsets = [0, 9], sizes = [8, 128], strides = [1, 1]} : vector<8x256xf32> to vector<8x128xf32>
    %c22 = arith.constant 22 : index
    %c0_78 = arith.constant 0 : index
    %c0_79 = arith.constant 0 : index
    %129 = vector.load %arg3[%c22, %c0_78, %c0_79] : memref<27x8x8xf32, #tpu.memory_space<vmem>>, vector<1x8x8xf32>
    %130 = vector.shape_cast %129 : vector<1x8x8xf32> to vector<8x8xf32>
    %cst_80 = arith.constant dense<0.000000e+00> : vector<8x128xf32>
    %131 = tpu.matmul %130, %128, %cst_80 {dimension_numbers = #tpu.dot_dimension_numbers<[1], [0], [0], [1], [0, 0, 1, 1], [], []>} : vector<8x8xf32>, vector<8x128xf32>, vector<8x128xf32> -> vector<8x128xf32>
    %132 = arith.addf %127, %131 : vector<8x128xf32>
    %133 = vector.extract_strided_slice %107 {offsets = [0, 10], sizes = [8, 128], strides = [1, 1]} : vector<8x256xf32> to vector<8x128xf32>
    %c23 = arith.constant 23 : index
    %c0_81 = arith.constant 0 : index
    %c0_82 = arith.constant 0 : index
    %134 = vector.load %arg3[%c23, %c0_81, %c0_82] : memref<27x8x8xf32, #tpu.memory_space<vmem>>, vector<1x8x8xf32>
    %135 = vector.shape_cast %134 : vector<1x8x8xf32> to vector<8x8xf32>
    %cst_83 = arith.constant dense<0.000000e+00> : vector<8x128xf32>
    %136 = tpu.matmul %135, %133, %cst_83 {dimension_numbers = #tpu.dot_dimension_numbers<[1], [0], [0], [1], [0, 0, 1, 1], [], []>} : vector<8x8xf32>, vector<8x128xf32>, vector<8x128xf32> -> vector<8x128xf32>
    %137 = arith.addf %132, %136 : vector<8x128xf32>
    %138 = vector.extract_strided_slice %107 {offsets = [0, 16], sizes = [8, 128], strides = [1, 1]} : vector<8x256xf32> to vector<8x128xf32>
    %c24 = arith.constant 24 : index
    %c0_84 = arith.constant 0 : index
    %c0_85 = arith.constant 0 : index
    %139 = vector.load %arg3[%c24, %c0_84, %c0_85] : memref<27x8x8xf32, #tpu.memory_space<vmem>>, vector<1x8x8xf32>
    %140 = vector.shape_cast %139 : vector<1x8x8xf32> to vector<8x8xf32>
    %cst_86 = arith.constant dense<0.000000e+00> : vector<8x128xf32>
    %141 = tpu.matmul %140, %138, %cst_86 {dimension_numbers = #tpu.dot_dimension_numbers<[1], [0], [0], [1], [0, 0, 1, 1], [], []>} : vector<8x8xf32>, vector<8x128xf32>, vector<8x128xf32> -> vector<8x128xf32>
    %142 = arith.addf %137, %141 : vector<8x128xf32>
    %143 = vector.extract_strided_slice %107 {offsets = [0, 17], sizes = [8, 128], strides = [1, 1]} : vector<8x256xf32> to vector<8x128xf32>
    %c25 = arith.constant 25 : index
    %c0_87 = arith.constant 0 : index
    %c0_88 = arith.constant 0 : index
    %144 = vector.load %arg3[%c25, %c0_87, %c0_88] : memref<27x8x8xf32, #tpu.memory_space<vmem>>, vector<1x8x8xf32>
    %145 = vector.shape_cast %144 : vector<1x8x8xf32> to vector<8x8xf32>
    %cst_89 = arith.constant dense<0.000000e+00> : vector<8x128xf32>
    %146 = tpu.matmul %145, %143, %cst_89 {dimension_numbers = #tpu.dot_dimension_numbers<[1], [0], [0], [1], [0, 0, 1, 1], [], []>} : vector<8x8xf32>, vector<8x128xf32>, vector<8x128xf32> -> vector<8x128xf32>
    %147 = arith.addf %142, %146 : vector<8x128xf32>
    %148 = vector.extract_strided_slice %107 {offsets = [0, 18], sizes = [8, 128], strides = [1, 1]} : vector<8x256xf32> to vector<8x128xf32>
    %c26 = arith.constant 26 : index
    %c0_90 = arith.constant 0 : index
    %c0_91 = arith.constant 0 : index
    %149 = vector.load %arg3[%c26, %c0_90, %c0_91] : memref<27x8x8xf32, #tpu.memory_space<vmem>>, vector<1x8x8xf32>
    %150 = vector.shape_cast %149 : vector<1x8x8xf32> to vector<8x8xf32>
    %cst_92 = arith.constant dense<0.000000e+00> : vector<8x128xf32>
    %151 = tpu.matmul %150, %148, %cst_92 {dimension_numbers = #tpu.dot_dimension_numbers<[1], [0], [0], [1], [0, 0, 1, 1], [], []>} : vector<8x8xf32>, vector<8x128xf32>, vector<8x128xf32> -> vector<8x128xf32>
    %152 = arith.addf %147, %151 : vector<8x128xf32>
    %c6_i32 = arith.constant 6 : i32
    %153 = arith.muli %arg0, %c6_i32 : i32
    %154 = arith.addi %153, %arg1 : i32
    %155 = arith.index_cast %154 : i32 to index
    %c0_93 = arith.constant 0 : index
    %c0_94 = arith.constant 0 : index
    %156 = vector.load %arg8[%155, %c0_93, %c0_94] : memref<12x8x128xf32, #tpu.memory_space<vmem>>, vector<1x8x128xf32>
    %157 = vector.shape_cast %156 : vector<1x8x128xf32> to vector<8x128xf32>
    %158 = vector.shape_cast %152 : vector<8x128xf32> to vector<1x8x128xf32>
    tpu.vector_store %arg8[%155, %c0_93, %c0_94], %158 {strides = array<i32>} : memref<12x8x128xf32, #tpu.memory_space<vmem>>, vector<1x8x128xf32>,
    %c0_95 = arith.constant 0 : index
    %c0_96 = arith.constant 0 : index
    %159 = vector.load %arg4[%c0_95, %c0_96] : memref<1x128xf32, #tpu.memory_space<vmem>>, vector<1x128xf32>
    %160 = vector.broadcast %159 : vector<1x128xf32> to vector<8x128xf32>
    %161 = arith.mulf %152, %160 : vector<8x128xf32>
    %c0_97 = arith.constant 0 : index
    %c0_98 = arith.constant 0 : index
    %162 = vector.load %arg9[%c0_97, %c0_98] : memref<8x1xf32, #tpu.memory_space<vmem>>, vector<8x1xf32>
    %cst_99 = arith.constant dense<0.000000e+00> : vector<8xf32>
    %163 = vector.multi_reduction <add>, %161, %cst_99 [1] : vector<8x128xf32> to vector<8xf32>
    %164 = vector.shape_cast %163 : vector<8xf32> to vector<8x1xf32>
    %165 = arith.addf %162, %164 : vector<8x1xf32>
    %c0_100 = arith.constant 0 : index
    %c0_101 = arith.constant 0 : index
    %166 = vector.load %arg9[%c0_100, %c0_101] : memref<8x1xf32, #tpu.memory_space<vmem>>, vector<8x1xf32>
    tpu.vector_store %arg9[%c0_100, %c0_101], %165 {strides = array<i32>} : memref<8x1xf32, #tpu.memory_space<vmem>>, vector<8x1xf32>,
    %c0_102 = arith.constant 0 : index
    %c0_103 = arith.constant 0 : index
    %167 = vector.load %arg10[%c0_102, %c0_103] : memref<8x1xf32, #tpu.memory_space<vmem>>, vector<8x1xf32>
    %168 = arith.mulf %161, %161 : vector<8x128xf32>
    %cst_104 = arith.constant dense<0.000000e+00> : vector<8xf32>
    %169 = vector.multi_reduction <add>, %168, %cst_104 [1] : vector<8x128xf32> to vector<8xf32>
    %170 = vector.shape_cast %169 : vector<8xf32> to vector<8x1xf32>
    %171 = arith.addf %167, %170 : vector<8x1xf32>
    %c0_105 = arith.constant 0 : index
    %c0_106 = arith.constant 0 : index
    %172 = vector.load %arg10[%c0_105, %c0_106] : memref<8x1xf32, #tpu.memory_space<vmem>>, vector<8x1xf32>
    tpu.vector_store %arg10[%c0_105, %c0_106], %171 {strides = array<i32>} : memref<8x1xf32, #tpu.memory_space<vmem>>, vector<8x1xf32>,
    %c1_i32_107 = arith.constant 1 : i32
    %173 = arith.cmpi eq, %arg0, %c1_i32_107 : i32
    %c5_i32 = arith.constant 5 : i32
    %174 = arith.cmpi eq, %arg1, %c5_i32 : i32
    %175 = arith.andi %173, %174 : i1
    %176 = arith.extui %175 : i1 to i32
    %c0_i32_108 = arith.constant 0 : i32
    %177 = arith.cmpi ne, %176, %c0_i32_108 : i32
    scf.if %177 {
      %c0_109 = arith.constant 0 : index
      %c0_110 = arith.constant 0 : index
      %178 = vector.load %arg9[%c0_109, %c0_110] : memref<8x1xf32, #tpu.memory_space<vmem>>, vector<8x1xf32>
      %cst_111 = arith.constant 0.00231481483 : f32
      %179 = vector.broadcast %cst_111 : f32 to vector<8x1xf32>
      %180 = arith.mulf %178, %179 : vector<8x1xf32>
      %c0_112 = arith.constant 0 : index
      %c0_113 = arith.constant 0 : index
      %181 = vector.load %arg10[%c0_112, %c0_113] : memref<8x1xf32, #tpu.memory_space<vmem>>, vector<8x1xf32>
      %cst_114 = arith.constant 0.00231481483 : f32
      %182 = vector.broadcast %cst_114 : f32 to vector<8x1xf32>
      %183 = arith.mulf %181, %182 : vector<8x1xf32>
      %184 = arith.mulf %180, %180 : vector<8x1xf32>
      %185 = arith.subf %183, %184 : vector<8x1xf32>
      %c0_115 = arith.constant 0 : index
      %c0_116 = arith.constant 0 : index
      %186 = vector.load %arg5[%c0_115, %c0_116] : memref<8x1xf32, #tpu.memory_space<vmem>>, vector<8x1xf32>
      %cst_117 = arith.constant 9.99999974E-6 : f32
      %187 = vector.broadcast %cst_117 : f32 to vector<8x1xf32>
      %188 = arith.addf %185, %187 : vector<8x1xf32>
      %189 = math.rsqrt %188 : vector<8x1xf32>
      %190 = arith.mulf %186, %189 : vector<8x1xf32>
      %c0_118 = arith.constant 0 : index
      %c0_119 = arith.constant 0 : index
      %191 = vector.load %arg6[%c0_118, %c0_119] : memref<8x1xf32, #tpu.memory_space<vmem>>, vector<8x1xf32>
      %192 = arith.mulf %180, %190 : vector<8x1xf32>
      %193 = arith.subf %191, %192 : vector<8x1xf32>
      %c0_120 = arith.constant 0 : index
      %194 = memref.load %arg7[%c0_120] : memref<1xf32, #tpu.memory_space<smem>>
      %c0_i32_121 = arith.constant 0 : i32
      %c12_i32 = arith.constant 12 : i32
      %195 = arith.addi %c0_i32_121, %c12_i32 : i32
      %c1_i32_122 = arith.constant 1 : i32
      scf.for %arg11 = %c0_i32_121 to %195 step %c1_i32_122  : i32 {
        %196 = arith.index_cast %arg11 : i32 to index
        %c0_124 = arith.constant 0 : index
        %c0_125 = arith.constant 0 : index
        %197 = vector.load %arg8[%196, %c0_124, %c0_125] : memref<12x8x128xf32, #tpu.memory_space<vmem>>, vector<1x8x128xf32>
        %198 = vector.shape_cast %197 : vector<1x8x128xf32> to vector<8x128xf32>
        %199 = vector.broadcast %190 : vector<8x1xf32> to vector<8x128xf32>
        %200 = arith.mulf %198, %199 : vector<8x128xf32>
        %201 = vector.broadcast %193 : vector<8x1xf32> to vector<8x128xf32>
        %202 = arith.addf %200, %201 : vector<8x128xf32>
        %cst_126 = arith.constant 0.000000e+00 : f32
        %203 = vector.broadcast %cst_126 : f32 to vector<8x128xf32>
        %204 = arith.cmpf oge, %202, %203 : vector<8x128xf32>
        %205 = vector.broadcast %194 : f32 to vector<8x128xf32>
        %206 = arith.mulf %205, %202 : vector<8x128xf32>
        %207 = arith.select %204, %202, %206 : vector<8x128xi1>, vector<8x128xf32>
        %208 = arith.index_cast %arg11 : i32 to index
        %c0_127 = arith.constant 0 : index
        %c0_128 = arith.constant 0 : index
        %209 = vector.load %arg8[%208, %c0_127, %c0_128] : memref<12x8x128xf32, #tpu.memory_space<vmem>>, vector<1x8x128xf32>
        %210 = vector.shape_cast %209 : vector<1x8x128xf32> to vector<8x128xf32>
        %211 = vector.shape_cast %207 : vector<8x128xf32> to vector<1x8x128xf32>
        tpu.vector_store %arg8[%208, %c0_127, %c0_128], %211 {strides = array<i32>} : memref<12x8x128xf32, #tpu.memory_space<vmem>>, vector<1x8x128xf32>,
      }
      %c12_i32_123 = arith.constant 12 : i32
    } else {
    }
    return
  }
  func.func @transform_0(%arg0: i32, %arg1: i32) -> (i32, i32, i32, i32) {
    %c0_i32 = arith.constant 0 : i32
    %c0_i32_0 = arith.constant 0 : i32
    %c0_i32_1 = arith.constant 0 : i32
    %c0_i32_2 = arith.constant 0 : i32
    return %arg0, %c0_i32, %c0_i32_0, %c0_i32_1 : i32, i32, i32, i32
  }
  func.func @transform_1(%arg0: i32, %arg1: i32) -> (i32, i32, i32) {
    %c0_i32 = arith.constant 0 : i32
    %c0_i32_0 = arith.constant 0 : i32
    %c0_i32_1 = arith.constant 0 : i32
    %c0_i32_2 = arith.constant 0 : i32
    return %c0_i32, %c0_i32_0, %c0_i32_1 : i32, i32, i32
  }
  func.func @transform_2(%arg0: i32, %arg1: i32) -> (i32, i32) {
    %c0_i32 = arith.constant 0 : i32
    %c0_i32_0 = arith.constant 0 : i32
    %c0_i32_1 = arith.constant 0 : i32
    return %c0_i32, %c0_i32_0 : i32, i32
  }
  func.func @transform_3(%arg0: i32, %arg1: i32) -> (i32, i32) {
    %c0_i32 = arith.constant 0 : i32
    %c0_i32_0 = arith.constant 0 : i32
    %c0_i32_1 = arith.constant 0 : i32
    return %c0_i32, %c0_i32_0 : i32, i32
  }
  func.func @transform_4(%arg0: i32, %arg1: i32) -> (i32, i32) {
    %c0_i32 = arith.constant 0 : i32
    %c0_i32_0 = arith.constant 0 : i32
    %c0_i32_1 = arith.constant 0 : i32
    return %c0_i32, %c0_i32_0 : i32, i32
  }
  func.func @transform_5(%arg0: i32, %arg1: i32) -> i32 {
    %c0_i32 = arith.constant 0 : i32
    %c0_i32_0 = arith.constant 0 : i32
    return %c0_i32 : i32
  }
  func.func @transform_6(%arg0: i32, %arg1: i32) -> (i32, i32, i32) {
    %c0_i32 = arith.constant 0 : i32
    %c0_i32_0 = arith.constant 0 : i32
    %c0_i32_1 = arith.constant 0 : i32
    %c0_i32_2 = arith.constant 0 : i32
    return %c0_i32, %c0_i32_0, %c0_i32_1 : i32, i32, i32
  }
}

</mosaic_0001>

<llo_original>
// kernel: tpu_custom_call.1
$region0: #{tpu_custom_call.1}
  #allocation0 [shape = 'u32[]', space=smem, size = 0x4, offset = 0x4, fixed_abs, tag = 'smem constant byte address 0x4 - core index']
  #allocation1 [shape = 'u32[144,128]{1,0:T(1,128)}', space=vmem, size = 0x12000, scoped, tag = 'internal scratch']
  #allocation2 [shape = 'f32[8,1]{1,0:T(8,128)}', space=vmem, size = 0x1000, scoped, tag = 'scratch operand']
  #allocation3 [shape = 'f32[8,1]{1,0:T(8,128)}', space=vmem, size = 0x1000, scoped, tag = 'scratch operand']
  #allocation4 [shape = 'f32[1]{0:T(128)S(6)}', space=smem, size = 0x200, scoped, tag = 'scoped memory for tpu_custom_call.1']
  %s0 = inlined_call_operand.vmem [shape: f32[2,8,8,256], index: 0, kind: input, shape index: {}]
  %s1 = inlined_call_operand.vmem [shape: f32[27,8,8], index: 1, kind: input, shape index: {}]
  %s2 = inlined_call_operand.vmem [shape: f32[1,128], index: 2, kind: input, shape index: {}]
  %s3 = inlined_call_operand.vmem [shape: f32[8,1], index: 3, kind: input, shape index: {}]
  %s4 = inlined_call_operand.vmem [shape: f32[8,1], index: 4, kind: input, shape index: {}]
  %s5 = inlined_call_operand.<no memory space> [shape: f32[1], index: 5, kind: input, shape index: {}]
  %s6 = inlined_call_operand.hbm [shape: f32[12,8,128], index: 6, kind: output, shape index: {}]
  %s7 = sld [smem:[#allocation0]]
  $region72: #{tpu_custom_call.1} parent=0
    _
  %s9 = ssub.s32 1, %s7
  %s10 = scalar_select 0, %s9, %s7
  %11 = sst [smem:[#allocation4]] %s5
  $region1: #{tpu_custom_call.1} parent=0
    #allocation5 [shape = 'u8[49152]{0}', space=vmem, size = 0xc000, scoped, tag = 'output window, operand 0, single buffered']
    #allocation6 [shape = 's32[2]{0}', space=sflag, size = 0x8, scoped, tag = 'scoped memory for tpu_custom_call.1']
    %12 = vsyncpa [#allocation6], 0
    loop: start=0, step=1, limit=14
    $region2: #{tpu_custom_call.1} parent=1 // loop_pre_header
      _
    $region3: #{tpu_custom_call.1} parent=1 // loop_header
      %s14 = sphi 0, %s18
      %p15 = scmp.ge.s32.totalorder %s14, 14
      %s21 = sphi 0, %s33
      %s22 = sphi 0, %s29
      %s23 = sphi 0, %s21
      %s24 = sphi 0, %s22
      %s25 = sphi 0, %s23
      %s26 = sphi 0, %s24
      %s36 = sphi 0, %s38
      %s39 = sphi 0, %s36
      %s40 = sphi 0, %s39
      %s56 = sphi 0, %s40
      %s60 = sphi 0, %s60
      %s62 = sphi 0, %s60
      %s63 = sphi 0, %s62
      %s77 = sphi 0, %s63
      %s81 = sphi 0, %s81
      %s83 = sphi 0, %s81
      %s84 = sphi 0, %s83
      %s98 = sphi 0, %s84
      %s102 = sphi 0, %s102
      %s104 = sphi 0, %s102
      %s105 = sphi 0, %s104
      %s119 = sphi 0, %s105
      %s123 = sphi 0, %s123
      %s125 = sphi 0, %s123
      %s126 = sphi 0, %s125
      %s140 = sphi 0, %s126
      %s144 = sphi 0, %s144
      %s146 = sphi 0, %s144
      %s147 = sphi 0, %s146
      %s161 = sphi 0, %s147
      %s165 = sphi 0, %s165
      %s167 = sphi 0, %s165
      %s168 = sphi 0, %s167
      %s182 = sphi 0, %s168
    $region4: #{tpu_custom_call.1} parent=1 // loop_header_branch
      %17 = sbr.rel (%p15) target = $region8
    $region5: #{tpu_custom_call.1} parent=1 // loop_body
      %s19 = ssub.s32 %s14, 1
      %s20 = ssub.s32 %s14, 2
      %s27 = sadd.s32 1, %s22
      %p28 = scmp.ge.s32.totalorder %s27, 6
      %s29 = scalar_select %p28, 0, %s27
      %s30 = sadd.s32 1, %s21
      %s31 = scalar_select %p28, %s30, %s21
      %p32 = scmp.ge.s32.totalorder %s31, 2
      %s33 = scalar_select %p32, 0, %s31
      %s34 = ssub.s32 %s21, %s33
      %p35 = scmp.eq.s32.totalorder %s34, 0
      %s37 = sadd.s32 %s36, 1
      %s38 = scalar_select %p35, %s36, %s37
      %p41 = pneg %p35
      %p42 = scmp.eq.s32.totalorder %s14, 11
      %p43 = por %p41, %p42
      %p44 = scmp.ne.s32.totalorder %s36, %s39
      %p45 = scmp.eq.s32.totalorder %s14, 0
      %p46 = por %p44, %p45
      %p47 = scmp.ne.s32.totalorder %s36, %s39
      %p48 = scmp.eq.s32.totalorder %s19, 11
      %p49 = por %p47, %p48
      %p50 = scmp.ne.s32.totalorder %s39, %s40
      %p51 = scmp.eq.s32.totalorder %s19, 0
      %p52 = por %p50, %p51
      %p53 = scmp.ne.s32.totalorder %s39, %s40
      %p54 = scmp.eq.s32.totalorder %s20, 11
      %p55 = por %p53, %p54
      %p57 = scmp.ne.s32.totalorder %s40, %s56
      %p58 = scmp.eq.s32.totalorder %s20, 0
      %p59 = por %p57, %p58
      %s61 = sadd.s32 %s60, 1
      %p64 = scmp.eq.s32.totalorder %s14, 11
      %p65 = scmp.ne.s32.totalorder %s60, %s62
      %p66 = scmp.eq.s32.totalorder %s14, 0
      %p67 = por %p65, %p66
      %p68 = scmp.ne.s32.totalorder %s60, %s62
      %p69 = scmp.eq.s32.totalorder %s19, 11
      %p70 = por %p68, %p69
      %p71 = scmp.ne.s32.totalorder %s62, %s63
      %p72 = scmp.eq.s32.totalorder %s19, 0
      %p73 = por %p71, %p72
      %p74 = scmp.ne.s32.totalorder %s62, %s63
      %p75 = scmp.eq.s32.totalorder %s20, 11
      %p76 = por %p74, %p75
      %p78 = scmp.ne.s32.totalorder %s63, %s77
      %p79 = scmp.eq.s32.totalorder %s20, 0
      %p80 = por %p78, %p79
      %s82 = sadd.s32 %s81, 1
      %p85 = scmp.eq.s32.totalorder %s14, 11
      %p86 = scmp.ne.s32.totalorder %s81, %s83
      %p87 = scmp.eq.s32.totalorder %s14, 0
      %p88 = por %p86, %p87
      %p89 = scmp.ne.s32.totalorder %s81, %s83
      %p90 = scmp.eq.s32.totalorder %s19, 11
      %p91 = por %p89, %p90
      %p92 = scmp.ne.s32.totalorder %s83, %s84
      %p93 = scmp.eq.s32.totalorder %s19, 0
      %p94 = por %p92, %p93
      %p95 = scmp.ne.s32.totalorder %s83, %s84
      %p96 = scmp.eq.s32.totalorder %s20, 11
      %p97 = por %p95, %p96
      %p99 = scmp.ne.s32.totalorder %s84, %s98
      %p100 = scmp.eq.s32.totalorder %s20, 0
      %p101 = por %p99, %p100
      %s103 = sadd.s32 %s102, 1
      %p106 = scmp.eq.s32.totalorder %s14, 11
      %p107 = scmp.ne.s32.totalorder %s102, %s104
      %p108 = scmp.eq.s32.totalorder %s14, 0
      %p109 = por %p107, %p108
      %p110 = scmp.ne.s32.totalorder %s102, %s104
      %p111 = scmp.eq.s32.totalorder %s19, 11
      %p112 = por %p110, %p111
      %p113 = scmp.ne.s32.totalorder %s104, %s105
      %p114 = scmp.eq.s32.totalorder %s19, 0
      %p115 = por %p113, %p114
      %p116 = scmp.ne.s32.totalorder %s104, %s105
      %p117 = scmp.eq.s32.totalorder %s20, 11
      %p118 = por %p116, %p117
      %p120 = scmp.ne.s32.totalorder %s105, %s119
      %p121 = scmp.eq.s32.totalorder %s20, 0
      %p122 = por %p120, %p121
      %s124 = sadd.s32 %s123, 1
      %p127 = scmp.eq.s32.totalorder %s14, 11
      %p128 = scmp.ne.s32.totalorder %s123, %s125
      %p129 = scmp.eq.s32.totalorder %s14, 0
      %p130 = por %p128, %p129
      %p131 = scmp.ne.s32.totalorder %s123, %s125
      %p132 = scmp.eq.s32.totalorder %s19, 11
      %p133 = por %p131, %p132
      %p134 = scmp.ne.s32.totalorder %s125, %s126
      %p135 = scmp.eq.s32.totalorder %s19, 0
      %p136 = por %p134, %p135
      %p137 = scmp.ne.s32.totalorder %s125, %s126
      %p138 = scmp.eq.s32.totalorder %s20, 11
      %p139 = por %p137, %p138
      %p141 = scmp.ne.s32.totalorder %s126, %s140
      %p142 = scmp.eq.s32.totalorder %s20, 0
      %p143 = por %p141, %p142
      %s145 = sadd.s32 %s144, 1
      %p148 = scmp.eq.s32.totalorder %s14, 11
      %p149 = scmp.ne.s32.totalorder %s144, %s146
      %p150 = scmp.eq.s32.totalorder %s14, 0
      %p151 = por %p149, %p150
      %p152 = scmp.ne.s32.totalorder %s144, %s146
      %p153 = scmp.eq.s32.totalorder %s19, 11
      %p154 = por %p152, %p153
      %p155 = scmp.ne.s32.totalorder %s146, %s147
      %p156 = scmp.eq.s32.totalorder %s19, 0
      %p157 = por %p155, %p156
      %p158 = scmp.ne.s32.totalorder %s146, %s147
      %p159 = scmp.eq.s32.totalorder %s20, 11
      %p160 = por %p158, %p159
      %p162 = scmp.ne.s32.totalorder %s147, %s161
      %p163 = scmp.eq.s32.totalorder %s20, 0
      %p164 = por %p162, %p163
      %s166 = sadd.s32 %s165, 1
      %p169 = scmp.eq.s32.totalorder %s14, 11
      %p170 = scmp.ne.s32.totalorder %s165, %s167
      %p171 = scmp.eq.s32.totalorder %s14, 0
      %p172 = por %p170, %p171
      %p173 = scmp.ne.s32.totalorder %s165, %s167
      %p174 = scmp.eq.s32.totalorder %s19, 11
      %p175 = por %p173, %p174
      %p176 = scmp.ne.s32.totalorder %s167, %s168
      %p177 = scmp.eq.s32.totalorder %s19, 0
      %p178 = por %p176, %p177
      %p179 = scmp.ne.s32.totalorder %s167, %s168
      %p180 = scmp.eq.s32.totalorder %s20, 11
      %p181 = por %p179, %p180
      %p183 = scmp.ne.s32.totalorder %s168, %s182
      %p184 = scmp.eq.s32.totalorder %s20, 0
      %p185 = por %p183, %p184
      %p186 = scmp.le.s32.totalorder 1, %s14
      %p187 = scmp.lt.s32.totalorder %s14, 13
      %p188 = pnand %p186, %p187
      %p189 = pneg %p188
      // Predicated region
      $region9: #{tpu_custom_call.1} parent=5 // pred_check
        _
      $region10: #{tpu_custom_call.1} parent=5 // pred_check_branch
        %191 = sbr.rel (%p188) target = $region12
      $region11: #{tpu_custom_call.1} parent=5 // pred_region
        %s192 = ssub.s32 %s14, 1
        // Predicated region
        $region13: #{tpu_custom_call.1} parent=11 // pred_check
          %p193 = pneg %p73
        $region14: #{tpu_custom_call.1} parent=11 // pred_check_branch
          %195 = sbr.rel (%p193) target = $region16
        $region15: #{tpu_custom_call.1} parent=11 // pred_region
          _
        $region16: #{tpu_custom_call.1} parent=11 // pred_fallthru
          _
        // Predicated region
        $region17: #{tpu_custom_call.1} parent=11 // pred_check
          %p196 = pneg %p94
        $region18: #{tpu_custom_call.1} parent=11 // pred_check_branch
          %198 = sbr.rel (%p196) target = $region20
        $region19: #{tpu_custom_call.1} parent=11 // pred_region
          _
        $region20: #{tpu_custom_call.1} parent=11 // pred_fallthru
          _
        // Predicated region
        $region21: #{tpu_custom_call.1} parent=11 // pred_check
          %p199 = pneg %p115
        $region22: #{tpu_custom_call.1} parent=11 // pred_check_branch
          %201 = sbr.rel (%p199) target = $region24
        $region23: #{tpu_custom_call.1} parent=11 // pred_region
          _
        $region24: #{tpu_custom_call.1} parent=11 // pred_fallthru
          _
        // Predicated region
        $region25: #{tpu_custom_call.1} parent=11 // pred_check
          %p202 = pneg %p136
        $region26: #{tpu_custom_call.1} parent=11 // pred_check_branch
          %204 = sbr.rel (%p202) target = $region28
        $region27: #{tpu_custom_call.1} parent=11 // pred_region
          _
        $region28: #{tpu_custom_call.1} parent=11 // pred_fallthru
          _
        // Predicated region
        $region29: #{tpu_custom_call.1} parent=11 // pred_check
          %p205 = pneg %p157
        $region30: #{tpu_custom_call.1} parent=11 // pred_check_branch
          %207 = sbr.rel (%p205) target = $region32
        $region31: #{tpu_custom_call.1} parent=11 // pred_region
          _
        $region32: #{tpu_custom_call.1} parent=11 // pred_fallthru
          _
      $region12: #{tpu_custom_call.1} parent=5 // pred_fallthru
        _
      %p208 = scmp.lt.s32.totalorder %s14, 12
      // Predicated region
      $region33: #{tpu_custom_call.1} parent=5 // pred_check
        %p209 = pneg %p208
      $region34: #{tpu_custom_call.1} parent=5 // pred_check_branch
        %211 = sbr.rel (%p209) target = $region36
      $region35: #{tpu_custom_call.1} parent=5 // pred_region
        // Predicated region
        $region37: #{tpu_custom_call.1} parent=35 // pred_check
          %p212 = pneg %p46
        $region38: #{tpu_custom_call.1} parent=35 // pred_check_branch
          %214 = sbr.rel (%p212) target = $region40
        $region39: #{tpu_custom_call.1} parent=35 // pred_region
          %p215 = scmp.lt.s32.totalorder %s21, 1
          %s216 = scalar_select %p215, %s21, 1
          %s217 = smul.addr %s216, 16
          %s218 = smul.addr %s217, 8
          %s219 = scalar_lea.vmem %s0, %s218
        $region40: #{tpu_custom_call.1} parent=35 // pred_fallthru
          _
      $region36: #{tpu_custom_call.1} parent=5 // pred_fallthru
        _
      %p220 = scmp.le.s32.totalorder 1, %s14
      %p221 = scmp.lt.s32.totalorder %s14, 13
      %p222 = pnand %p220, %p221
      %p223 = pneg %p222
      // Predicated region
      $region41: #{tpu_custom_call.1} parent=5 // pred_check
        _
      $region42: #{tpu_custom_call.1} parent=5 // pred_check_branch
        %225 = sbr.rel (%p222) target = $region44
      $region43: #{tpu_custom_call.1} parent=5 // pred_region
        %s226 = ssub.s32 %s14, 1
        %p227 = scmp.lt.s32.totalorder %s23, 1
        %s228 = scalar_select %p227, %s23, 1
        %s229 = smul.addr %s228, 16
        %s230 = smul.addr %s229, 8
        %s231 = scalar_lea.vmem %s0, %s230
        %p232 = pneg %p52
        %p233 = pneg %p49
        %p234 = pneg %p73
        %p235 = pneg %p70
        %p236 = pneg %p94
        %p237 = pneg %p91
        %p238 = pneg %p115
        %p239 = pneg %p112
        %p240 = pneg %p136
        %p241 = pneg %p133
        %p242 = pneg %p157
        %p243 = pneg %p154
        %p244 = pneg %p178
        %p245 = pneg %p175
        %p246 = scmp.lt.s32.totalorder %s23, 1
        %s247 = scalar_select %p246, %s23, 1
        %s248 = smul.addr %s247, 16
        %s249 = smul.addr %s248, 8
        %s250 = scalar_lea.vmem %s0, %s249
        %p251 = scmp.eq.s32.totalorder %s23, 0
        %p252 = scmp.eq.s32.totalorder %s24, 0
        %p253 = pnand %p251, %p252
        %p254 = pneg %p253
        // Predicated region
        $region45: #{tpu_custom_call.1} parent=43 // pred_check
          _
        $region46: #{tpu_custom_call.1} parent=43 // pred_check_branch
          %256 = sbr.rel (%p253) target = $region48
        $region47: #{tpu_custom_call.1} parent=43 // pred_region
          %vm257 = vcmask 7168
          %258 = vst.msk [vmem:[#allocation2] sm:$0xff] %vm257, 0.0
          %259 = vst.msk [vmem:[#allocation3] sm:$0xff] %vm257, 0.0
        $region48: #{tpu_custom_call.1} parent=43 // pred_fallthru
          _
        %s260 = smul.u32 %s24, 2
        %s261 = smul.addr %s260, 8
        %s262 = scalar_lea.vmem %s250, %s261
        %v263 = vld [vmem:[%s262] sm:$0xff]
        %v264 = vld [vmem:[%s262 + $0x8] sm:$0xff]
        %v265 = vld [vmem:[%s1] sm:$0xff]
        %s266 = scalar_lea.vmem %s1, 8
        %v267 = vld [vmem:[%s266] sm:$0xff]
        %270 = vrot.lane.b32.xlu0 %v263, 127
        %v271 = vpop.permute.xlu0 %270
        %272 = vrot.lane.b32.xlu0 %v264, 127
        %v273 = vpop.permute.xlu0 %272
        %vm274 = vcmask 1039360
        %v275 = vsel %vm274, %v271, %v273
        %vm277 = vcmask 64512
        %v279 = vsel %vm277, %v267, 0
        %281 = vmatprep.subr.mxu0 0.0
        %282 = vmatpush1.msra.mxu0 0.0
        %283 = vmatprep.subr.mxu0 0.0
        %284 = vmatpush1.msra.mxu0 0.0
        %285 = vmatprep.subr.mxu0 0.0
        %286 = vmatpush1.msra.mxu0 0.0
        %287 = vmatprep.subr.mxu0 0.0
        %288 = vmatpush1.msra.mxu0 0.0
        %289 = vmatprep.subr.mxu0 0.0
        %290 = vmatpush1.msra.mxu0 0.0
        %291 = vmatprep.subr.mxu0 0.0
        %292 = vmatpush1.msra.mxu0 0.0
        %293 = vmatprep.subr.mxu0 0.0
        %294 = vmatpush1.msra.mxu0 0.0
        %295 = vmatprep.subr.mxu0 0.0
        %296 = vmatpush1.msra.mxu0 0.0
        %297 = vmatprep.subr.mxu0 0.0
        %298 = vmatpush1.msra.mxu0 0.0
        %299 = vmatprep.subr.mxu0 0.0
        %300 = vmatpush1.msra.mxu0 0.0
        %301 = vmatprep.subr.mxu0 0.0
        %302 = vmatpush1.msra.mxu0 0.0
        %303 = vmatprep.subr.mxu0 0.0
        %304 = vmatpush1.msra.mxu0 0.0
        %305 = vmatprep.subr.mxu0 0.0
        %306 = vmatpush1.msra.mxu0 0.0
        %307 = vmatprep.subr.mxu0 0.0
        %308 = vmatpush1.msra.mxu0 0.0
        %309 = vmatprep.subr.mxu0 0.0
        %310 = vmatpush1.msra.mxu0 0.0
        %311 = vmatprep.subr.mxu0 0.0
        %312 = vmatpush1.msra.mxu0 %v275
        %313 = vmatprep.subr.mxu0 0.0
        %314 = vmatpush2.msra.mxu0 0.0
        %315 = vmatprep.subr.mxu0 0.0
        %316 = vmatpush2.msra.mxu0 0.0
        %317 = vmatprep.subr.mxu0 0.0
        %318 = vmatpush2.msra.mxu0 0.0
        %319 = vmatprep.subr.mxu0 0.0
        %320 = vmatpush2.msra.mxu0 0.0
        %321 = vmatprep.subr.mxu0 0.0
        %322 = vmatpush2.msra.mxu0 0.0
        %323 = vmatprep.subr.mxu0 0.0
        %324 = vmatpush2.msra.mxu0 0.0
        %325 = vmatprep.subr.mxu0 0.0
        %326 = vmatpush2.msra.mxu0 0.0
        %327 = vmatprep.subr.mxu0 0.0
        %328 = vmatpush2.msra.mxu0 0.0
        %329 = vmatprep.subr.mxu0 0.0
        %330 = vmatpush2.msra.mxu0 0.0
        %331 = vmatprep.subr.mxu0 0.0
        %332 = vmatpush2.msra.mxu0 0.0
        %333 = vmatprep.subr.mxu0 0.0
        %334 = vmatpush2.msra.mxu0 0.0
        %335 = vmatprep.subr.mxu0 0.0
        %336 = vmatpush2.msra.mxu0 0.0
        %337 = vmatprep.subr.mxu0 0.0
        %338 = vmatpush2.msra.mxu0 0.0
        %339 = vmatprep.subr.mxu0 0.0
        %340 = vmatpush2.msra.mxu0 0.0
        %341 = vmatprep.subr.mxu0 0.0
        %342 = vmatpush2.msra.mxu0 0.0
        %343 = vmatprep.subr.mxu0 0.0
        %344 = vmatpush2.msra.mxu0 0.0
        %345 = vmatprep.mubr.f32.mxu0 0.0
        %346 = vmatmul.mubr.f32.gmra.mxu0 %v279
        %v347 = vpop.f32.mrf.mxu0
        %v348 = vadd.f32 0.0, %v347
        %v349 = vpop.f32.mrf.mxu0
        %350 = vdwg.mxu0
        %v352 = vsel %vm277, %v265, 0
        %354 = vmatprep.subr.mxu0 0.0
        %355 = vmatpush1.msra.mxu0 0.0
        %356 = vmatprep.subr.mxu0 0.0
        %357 = vmatpush1.msra.mxu0 0.0
        %358 = vmatprep.subr.mxu0 0.0
        %359 = vmatpush1.msra.mxu0 0.0
        %360 = vmatprep.subr.mxu0 0.0
        %361 = vmatpush1.msra.mxu0 0.0
        %362 = vmatprep.subr.mxu0 0.0
        %363 = vmatpush1.msra.mxu0 0.0
        %364 = vmatprep.subr.mxu0 0.0
        %365 = vmatpush1.msra.mxu0 0.0
        %366 = vmatprep.subr.mxu0 0.0
        %367 = vmatpush1.msra.mxu0 0.0
        %368 = vmatprep.subr.mxu0 0.0
        %369 = vmatpush1.msra.mxu0 0.0
        %370 = vmatprep.subr.mxu0 0.0
        %371 = vmatpush1.msra.mxu0 0.0
        %372 = vmatprep.subr.mxu0 0.0
        %373 = vmatpush1.msra.mxu0 0.0
        %374 = vmatprep.subr.mxu0 0.0
        %375 = vmatpush1.msra.mxu0 0.0
        %376 = vmatprep.subr.mxu0 0.0
        %377 = vmatpush1.msra.mxu0 0.0
        %378 = vmatprep.subr.mxu0 0.0
        %379 = vmatpush1.msra.mxu0 0.0
        %380 = vmatprep.subr.mxu0 0.0
        %381 = vmatpush1.msra.mxu0 0.0
        %382 = vmatprep.subr.mxu0 0.0
        %383 = vmatpush1.msra.mxu0 0.0
        %384 = vmatprep.subr.mxu0 0.0
        %385 = vmatpush1.msra.mxu0 %v263
        %386 = vmatprep.subr.mxu0 0.0
        %387 = vmatpush2.msra.mxu0 0.0
        %388 = vmatprep.subr.mxu0 0.0
        %389 = vmatpush2.msra.mxu0 0.0
        %390 = vmatprep.subr.mxu0 0.0
        %391 = vmatpush2.msra.mxu0 0.0
        %392 = vmatprep.subr.mxu0 0.0
        %393 = vmatpush2.msra.mxu0 0.0
        %394 = vmatprep.subr.mxu0 0.0
        %395 = vmatpush2.msra.mxu0 0.0
        %396 = vmatprep.subr.mxu0 0.0
        %397 = vmatpush2.msra.mxu0 0.0
        %398 = vmatprep.subr.mxu0 0.0
        %399 = vmatpush2.msra.mxu0 0.0
        %400 = vmatprep.subr.mxu0 0.0
        %401 = vmatpush2.msra.mxu0 0.0
        %402 = vmatprep.subr.mxu0 0.0
        %403 = vmatpush2.msra.mxu0 0.0
        %404 = vmatprep.subr.mxu0 0.0
        %405 = vmatpush2.msra.mxu0 0.0
        %406 = vmatprep.subr.mxu0 0.0
        %407 = vmatpush2.msra.mxu0 0.0
        %408 = vmatprep.subr.mxu0 0.0
        %409 = vmatpush2.msra.mxu0 0.0
        %410 = vmatprep.subr.mxu0 0.0
        %411 = vmatpush2.msra.mxu0 0.0
        %412 = vmatprep.subr.mxu0 0.0
        %413 = vmatpush2.msra.mxu0 0.0
        %414 = vmatprep.subr.mxu0 0.0
        %415 = vmatpush2.msra.mxu0 0.0
        %416 = vmatprep.subr.mxu0 0.0
        %417 = vmatpush2.msra.mxu0 0.0
        %418 = vmatprep.mubr.f32.mxu0 0.0
        %419 = vmatmul.mubr.f32.gmra.mxu0 %v352
        %v420 = vpop.f32.mrf.mxu0
        %v421 = vadd.f32 %v348, %v420
        %v422 = vpop.f32.mrf.mxu0
        %423 = vdwg.mxu0
        %s424 = scalar_lea.vmem %s1, 16
        %v425 = vld [vmem:[%s424] sm:$0xff]
        %426 = vrot.lane.b32.xlu0 %v263, 126
        %v427 = vpop.permute.xlu0 %426
        %428 = vrot.lane.b32.xlu0 %v264, 126
        %v429 = vpop.permute.xlu0 %428
        %vm430 = vcmask 1031168
        %v431 = vsel %vm430, %v427, %v429
        %v434 = vsel %vm277, %v425, 0
        %436 = vmatprep.subr.mxu0 0.0
        %437 = vmatpush1.msra.mxu0 0.0
        %438 = vmatprep.subr.mxu0 0.0
        %439 = vmatpush1.msra.mxu0 0.0
        %440 = vmatprep.subr.mxu0 0.0
        %441 = vmatpush1.msra.mxu0 0.0
        %442 = vmatprep.subr.mxu0 0.0
        %443 = vmatpush1.msra.mxu0 0.0
        %444 = vmatprep.subr.mxu0 0.0
        %445 = vmatpush1.msra.mxu0 0.0
        %446 = vmatprep.subr.mxu0 0.0
        %447 = vmatpush1.msra.mxu0 0.0
        %448 = vmatprep.subr.mxu0 0.0
        %449 = vmatpush1.msra.mxu0 0.0
        %450 = vmatprep.subr.mxu0 0.0
        %451 = vmatpush1.msra.mxu0 0.0
        %452 = vmatprep.subr.mxu0 0.0
        %453 = vmatpush1.msra.mxu0 0.0
        %454 = vmatprep.subr.mxu0 0.0
        %455 = vmatpush1.msra.mxu0 0.0
        %456 = vmatprep.subr.mxu0 0.0
        %457 = vmatpush1.msra.mxu0 0.0
        %458 = vmatprep.subr.mxu0 0.0
        %459 = vmatpush1.msra.mxu0 0.0
        %460 = vmatprep.subr.mxu0 0.0
        %461 = vmatpush1.msra.mxu0 0.0
        %462 = vmatprep.subr.mxu0 0.0
        %463 = vmatpush1.msra.mxu0 0.0
        %464 = vmatprep.subr.mxu0 0.0
        %465 = vmatpush1.msra.mxu0 0.0
        %466 = vmatprep.subr.mxu0 0.0
        %467 = vmatpush1.msra.mxu0 %v431
        %468 = vmatprep.subr.mxu0 0.0
        %469 = vmatpush2.msra.mxu0 0.0
        %470 = vmatprep.subr.mxu0 0.0
        %471 = vmatpush2.msra.mxu0 0.0
        %472 = vmatprep.subr.mxu0 0.0
        %473 = vmatpush2.msra.mxu0 0.0
        %474 = vmatprep.subr.mxu0 0.0
        %475 = vmatpush2.msra.mxu0 0.0
        %476 = vmatprep.subr.mxu0 0.0
        %477 = vmatpush2.msra.mxu0 0.0
        %478 = vmatprep.subr.mxu0 0.0
        %479 = vmatpush2.msra.mxu0 0.0
        %480 = vmatprep.subr.mxu0 0.0
        %481 = vmatpush2.msra.mxu0 0.0
        %482 = vmatprep.subr.mxu0 0.0
        %483 = vmatpush2.msra.mxu0 0.0
        %484 = vmatprep.subr.mxu0 0.0
        %485 = vmatpush2.msra.mxu0 0.0
        %486 = vmatprep.subr.mxu0 0.0
        %487 = vmatpush2.msra.mxu0 0.0
        %488 = vmatprep.subr.mxu0 0.0
        %489 = vmatpush2.msra.mxu0 0.0
        %490 = vmatprep.subr.mxu0 0.0
        %491 = vmatpush2.msra.mxu0 0.0
        %492 = vmatprep.subr.mxu0 0.0
        %493 = vmatpush2.msra.mxu0 0.0
        %494 = vmatprep.subr.mxu0 0.0
        %495 = vmatpush2.msra.mxu0 0.0
        %496 = vmatprep.subr.mxu0 0.0
        %497 = vmatpush2.msra.mxu0 0.0
        %498 = vmatprep.subr.mxu0 0.0
        %499 = vmatpush2.msra.mxu0 0.0
        %500 = vmatprep.mubr.f32.mxu0 0.0
        %501 = vmatmul.mubr.f32.gmra.mxu0 %v434
        %v502 = vpop.f32.mrf.mxu0
        %v503 = vadd.f32 0.0, %v502
        %v504 = vpop.f32.mrf.mxu0
        %505 = vdwg.mxu0
        %v506 = vadd.f32 %v421, %v503
        %s507 = scalar_lea.vmem %s1, 24
        %v508 = vld [vmem:[%s507] sm:$0xff]
        %509 = vrot.lane.b32.xlu0 %v263, 120
        %v510 = vpop.permute.xlu0 %509
        %511 = vrot.lane.b32.xlu0 %v264, 120
        %v512 = vpop.permute.xlu0 %511
        %vm513 = vcmask 982016
        %v514 = vsel %vm513, %v510, %v512
        %v517 = vsel %vm277, %v508, 0
        %519 = vmatprep.subr.mxu0 0.0
        %520 = vmatpush1.msra.mxu0 0.0
        %521 = vmatprep.subr.mxu0 0.0
        %522 = vmatpush1.msra.mxu0 0.0
        %523 = vmatprep.subr.mxu0 0.0
        %524 = vmatpush1.msra.mxu0 0.0
        %525 = vmatprep.subr.mxu0 0.0
        %526 = vmatpush1.msra.mxu0 0.0
        %527 = vmatprep.subr.mxu0 0.0
        %528 = vmatpush1.msra.mxu0 0.0
        %529 = vmatprep.subr.mxu0 0.0
        %530 = vmatpush1.msra.mxu0 0.0
        %531 = vmatprep.subr.mxu0 0.0
        %532 = vmatpush1.msra.mxu0 0.0
        %533 = vmatprep.subr.mxu0 0.0
        %534 = vmatpush1.msra.mxu0 0.0
        %535 = vmatprep.subr.mxu0 0.0
        %536 = vmatpush1.msra.mxu0 0.0
        %537 = vmatprep.subr.mxu0 0.0
        %538 = vmatpush1.msra.mxu0 0.0
        %539 = vmatprep.subr.mxu0 0.0
        %540 = vmatpush1.msra.mxu0 0.0
        %541 = vmatprep.subr.mxu0 0.0
        %542 = vmatpush1.msra.mxu0 0.0
        %543 = vmatprep.subr.mxu0 0.0
        %544 = vmatpush1.msra.mxu0 0.0
        %545 = vmatprep.subr.mxu0 0.0
        %546 = vmatpush1.msra.mxu0 0.0
        %547 = vmatprep.subr.mxu0 0.0
        %548 = vmatpush1.msra.mxu0 0.0
        %549 = vmatprep.subr.mxu0 0.0
        %550 = vmatpush1.msra.mxu0 %v514
        %551 = vmatprep.subr.mxu0 0.0
        %552 = vmatpush2.msra.mxu0 0.0
        %553 = vmatprep.subr.mxu0 0.0
        %554 = vmatpush2.msra.mxu0 0.0
        %555 = vmatprep.subr.mxu0 0.0
        %556 = vmatpush2.msra.mxu0 0.0
        %557 = vmatprep.subr.mxu0 0.0
        %558 = vmatpush2.msra.mxu0 0.0
        %559 = vmatprep.subr.mxu0 0.0
        %560 = vmatpush2.msra.mxu0 0.0
        %561 = vmatprep.subr.mxu0 0.0
        %562 = vmatpush2.msra.mxu0 0.0
        %563 = vmatprep.subr.mxu0 0.0
        %564 = vmatpush2.msra.mxu0 0.0
        %565 = vmatprep.subr.mxu0 0.0
        %566 = vmatpush2.msra.mxu0 0.0
        %567 = vmatprep.subr.mxu0 0.0
        %568 = vmatpush2.msra.mxu0 0.0
        %569 = vmatprep.subr.mxu0 0.0
        %570 = vmatpush2.msra.mxu0 0.0
        %571 = vmatprep.subr.mxu0 0.0
        %572 = vmatpush2.msra.mxu0 0.0
        %573 = vmatprep.subr.mxu0 0.0
        %574 = vmatpush2.msra.mxu0 0.0
        %575 = vmatprep.subr.mxu0 0.0
        %576 = vmatpush2.msra.mxu0 0.0
        %577 = vmatprep.subr.mxu0 0.0
        %578 = vmatpush2.msra.mxu0 0.0
        %579 = vmatprep.subr.mxu0 0.0
        %580 = vmatpush2.msra.mxu0 0.0
        %581 = vmatprep.subr.mxu0 0.0
        %582 = vmatpush2.msra.mxu0 0.0
        %583 = vmatprep.mubr.f32.mxu0 0.0
        %584 = vmatmul.mubr.f32.gmra.mxu0 %v517
        %v585 = vpop.f32.mrf.mxu0
        %v586 = vadd.f32 0.0, %v585
        %v587 = vpop.f32.mrf.mxu0
        %588 = vdwg.mxu0
        %v589 = vadd.f32 %v506, %v586
        %s590 = scalar_lea.vmem %s1, 32
        %v591 = vld [vmem:[%s590] sm:$0xff]
        %592 = vrot.lane.b32.xlu0 %v263, 119
        %v593 = vpop.permute.xlu0 %592
        %594 = vrot.lane.b32.xlu0 %v264, 119
        %v595 = vpop.permute.xlu0 %594
        %vm596 = vcmask 973824
        %v597 = vsel %vm596, %v593, %v595
        %v600 = vsel %vm277, %v591, 0
        %602 = vmatprep.subr.mxu0 0.0
        %603 = vmatpush1.msra.mxu0 0.0
        %604 = vmatprep.subr.mxu0 0.0
        %605 = vmatpush1.msra.mxu0 0.0
        %606 = vmatprep.subr.mxu0 0.0
        %607 = vmatpush1.msra.mxu0 0.0
        %608 = vmatprep.subr.mxu0 0.0
        %609 = vmatpush1.msra.mxu0 0.0
        %610 = vmatprep.subr.mxu0 0.0
        %611 = vmatpush1.msra.mxu0 0.0
        %612 = vmatprep.subr.mxu0 0.0
        %613 = vmatpush1.msra.mxu0 0.0
        %614 = vmatprep.subr.mxu0 0.0
        %615 = vmatpush1.msra.mxu0 0.0
        %616 = vmatprep.subr.mxu0 0.0
        %617 = vmatpush1.msra.mxu0 0.0
        %618 = vmatprep.subr.mxu0 0.0
        %619 = vmatpush1.msra.mxu0 0.0
        %620 = vmatprep.subr.mxu0 0.0
        %621 = vmatpush1.msra.mxu0 0.0
        %622 = vmatprep.subr.mxu0 0.0
        %623 = vmatpush1.msra.mxu0 0.0
        %624 = vmatprep.subr.mxu0 0.0
        %625 = vmatpush1.msra.mxu0 0.0
        %626 = vmatprep.subr.mxu0 0.0
        %627 = vmatpush1.msra.mxu0 0.0
        %628 = vmatprep.subr.mxu0 0.0
        %629 = vmatpush1.msra.mxu0 0.0
        %630 = vmatprep.subr.mxu0 0.0
        %631 = vmatpush1.msra.mxu0 0.0
        %632 = vmatprep.subr.mxu0 0.0
        %633 = vmatpush1.msra.mxu0 %v597
        %634 = vmatprep.subr.mxu0 0.0
        %635 = vmatpush2.msra.mxu0 0.0
        %636 = vmatprep.subr.mxu0 0.0
        %637 = vmatpush2.msra.mxu0 0.0
        %638 = vmatprep.subr.mxu0 0.0
        %639 = vmatpush2.msra.mxu0 0.0
        %640 = vmatprep.subr.mxu0 0.0
        %641 = vmatpush2.msra.mxu0 0.0
        %642 = vmatprep.subr.mxu0 0.0
        %643 = vmatpush2.msra.mxu0 0.0
        %644 = vmatprep.subr.mxu0 0.0
        %645 = vmatpush2.msra.mxu0 0.0
        %646 = vmatprep.subr.mxu0 0.0
        %647 = vmatpush2.msra.mxu0 0.0
        %648 = vmatprep.subr.mxu0 0.0
        %649 = vmatpush2.msra.mxu0 0.0
        %650 = vmatprep.subr.mxu0 0.0
        %651 = vmatpush2.msra.mxu0 0.0
        %652 = vmatprep.subr.mxu0 0.0
        %653 = vmatpush2.msra.mxu0 0.0
        %654 = vmatprep.subr.mxu0 0.0
        %655 = vmatpush2.msra.mxu0 0.0
        %656 = vmatprep.subr.mxu0 0.0
        %657 = vmatpush2.msra.mxu0 0.0
        %658 = vmatprep.subr.mxu0 0.0
        %659 = vmatpush2.msra.mxu0 0.0
        %660 = vmatprep.subr.mxu0 0.0
        %661 = vmatpush2.msra.mxu0 0.0
        %662 = vmatprep.subr.mxu0 0.0
        %663 = vmatpush2.msra.mxu0 0.0
        %664 = vmatprep.subr.mxu0 0.0
        %665 = vmatpush2.msra.mxu0 0.0
        %666 = vmatprep.mubr.f32.mxu0 0.0
        %667 = vmatmul.mubr.f32.gmra.mxu0 %v600
        %v668 = vpop.f32.mrf.mxu0
        %v669 = vadd.f32 0.0, %v668
        %v670 = vpop.f32.mrf.mxu0
        %671 = vdwg.mxu0
        %v672 = vadd.f32 %v589, %v669
        %s673 = scalar_lea.vmem %s1, 40
        %v674 = vld [vmem:[%s673] sm:$0xff]
        %675 = vrot.lane.b32.xlu0 %v263, 118
        %v676 = vpop.permute.xlu0 %675
        %677 = vrot.lane.b32.xlu0 %v264, 118
        %v678 = vpop.permute.xlu0 %677
        %vm679 = vcmask 965632
        %v680 = vsel %vm679, %v676, %v678
        %v683 = vsel %vm277, %v674, 0
        %685 = vmatprep.subr.mxu0 0.0
        %686 = vmatpush1.msra.mxu0 0.0
        %687 = vmatprep.subr.mxu0 0.0
        %688 = vmatpush1.msra.mxu0 0.0
        %689 = vmatprep.subr.mxu0 0.0
        %690 = vmatpush1.msra.mxu0 0.0
        %691 = vmatprep.subr.mxu0 0.0
        %692 = vmatpush1.msra.mxu0 0.0
        %693 = vmatprep.subr.mxu0 0.0
        %694 = vmatpush1.msra.mxu0 0.0
        %695 = vmatprep.subr.mxu0 0.0
        %696 = vmatpush1.msra.mxu0 0.0
        %697 = vmatprep.subr.mxu0 0.0
        %698 = vmatpush1.msra.mxu0 0.0
        %699 = vmatprep.subr.mxu0 0.0
        %700 = vmatpush1.msra.mxu0 0.0
        %701 = vmatprep.subr.mxu0 0.0
        %702 = vmatpush1.msra.mxu0 0.0
        %703 = vmatprep.subr.mxu0 0.0
        %704 = vmatpush1.msra.mxu0 0.0
        %705 = vmatprep.subr.mxu0 0.0
        %706 = vmatpush1.msra.mxu0 0.0
        %707 = vmatprep.subr.mxu0 0.0
        %708 = vmatpush1.msra.mxu0 0.0
        %709 = vmatprep.subr.mxu0 0.0
        %710 = vmatpush1.msra.mxu0 0.0
        %711 = vmatprep.subr.mxu0 0.0
        %712 = vmatpush1.msra.mxu0 0.0
        %713 = vmatprep.subr.mxu0 0.0
        %714 = vmatpush1.msra.mxu0 0.0
        %715 = vmatprep.subr.mxu0 0.0
        %716 = vmatpush1.msra.mxu0 %v680
        %717 = vmatprep.subr.mxu0 0.0
        %718 = vmatpush2.msra.mxu0 0.0
        %719 = vmatprep.subr.mxu0 0.0
        %720 = vmatpush2.msra.mxu0 0.0
        %721 = vmatprep.subr.mxu0 0.0
        %722 = vmatpush2.msra.mxu0 0.0
        %723 = vmatprep.subr.mxu0 0.0
        %724 = vmatpush2.msra.mxu0 0.0
        %725 = vmatprep.subr.mxu0 0.0
        %726 = vmatpush2.msra.mxu0 0.0
        %727 = vmatprep.subr.mxu0 0.0
        %728 = vmatpush2.msra.mxu0 0.0
        %729 = vmatprep.subr.mxu0 0.0
        %730 = vmatpush2.msra.mxu0 0.0
        %731 = vmatprep.subr.mxu0 0.0
        %732 = vmatpush2.msra.mxu0 0.0
        %733 = vmatprep.subr.mxu0 0.0
        %734 = vmatpush2.msra.mxu0 0.0
        %735 = vmatprep.subr.mxu0 0.0
        %736 = vmatpush2.msra.mxu0 0.0
        %737 = vmatprep.subr.mxu0 0.0
        %738 = vmatpush2.msra.mxu0 0.0
        %739 = vmatprep.subr.mxu0 0.0
        %740 = vmatpush2.msra.mxu0 0.0
        %741 = vmatprep.subr.mxu0 0.0
        %742 = vmatpush2.msra.mxu0 0.0
        %743 = vmatprep.subr.mxu0 0.0
        %744 = vmatpush2.msra.mxu0 0.0
        %745 = vmatprep.subr.mxu0 0.0
        %746 = vmatpush2.msra.mxu0 0.0
        %747 = vmatprep.subr.mxu0 0.0
        %748 = vmatpush2.msra.mxu0 0.0
        %749 = vmatprep.mubr.f32.mxu0 0.0
        %750 = vmatmul.mubr.f32.gmra.mxu0 %v683
        %v751 = vpop.f32.mrf.mxu0
        %v752 = vadd.f32 0.0, %v751
        %v753 = vpop.f32.mrf.mxu0
        %754 = vdwg.mxu0
        %v755 = vadd.f32 %v672, %v752
        %s756 = scalar_lea.vmem %s1, 48
        %v757 = vld [vmem:[%s756] sm:$0xff]
        %758 = vrot.lane.b32.xlu0 %v263, 112
        %v759 = vpop.permute.xlu0 %758
        %760 = vrot.lane.b32.xlu0 %v264, 112
        %v761 = vpop.permute.xlu0 %760
        %vm762 = vcmask 916480
        %v763 = vsel %vm762, %v759, %v761
        %v766 = vsel %vm277, %v757, 0
        %768 = vmatprep.subr.mxu0 0.0
        %769 = vmatpush1.msra.mxu0 0.0
        %770 = vmatprep.subr.mxu0 0.0
        %771 = vmatpush1.msra.mxu0 0.0
        %772 = vmatprep.subr.mxu0 0.0
        %773 = vmatpush1.msra.mxu0 0.0
        %774 = vmatprep.subr.mxu0 0.0
        %775 = vmatpush1.msra.mxu0 0.0
        %776 = vmatprep.subr.mxu0 0.0
        %777 = vmatpush1.msra.mxu0 0.0
        %778 = vmatprep.subr.mxu0 0.0
        %779 = vmatpush1.msra.mxu0 0.0
        %780 = vmatprep.subr.mxu0 0.0
        %781 = vmatpush1.msra.mxu0 0.0
        %782 = vmatprep.subr.mxu0 0.0
        %783 = vmatpush1.msra.mxu0 0.0
        %784 = vmatprep.subr.mxu0 0.0
        %785 = vmatpush1.msra.mxu0 0.0
        %786 = vmatprep.subr.mxu0 0.0
        %787 = vmatpush1.msra.mxu0 0.0
        %788 = vmatprep.subr.mxu0 0.0
        %789 = vmatpush1.msra.mxu0 0.0
        %790 = vmatprep.subr.mxu0 0.0
        %791 = vmatpush1.msra.mxu0 0.0
        %792 = vmatprep.subr.mxu0 0.0
        %793 = vmatpush1.msra.mxu0 0.0
        %794 = vmatprep.subr.mxu0 0.0
        %795 = vmatpush1.msra.mxu0 0.0
        %796 = vmatprep.subr.mxu0 0.0
        %797 = vmatpush1.msra.mxu0 0.0
        %798 = vmatprep.subr.mxu0 0.0
        %799 = vmatpush1.msra.mxu0 %v763
        %800 = vmatprep.subr.mxu0 0.0
        %801 = vmatpush2.msra.mxu0 0.0
        %802 = vmatprep.subr.mxu0 0.0
        %803 = vmatpush2.msra.mxu0 0.0
        %804 = vmatprep.subr.mxu0 0.0
        %805 = vmatpush2.msra.mxu0 0.0
        %806 = vmatprep.subr.mxu0 0.0
        %807 = vmatpush2.msra.mxu0 0.0
        %808 = vmatprep.subr.mxu0 0.0
        %809 = vmatpush2.msra.mxu0 0.0
        %810 = vmatprep.subr.mxu0 0.0
        %811 = vmatpush2.msra.mxu0 0.0
        %812 = vmatprep.subr.mxu0 0.0
        %813 = vmatpush2.msra.mxu0 0.0
        %814 = vmatprep.subr.mxu0 0.0
        %815 = vmatpush2.msra.mxu0 0.0
        %816 = vmatprep.subr.mxu0 0.0
        %817 = vmatpush2.msra.mxu0 0.0
        %818 = vmatprep.subr.mxu0 0.0
        %819 = vmatpush2.msra.mxu0 0.0
        %820 = vmatprep.subr.mxu0 0.0
        %821 = vmatpush2.msra.mxu0 0.0
        %822 = vmatprep.subr.mxu0 0.0
        %823 = vmatpush2.msra.mxu0 0.0
        %824 = vmatprep.subr.mxu0 0.0
        %825 = vmatpush2.msra.mxu0 0.0
        %826 = vmatprep.subr.mxu0 0.0
        %827 = vmatpush2.msra.mxu0 0.0
        %828 = vmatprep.subr.mxu0 0.0
        %829 = vmatpush2.msra.mxu0 0.0
        %830 = vmatprep.subr.mxu0 0.0
        %831 = vmatpush2.msra.mxu0 0.0
        %832 = vmatprep.mubr.f32.mxu0 0.0
        %833 = vmatmul.mubr.f32.gmra.mxu0 %v766
        %v834 = vpop.f32.mrf.mxu0
        %v835 = vadd.f32 0.0, %v834
        %v836 = vpop.f32.mrf.mxu0
        %837 = vdwg.mxu0
        %v838 = vadd.f32 %v755, %v835
        %s839 = scalar_lea.vmem %s1, 56
        %v840 = vld [vmem:[%s839] sm:$0xff]
        %841 = vrot.lane.b32.xlu0 %v263, 111
        %v842 = vpop.permute.xlu0 %841
        %843 = vrot.lane.b32.xlu0 %v264, 111
        %v844 = vpop.permute.xlu0 %843
        %vm845 = vcmask 908288
        %v846 = vsel %vm845, %v842, %v844
        %v849 = vsel %vm277, %v840, 0
        %851 = vmatprep.subr.mxu0 0.0
        %852 = vmatpush1.msra.mxu0 0.0
        %853 = vmatprep.subr.mxu0 0.0
        %854 = vmatpush1.msra.mxu0 0.0
        %855 = vmatprep.subr.mxu0 0.0
        %856 = vmatpush1.msra.mxu0 0.0
        %857 = vmatprep.subr.mxu0 0.0
        %858 = vmatpush1.msra.mxu0 0.0
        %859 = vmatprep.subr.mxu0 0.0
        %860 = vmatpush1.msra.mxu0 0.0
        %861 = vmatprep.subr.mxu0 0.0
        %862 = vmatpush1.msra.mxu0 0.0
        %863 = vmatprep.subr.mxu0 0.0
        %864 = vmatpush1.msra.mxu0 0.0
        %865 = vmatprep.subr.mxu0 0.0
        %866 = vmatpush1.msra.mxu0 0.0
        %867 = vmatprep.subr.mxu0 0.0
        %868 = vmatpush1.msra.mxu0 0.0
        %869 = vmatprep.subr.mxu0 0.0
        %870 = vmatpush1.msra.mxu0 0.0
        %871 = vmatprep.subr.mxu0 0.0
        %872 = vmatpush1.msra.mxu0 0.0
        %873 = vmatprep.subr.mxu0 0.0
        %874 = vmatpush1.msra.mxu0 0.0
        %875 = vmatprep.subr.mxu0 0.0
        %876 = vmatpush1.msra.mxu0 0.0
        %877 = vmatprep.subr.mxu0 0.0
        %878 = vmatpush1.msra.mxu0 0.0
        %879 = vmatprep.subr.mxu0 0.0
        %880 = vmatpush1.msra.mxu0 0.0
        %881 = vmatprep.subr.mxu0 0.0
        %882 = vmatpush1.msra.mxu0 %v846
        %883 = vmatprep.subr.mxu0 0.0
        %884 = vmatpush2.msra.mxu0 0.0
        %885 = vmatprep.subr.mxu0 0.0
        %886 = vmatpush2.msra.mxu0 0.0
        %887 = vmatprep.subr.mxu0 0.0
        %888 = vmatpush2.msra.mxu0 0.0
        %889 = vmatprep.subr.mxu0 0.0
        %890 = vmatpush2.msra.mxu0 0.0
        %891 = vmatprep.subr.mxu0 0.0
        %892 = vmatpush2.msra.mxu0 0.0
        %893 = vmatprep.subr.mxu0 0.0
        %894 = vmatpush2.msra.mxu0 0.0
        %895 = vmatprep.subr.mxu0 0.0
        %896 = vmatpush2.msra.mxu0 0.0
        %897 = vmatprep.subr.mxu0 0.0
        %898 = vmatpush2.msra.mxu0 0.0
        %899 = vmatprep.subr.mxu0 0.0
        %900 = vmatpush2.msra.mxu0 0.0
        %901 = vmatprep.subr.mxu0 0.0
        %902 = vmatpush2.msra.mxu0 0.0
        %903 = vmatprep.subr.mxu0 0.0
        %904 = vmatpush2.msra.mxu0 0.0
        %905 = vmatprep.subr.mxu0 0.0
        %906 = vmatpush2.msra.mxu0 0.0
        %907 = vmatprep.subr.mxu0 0.0
        %908 = vmatpush2.msra.mxu0 0.0
        %909 = vmatprep.subr.mxu0 0.0
        %910 = vmatpush2.msra.mxu0 0.0
        %911 = vmatprep.subr.mxu0 0.0
        %912 = vmatpush2.msra.mxu0 0.0
        %913 = vmatprep.subr.mxu0 0.0
        %914 = vmatpush2.msra.mxu0 0.0
        %915 = vmatprep.mubr.f32.mxu0 0.0
        %916 = vmatmul.mubr.f32.gmra.mxu0 %v849
        %v917 = vpop.f32.mrf.mxu0
        %v918 = vadd.f32 0.0, %v917
        %v919 = vpop.f32.mrf.mxu0
        %920 = vdwg.mxu0
        %v921 = vadd.f32 %v838, %v918
        %s922 = scalar_lea.vmem %s1, 64
        %v923 = vld [vmem:[%s922] sm:$0xff]
        %924 = vrot.lane.b32.xlu0 %v263, 110
        %v925 = vpop.permute.xlu0 %924
        %926 = vrot.lane.b32.xlu0 %v264, 110
        %v927 = vpop.permute.xlu0 %926
        %vm928 = vcmask 900096
        %v929 = vsel %vm928, %v925, %v927
        %v932 = vsel %vm277, %v923, 0
        %934 = vmatprep.subr.mxu0 0.0
        %935 = vmatpush1.msra.mxu0 0.0
        %936 = vmatprep.subr.mxu0 0.0
        %937 = vmatpush1.msra.mxu0 0.0
        %938 = vmatprep.subr.mxu0 0.0
        %939 = vmatpush1.msra.mxu0 0.0
        %940 = vmatprep.subr.mxu0 0.0
        %941 = vmatpush1.msra.mxu0 0.0
        %942 = vmatprep.subr.mxu0 0.0
        %943 = vmatpush1.msra.mxu0 0.0
        %944 = vmatprep.subr.mxu0 0.0
        %945 = vmatpush1.msra.mxu0 0.0
        %946 = vmatprep.subr.mxu0 0.0
        %947 = vmatpush1.msra.mxu0 0.0
        %948 = vmatprep.subr.mxu0 0.0
        %949 = vmatpush1.msra.mxu0 0.0
        %950 = vmatprep.subr.mxu0 0.0
        %951 = vmatpush1.msra.mxu0 0.0
        %952 = vmatprep.subr.mxu0 0.0
        %953 = vmatpush1.msra.mxu0 0.0
        %954 = vmatprep.subr.mxu0 0.0
        %955 = vmatpush1.msra.mxu0 0.0
        %956 = vmatprep.subr.mxu0 0.0
        %957 = vmatpush1.msra.mxu0 0.0
        %958 = vmatprep.subr.mxu0 0.0
        %959 = vmatpush1.msra.mxu0 0.0
        %960 = vmatprep.subr.mxu0 0.0
        %961 = vmatpush1.msra.mxu0 0.0
        %962 = vmatprep.subr.mxu0 0.0
        %963 = vmatpush1.msra.mxu0 0.0
        %964 = vmatprep.subr.mxu0 0.0
        %965 = vmatpush1.msra.mxu0 %v929
        %966 = vmatprep.subr.mxu0 0.0
        %967 = vmatpush2.msra.mxu0 0.0
        %968 = vmatprep.subr.mxu0 0.0
        %969 = vmatpush2.msra.mxu0 0.0
        %970 = vmatprep.subr.mxu0 0.0
        %971 = vmatpush2.msra.mxu0 0.0
        %972 = vmatprep.subr.mxu0 0.0
        %973 = vmatpush2.msra.mxu0 0.0
        %974 = vmatprep.subr.mxu0 0.0
        %975 = vmatpush2.msra.mxu0 0.0
        %976 = vmatprep.subr.mxu0 0.0
        %977 = vmatpush2.msra.mxu0 0.0
        %978 = vmatprep.subr.mxu0 0.0
        %979 = vmatpush2.msra.mxu0 0.0
        %980 = vmatprep.subr.mxu0 0.0
        %981 = vmatpush2.msra.mxu0 0.0
        %982 = vmatprep.subr.mxu0 0.0
        %983 = vmatpush2.msra.mxu0 0.0
        %984 = vmatprep.subr.mxu0 0.0
        %985 = vmatpush2.msra.mxu0 0.0
        %986 = vmatprep.subr.mxu0 0.0
        %987 = vmatpush2.msra.mxu0 0.0
        %988 = vmatprep.subr.mxu0 0.0
        %989 = vmatpush2.msra.mxu0 0.0
        %990 = vmatprep.subr.mxu0 0.0
        %991 = vmatpush2.msra.mxu0 0.0
        %992 = vmatprep.subr.mxu0 0.0
        %993 = vmatpush2.msra.mxu0 0.0
        %994 = vmatprep.subr.mxu0 0.0
        %995 = vmatpush2.msra.mxu0 0.0
        %996 = vmatprep.subr.mxu0 0.0
        %997 = vmatpush2.msra.mxu0 0.0
        %998 = vmatprep.mubr.f32.mxu0 0.0
        %999 = vmatmul.mubr.f32.gmra.mxu0 %v932
        %v1000 = vpop.f32.mrf.mxu0
        %v1001 = vadd.f32 0.0, %v1000
        %v1002 = vpop.f32.mrf.mxu0
        %1003 = vdwg.mxu0
        %v1004 = vadd.f32 %v921, %v1001
        %s1005 = sadd.s32 %s24, 1
        %s1006 = smul.u32 %s1005, 2
        %s1007 = smul.addr %s1006, 8
        %s1008 = scalar_lea.vmem %s250, %s1007
        %v1009 = vld [vmem:[%s1008] sm:$0xff]
        %v1010 = vld [vmem:[%s1008 + $0x8] sm:$0xff]
        %s1011 = scalar_lea.vmem %s1, 72
        %v1012 = vld [vmem:[%s1011] sm:$0xff]
        %v1014 = vsel %vm277, %v1012, 0
        %1016 = vmatprep.subr.mxu0 0.0
        %1017 = vmatpush1.msra.mxu0 0.0
        %1018 = vmatprep.subr.mxu0 0.0
        %1019 = vmatpush1.msra.mxu0 0.0
        %1020 = vmatprep.subr.mxu0 0.0
        %1021 = vmatpush1.msra.mxu0 0.0
        %1022 = vmatprep.subr.mxu0 0.0
        %1023 = vmatpush1.msra.mxu0 0.0
        %1024 = vmatprep.subr.mxu0 0.0
        %1025 = vmatpush1.msra.mxu0 0.0
        %1026 = vmatprep.subr.mxu0 0.0
        %1027 = vmatpush1.msra.mxu0 0.0
        %1028 = vmatprep.subr.mxu0 0.0
        %1029 = vmatpush1.msra.mxu0 0.0
        %1030 = vmatprep.subr.mxu0 0.0
        %1031 = vmatpush1.msra.mxu0 0.0
        %1032 = vmatprep.subr.mxu0 0.0
        %1033 = vmatpush1.msra.mxu0 0.0
        %1034 = vmatprep.subr.mxu0 0.0
        %1035 = vmatpush1.msra.mxu0 0.0
        %1036 = vmatprep.subr.mxu0 0.0
        %1037 = vmatpush1.msra.mxu0 0.0
        %1038 = vmatprep.subr.mxu0 0.0
        %1039 = vmatpush1.msra.mxu0 0.0
        %1040 = vmatprep.subr.mxu0 0.0
        %1041 = vmatpush1.msra.mxu0 0.0
        %1042 = vmatprep.subr.mxu0 0.0
        %1043 = vmatpush1.msra.mxu0 0.0
        %1044 = vmatprep.subr.mxu0 0.0
        %1045 = vmatpush1.msra.mxu0 0.0
        %1046 = vmatprep.subr.mxu0 0.0
        %1047 = vmatpush1.msra.mxu0 %v1009
        %1048 = vmatprep.subr.mxu0 0.0
        %1049 = vmatpush2.msra.mxu0 0.0
        %1050 = vmatprep.subr.mxu0 0.0
        %1051 = vmatpush2.msra.mxu0 0.0
        %1052 = vmatprep.subr.mxu0 0.0
        %1053 = vmatpush2.msra.mxu0 0.0
        %1054 = vmatprep.subr.mxu0 0.0
        %1055 = vmatpush2.msra.mxu0 0.0
        %1056 = vmatprep.subr.mxu0 0.0
        %1057 = vmatpush2.msra.mxu0 0.0
        %1058 = vmatprep.subr.mxu0 0.0
        %1059 = vmatpush2.msra.mxu0 0.0
        %1060 = vmatprep.subr.mxu0 0.0
        %1061 = vmatpush2.msra.mxu0 0.0
        %1062 = vmatprep.subr.mxu0 0.0
        %1063 = vmatpush2.msra.mxu0 0.0
        %1064 = vmatprep.subr.mxu0 0.0
        %1065 = vmatpush2.msra.mxu0 0.0
        %1066 = vmatprep.subr.mxu0 0.0
        %1067 = vmatpush2.msra.mxu0 0.0
        %1068 = vmatprep.subr.mxu0 0.0
        %1069 = vmatpush2.msra.mxu0 0.0
        %1070 = vmatprep.subr.mxu0 0.0
        %1071 = vmatpush2.msra.mxu0 0.0
        %1072 = vmatprep.subr.mxu0 0.0
        %1073 = vmatpush2.msra.mxu0 0.0
        %1074 = vmatprep.subr.mxu0 0.0
        %1075 = vmatpush2.msra.mxu0 0.0
        %1076 = vmatprep.subr.mxu0 0.0
        %1077 = vmatpush2.msra.mxu0 0.0
        %1078 = vmatprep.subr.mxu0 0.0
        %1079 = vmatpush2.msra.mxu0 0.0
        %1080 = vmatprep.mubr.f32.mxu0 0.0
        %1081 = vmatmul.mubr.f32.gmra.mxu0 %v1014
        %v1082 = vpop.f32.mrf.mxu0
        %v1083 = vadd.f32 0.0, %v1082
        %v1084 = vpop.f32.mrf.mxu0
        %1085 = vdwg.mxu0
        %v1086 = vadd.f32 %v1004, %v1083
        %s1087 = scalar_lea.vmem %s1, 80
        %v1088 = vld [vmem:[%s1087] sm:$0xff]
        %1091 = vrot.lane.b32.xlu0 %v1009, 127
        %v1092 = vpop.permute.xlu0 %1091
        %1093 = vrot.lane.b32.xlu0 %v1010, 127
        %v1094 = vpop.permute.xlu0 %1093
        %v1095 = vsel %vm274, %v1092, %v1094
        %v1098 = vsel %vm277, %v1088, 0
        %1100 = vmatprep.subr.mxu0 0.0
        %1101 = vmatpush1.msra.mxu0 0.0
        %1102 = vmatprep.subr.mxu0 0.0
        %1103 = vmatpush1.msra.mxu0 0.0
        %1104 = vmatprep.subr.mxu0 0.0
        %1105 = vmatpush1.msra.mxu0 0.0
        %1106 = vmatprep.subr.mxu0 0.0
        %1107 = vmatpush1.msra.mxu0 0.0
        %1108 = vmatprep.subr.mxu0 0.0
        %1109 = vmatpush1.msra.mxu0 0.0
        %1110 = vmatprep.subr.mxu0 0.0
        %1111 = vmatpush1.msra.mxu0 0.0
        %1112 = vmatprep.subr.mxu0 0.0
        %1113 = vmatpush1.msra.mxu0 0.0
        %1114 = vmatprep.subr.mxu0 0.0
        %1115 = vmatpush1.msra.mxu0 0.0
        %1116 = vmatprep.subr.mxu0 0.0
        %1117 = vmatpush1.msra.mxu0 0.0
        %1118 = vmatprep.subr.mxu0 0.0
        %1119 = vmatpush1.msra.mxu0 0.0
        %1120 = vmatprep.subr.mxu0 0.0
        %1121 = vmatpush1.msra.mxu0 0.0
        %1122 = vmatprep.subr.mxu0 0.0
        %1123 = vmatpush1.msra.mxu0 0.0
        %1124 = vmatprep.subr.mxu0 0.0
        %1125 = vmatpush1.msra.mxu0 0.0
        %1126 = vmatprep.subr.mxu0 0.0
        %1127 = vmatpush1.msra.mxu0 0.0
        %1128 = vmatprep.subr.mxu0 0.0
        %1129 = vmatpush1.msra.mxu0 0.0
        %1130 = vmatprep.subr.mxu0 0.0
        %1131 = vmatpush1.msra.mxu0 %v1095
        %1132 = vmatprep.subr.mxu0 0.0
        %1133 = vmatpush2.msra.mxu0 0.0
        %1134 = vmatprep.subr.mxu0 0.0
        %1135 = vmatpush2.msra.mxu0 0.0
        %1136 = vmatprep.subr.mxu0 0.0
        %1137 = vmatpush2.msra.mxu0 0.0
        %1138 = vmatprep.subr.mxu0 0.0
        %1139 = vmatpush2.msra.mxu0 0.0
        %1140 = vmatprep.subr.mxu0 0.0
        %1141 = vmatpush2.msra.mxu0 0.0
        %1142 = vmatprep.subr.mxu0 0.0
        %1143 = vmatpush2.msra.mxu0 0.0
        %1144 = vmatprep.subr.mxu0 0.0
        %1145 = vmatpush2.msra.mxu0 0.0
        %1146 = vmatprep.subr.mxu0 0.0
        %1147 = vmatpush2.msra.mxu0 0.0
        %1148 = vmatprep.subr.mxu0 0.0
        %1149 = vmatpush2.msra.mxu0 0.0
        %1150 = vmatprep.subr.mxu0 0.0
        %1151 = vmatpush2.msra.mxu0 0.0
        %1152 = vmatprep.subr.mxu0 0.0
        %1153 = vmatpush2.msra.mxu0 0.0
        %1154 = vmatprep.subr.mxu0 0.0
        %1155 = vmatpush2.msra.mxu0 0.0
        %1156 = vmatprep.subr.mxu0 0.0
        %1157 = vmatpush2.msra.mxu0 0.0
        %1158 = vmatprep.subr.mxu0 0.0
        %1159 = vmatpush2.msra.mxu0 0.0
        %1160 = vmatprep.subr.mxu0 0.0
        %1161 = vmatpush2.msra.mxu0 0.0
        %1162 = vmatprep.subr.mxu0 0.0
        %1163 = vmatpush2.msra.mxu0 0.0
        %1164 = vmatprep.mubr.f32.mxu0 0.0
        %1165 = vmatmul.mubr.f32.gmra.mxu0 %v1098
        %v1166 = vpop.f32.mrf.mxu0
        %v1167 = vadd.f32 0.0, %v1166
        %v1168 = vpop.f32.mrf.mxu0
        %1169 = vdwg.mxu0
        %v1170 = vadd.f32 %v1086, %v1167
        %s1171 = scalar_lea.vmem %s1, 88
        %v1172 = vld [vmem:[%s1171] sm:$0xff]
        %1173 = vrot.lane.b32.xlu0 %v1009, 126
        %v1174 = vpop.permute.xlu0 %1173
        %1175 = vrot.lane.b32.xlu0 %v1010, 126
        %v1176 = vpop.permute.xlu0 %1175
        %v1177 = vsel %vm430, %v1174, %v1176
        %v1180 = vsel %vm277, %v1172, 0
        %1182 = vmatprep.subr.mxu0 0.0
        %1183 = vmatpush1.msra.mxu0 0.0
        %1184 = vmatprep.subr.mxu0 0.0
        %1185 = vmatpush1.msra.mxu0 0.0
        %1186 = vmatprep.subr.mxu0 0.0
        %1187 = vmatpush1.msra.mxu0 0.0
        %1188 = vmatprep.subr.mxu0 0.0
        %1189 = vmatpush1.msra.mxu0 0.0
        %1190 = vmatprep.subr.mxu0 0.0
        %1191 = vmatpush1.msra.mxu0 0.0
        %1192 = vmatprep.subr.mxu0 0.0
        %1193 = vmatpush1.msra.mxu0 0.0
        %1194 = vmatprep.subr.mxu0 0.0
        %1195 = vmatpush1.msra.mxu0 0.0
        %1196 = vmatprep.subr.mxu0 0.0
        %1197 = vmatpush1.msra.mxu0 0.0
        %1198 = vmatprep.subr.mxu0 0.0
        %1199 = vmatpush1.msra.mxu0 0.0
        %1200 = vmatprep.subr.mxu0 0.0
        %1201 = vmatpush1.msra.mxu0 0.0
        %1202 = vmatprep.subr.mxu0 0.0
        %1203 = vmatpush1.msra.mxu0 0.0
        %1204 = vmatprep.subr.mxu0 0.0
        %1205 = vmatpush1.msra.mxu0 0.0
        %1206 = vmatprep.subr.mxu0 0.0
        %1207 = vmatpush1.msra.mxu0 0.0
        %1208 = vmatprep.subr.mxu0 0.0
        %1209 = vmatpush1.msra.mxu0 0.0
        %1210 = vmatprep.subr.mxu0 0.0
        %1211 = vmatpush1.msra.mxu0 0.0
        %1212 = vmatprep.subr.mxu0 0.0
        %1213 = vmatpush1.msra.mxu0 %v1177
        %1214 = vmatprep.subr.mxu0 0.0
        %1215 = vmatpush2.msra.mxu0 0.0
        %1216 = vmatprep.subr.mxu0 0.0
        %1217 = vmatpush2.msra.mxu0 0.0
        %1218 = vmatprep.subr.mxu0 0.0
        %1219 = vmatpush2.msra.mxu0 0.0
        %1220 = vmatprep.subr.mxu0 0.0
        %1221 = vmatpush2.msra.mxu0 0.0
        %1222 = vmatprep.subr.mxu0 0.0
        %1223 = vmatpush2.msra.mxu0 0.0
        %1224 = vmatprep.subr.mxu0 0.0
        %1225 = vmatpush2.msra.mxu0 0.0
        %1226 = vmatprep.subr.mxu0 0.0
        %1227 = vmatpush2.msra.mxu0 0.0
        %1228 = vmatprep.subr.mxu0 0.0
        %1229 = vmatpush2.msra.mxu0 0.0
        %1230 = vmatprep.subr.mxu0 0.0
        %1231 = vmatpush2.msra.mxu0 0.0
        %1232 = vmatprep.subr.mxu0 0.0
        %1233 = vmatpush2.msra.mxu0 0.0
        %1234 = vmatprep.subr.mxu0 0.0
        %1235 = vmatpush2.msra.mxu0 0.0
        %1236 = vmatprep.subr.mxu0 0.0
        %1237 = vmatpush2.msra.mxu0 0.0
        %1238 = vmatprep.subr.mxu0 0.0
        %1239 = vmatpush2.msra.mxu0 0.0
        %1240 = vmatprep.subr.mxu0 0.0
        %1241 = vmatpush2.msra.mxu0 0.0
        %1242 = vmatprep.subr.mxu0 0.0
        %1243 = vmatpush2.msra.mxu0 0.0
        %1244 = vmatprep.subr.mxu0 0.0
        %1245 = vmatpush2.msra.mxu0 0.0
        %1246 = vmatprep.mubr.f32.mxu0 0.0
        %1247 = vmatmul.mubr.f32.gmra.mxu0 %v1180
        %v1248 = vpop.f32.mrf.mxu0
        %v1249 = vadd.f32 0.0, %v1248
        %v1250 = vpop.f32.mrf.mxu0
        %1251 = vdwg.mxu0
        %v1252 = vadd.f32 %v1170, %v1249
        %s1253 = scalar_lea.vmem %s1, 96
        %v1254 = vld [vmem:[%s1253] sm:$0xff]
        %1255 = vrot.lane.b32.xlu0 %v1009, 120
        %v1256 = vpop.permute.xlu0 %1255
        %1257 = vrot.lane.b32.xlu0 %v1010, 120
        %v1258 = vpop.permute.xlu0 %1257
        %v1259 = vsel %vm513, %v1256, %v1258
        %v1262 = vsel %vm277, %v1254, 0
        %1264 = vmatprep.subr.mxu0 0.0
        %1265 = vmatpush1.msra.mxu0 0.0
        %1266 = vmatprep.subr.mxu0 0.0
        %1267 = vmatpush1.msra.mxu0 0.0
        %1268 = vmatprep.subr.mxu0 0.0
        %1269 = vmatpush1.msra.mxu0 0.0
        %1270 = vmatprep.subr.mxu0 0.0
        %1271 = vmatpush1.msra.mxu0 0.0
        %1272 = vmatprep.subr.mxu0 0.0
        %1273 = vmatpush1.msra.mxu0 0.0
        %1274 = vmatprep.subr.mxu0 0.0
        %1275 = vmatpush1.msra.mxu0 0.0
        %1276 = vmatprep.subr.mxu0 0.0
        %1277 = vmatpush1.msra.mxu0 0.0
        %1278 = vmatprep.subr.mxu0 0.0
        %1279 = vmatpush1.msra.mxu0 0.0
        %1280 = vmatprep.subr.mxu0 0.0
        %1281 = vmatpush1.msra.mxu0 0.0
        %1282 = vmatprep.subr.mxu0 0.0
        %1283 = vmatpush1.msra.mxu0 0.0
        %1284 = vmatprep.subr.mxu0 0.0
        %1285 = vmatpush1.msra.mxu0 0.0
        %1286 = vmatprep.subr.mxu0 0.0
        %1287 = vmatpush1.msra.mxu0 0.0
        %1288 = vmatprep.subr.mxu0 0.0
        %1289 = vmatpush1.msra.mxu0 0.0
        %1290 = vmatprep.subr.mxu0 0.0
        %1291 = vmatpush1.msra.mxu0 0.0
        %1292 = vmatprep.subr.mxu0 0.0
        %1293 = vmatpush1.msra.mxu0 0.0
        %1294 = vmatprep.subr.mxu0 0.0
        %1295 = vmatpush1.msra.mxu0 %v1259
        %1296 = vmatprep.subr.mxu0 0.0
        %1297 = vmatpush2.msra.mxu0 0.0
        %1298 = vmatprep.subr.mxu0 0.0
        %1299 = vmatpush2.msra.mxu0 0.0
        %1300 = vmatprep.subr.mxu0 0.0
        %1301 = vmatpush2.msra.mxu0 0.0
        %1302 = vmatprep.subr.mxu0 0.0
        %1303 = vmatpush2.msra.mxu0 0.0
        %1304 = vmatprep.subr.mxu0 0.0
        %1305 = vmatpush2.msra.mxu0 0.0
        %1306 = vmatprep.subr.mxu0 0.0
        %1307 = vmatpush2.msra.mxu0 0.0
        %1308 = vmatprep.subr.mxu0 0.0
        %1309 = vmatpush2.msra.mxu0 0.0
        %1310 = vmatprep.subr.mxu0 0.0
        %1311 = vmatpush2.msra.mxu0 0.0
        %1312 = vmatprep.subr.mxu0 0.0
        %1313 = vmatpush2.msra.mxu0 0.0
        %1314 = vmatprep.subr.mxu0 0.0
        %1315 = vmatpush2.msra.mxu0 0.0
        %1316 = vmatprep.subr.mxu0 0.0
        %1317 = vmatpush2.msra.mxu0 0.0
        %1318 = vmatprep.subr.mxu0 0.0
        %1319 = vmatpush2.msra.mxu0 0.0
        %1320 = vmatprep.subr.mxu0 0.0
        %1321 = vmatpush2.msra.mxu0 0.0
        %1322 = vmatprep.subr.mxu0 0.0
        %1323 = vmatpush2.msra.mxu0 0.0
        %1324 = vmatprep.subr.mxu0 0.0
        %1325 = vmatpush2.msra.mxu0 0.0
        %1326 = vmatprep.subr.mxu0 0.0
        %1327 = vmatpush2.msra.mxu0 0.0
        %1328 = vmatprep.mubr.f32.mxu0 0.0
        %1329 = vmatmul.mubr.f32.gmra.mxu0 %v1262
        %v1330 = vpop.f32.mrf.mxu0
        %v1331 = vadd.f32 0.0, %v1330
        %v1332 = vpop.f32.mrf.mxu0
        %1333 = vdwg.mxu0
        %v1334 = vadd.f32 %v1252, %v1331
        %s1335 = scalar_lea.vmem %s1, 104
        %v1336 = vld [vmem:[%s1335] sm:$0xff]
        %1337 = vrot.lane.b32.xlu0 %v1009, 119
        %v1338 = vpop.permute.xlu0 %1337
        %1339 = vrot.lane.b32.xlu0 %v1010, 119
        %v1340 = vpop.permute.xlu0 %1339
        %v1341 = vsel %vm596, %v1338, %v1340
        %v1344 = vsel %vm277, %v1336, 0
        %1346 = vmatprep.subr.mxu0 0.0
        %1347 = vmatpush1.msra.mxu0 0.0
        %1348 = vmatprep.subr.mxu0 0.0
        %1349 = vmatpush1.msra.mxu0 0.0
        %1350 = vmatprep.subr.mxu0 0.0
        %1351 = vmatpush1.msra.mxu0 0.0
        %1352 = vmatprep.subr.mxu0 0.0
        %1353 = vmatpush1.msra.mxu0 0.0
        %1354 = vmatprep.subr.mxu0 0.0
        %1355 = vmatpush1.msra.mxu0 0.0
        %1356 = vmatprep.subr.mxu0 0.0
        %1357 = vmatpush1.msra.mxu0 0.0
        %1358 = vmatprep.subr.mxu0 0.0
        %1359 = vmatpush1.msra.mxu0 0.0
        %1360 = vmatprep.subr.mxu0 0.0
        %1361 = vmatpush1.msra.mxu0 0.0
        %1362 = vmatprep.subr.mxu0 0.0
        %1363 = vmatpush1.msra.mxu0 0.0
        %1364 = vmatprep.subr.mxu0 0.0
        %1365 = vmatpush1.msra.mxu0 0.0
        %1366 = vmatprep.subr.mxu0 0.0
        %1367 = vmatpush1.msra.mxu0 0.0
        %1368 = vmatprep.subr.mxu0 0.0
        %1369 = vmatpush1.msra.mxu0 0.0
        %1370 = vmatprep.subr.mxu0 0.0
        %1371 = vmatpush1.msra.mxu0 0.0
        %1372 = vmatprep.subr.mxu0 0.0
        %1373 = vmatpush1.msra.mxu0 0.0
        %1374 = vmatprep.subr.mxu0 0.0
        %1375 = vmatpush1.msra.mxu0 0.0
        %1376 = vmatprep.subr.mxu0 0.0
        %1377 = vmatpush1.msra.mxu0 %v1341
        %1378 = vmatprep.subr.mxu0 0.0
        %1379 = vmatpush2.msra.mxu0 0.0
        %1380 = vmatprep.subr.mxu0 0.0
        %1381 = vmatpush2.msra.mxu0 0.0
        %1382 = vmatprep.subr.mxu0 0.0
        %1383 = vmatpush2.msra.mxu0 0.0
        %1384 = vmatprep.subr.mxu0 0.0
        %1385 = vmatpush2.msra.mxu0 0.0
        %1386 = vmatprep.subr.mxu0 0.0
        %1387 = vmatpush2.msra.mxu0 0.0
        %1388 = vmatprep.subr.mxu0 0.0
        %1389 = vmatpush2.msra.mxu0 0.0
        %1390 = vmatprep.subr.mxu0 0.0
        %1391 = vmatpush2.msra.mxu0 0.0
        %1392 = vmatprep.subr.mxu0 0.0
        %1393 = vmatpush2.msra.mxu0 0.0
        %1394 = vmatprep.subr.mxu0 0.0
        %1395 = vmatpush2.msra.mxu0 0.0
        %1396 = vmatprep.subr.mxu0 0.0
        %1397 = vmatpush2.msra.mxu0 0.0
        %1398 = vmatprep.subr.mxu0 0.0
        %1399 = vmatpush2.msra.mxu0 0.0
        %1400 = vmatprep.subr.mxu0 0.0
        %1401 = vmatpush2.msra.mxu0 0.0
        %1402 = vmatprep.subr.mxu0 0.0
        %1403 = vmatpush2.msra.mxu0 0.0
        %1404 = vmatprep.subr.mxu0 0.0
        %1405 = vmatpush2.msra.mxu0 0.0
        %1406 = vmatprep.subr.mxu0 0.0
        %1407 = vmatpush2.msra.mxu0 0.0
        %1408 = vmatprep.subr.mxu0 0.0
        %1409 = vmatpush2.msra.mxu0 0.0
        %1410 = vmatprep.mubr.f32.mxu0 0.0
        %1411 = vmatmul.mubr.f32.gmra.mxu0 %v1344
        %v1412 = vpop.f32.mrf.mxu0
        %v1413 = vadd.f32 0.0, %v1412
        %v1414 = vpop.f32.mrf.mxu0
        %1415 = vdwg.mxu0
        %v1416 = vadd.f32 %v1334, %v1413
        %s1417 = scalar_lea.vmem %s1, 112
        %v1418 = vld [vmem:[%s1417] sm:$0xff]
        %1419 = vrot.lane.b32.xlu0 %v1009, 118
        %v1420 = vpop.permute.xlu0 %1419
        %1421 = vrot.lane.b32.xlu0 %v1010, 118
        %v1422 = vpop.permute.xlu0 %1421
        %v1423 = vsel %vm679, %v1420, %v1422
        %v1426 = vsel %vm277, %v1418, 0
        %1428 = vmatprep.subr.mxu0 0.0
        %1429 = vmatpush1.msra.mxu0 0.0
        %1430 = vmatprep.subr.mxu0 0.0
        %1431 = vmatpush1.msra.mxu0 0.0
        %1432 = vmatprep.subr.mxu0 0.0
        %1433 = vmatpush1.msra.mxu0 0.0
        %1434 = vmatprep.subr.mxu0 0.0
        %1435 = vmatpush1.msra.mxu0 0.0
        %1436 = vmatprep.subr.mxu0 0.0
        %1437 = vmatpush1.msra.mxu0 0.0
        %1438 = vmatprep.subr.mxu0 0.0
        %1439 = vmatpush1.msra.mxu0 0.0
        %1440 = vmatprep.subr.mxu0 0.0
        %1441 = vmatpush1.msra.mxu0 0.0
        %1442 = vmatprep.subr.mxu0 0.0
        %1443 = vmatpush1.msra.mxu0 0.0
        %1444 = vmatprep.subr.mxu0 0.0
        %1445 = vmatpush1.msra.mxu0 0.0
        %1446 = vmatprep.subr.mxu0 0.0
        %1447 = vmatpush1.msra.mxu0 0.0
        %1448 = vmatprep.subr.mxu0 0.0
        %1449 = vmatpush1.msra.mxu0 0.0
        %1450 = vmatprep.subr.mxu0 0.0
        %1451 = vmatpush1.msra.mxu0 0.0
        %1452 = vmatprep.subr.mxu0 0.0
        %1453 = vmatpush1.msra.mxu0 0.0
        %1454 = vmatprep.subr.mxu0 0.0
        %1455 = vmatpush1.msra.mxu0 0.0
        %1456 = vmatprep.subr.mxu0 0.0
        %1457 = vmatpush1.msra.mxu0 0.0
        %1458 = vmatprep.subr.mxu0 0.0
        %1459 = vmatpush1.msra.mxu0 %v1423
        %1460 = vmatprep.subr.mxu0 0.0
        %1461 = vmatpush2.msra.mxu0 0.0
        %1462 = vmatprep.subr.mxu0 0.0
        %1463 = vmatpush2.msra.mxu0 0.0
        %1464 = vmatprep.subr.mxu0 0.0
        %1465 = vmatpush2.msra.mxu0 0.0
        %1466 = vmatprep.subr.mxu0 0.0
        %1467 = vmatpush2.msra.mxu0 0.0
        %1468 = vmatprep.subr.mxu0 0.0
        %1469 = vmatpush2.msra.mxu0 0.0
        %1470 = vmatprep.subr.mxu0 0.0
        %1471 = vmatpush2.msra.mxu0 0.0
        %1472 = vmatprep.subr.mxu0 0.0
        %1473 = vmatpush2.msra.mxu0 0.0
        %1474 = vmatprep.subr.mxu0 0.0
        %1475 = vmatpush2.msra.mxu0 0.0
        %1476 = vmatprep.subr.mxu0 0.0
        %1477 = vmatpush2.msra.mxu0 0.0
        %1478 = vmatprep.subr.mxu0 0.0
        %1479 = vmatpush2.msra.mxu0 0.0
        %1480 = vmatprep.subr.mxu0 0.0
        %1481 = vmatpush2.msra.mxu0 0.0
        %1482 = vmatprep.subr.mxu0 0.0
        %1483 = vmatpush2.msra.mxu0 0.0
        %1484 = vmatprep.subr.mxu0 0.0
        %1485 = vmatpush2.msra.mxu0 0.0
        %1486 = vmatprep.subr.mxu0 0.0
        %1487 = vmatpush2.msra.mxu0 0.0
        %1488 = vmatprep.subr.mxu0 0.0
        %1489 = vmatpush2.msra.mxu0 0.0
        %1490 = vmatprep.subr.mxu0 0.0
        %1491 = vmatpush2.msra.mxu0 0.0
        %1492 = vmatprep.mubr.f32.mxu0 0.0
        %1493 = vmatmul.mubr.f32.gmra.mxu0 %v1426
        %v1494 = vpop.f32.mrf.mxu0
        %v1495 = vadd.f32 0.0, %v1494
        %v1496 = vpop.f32.mrf.mxu0
        %1497 = vdwg.mxu0
        %v1498 = vadd.f32 %v1416, %v1495
        %s1499 = scalar_lea.vmem %s1, 120
        %v1500 = vld [vmem:[%s1499] sm:$0xff]
        %1501 = vrot.lane.b32.xlu0 %v1009, 112
        %v1502 = vpop.permute.xlu0 %1501
        %1503 = vrot.lane.b32.xlu0 %v1010, 112
        %v1504 = vpop.permute.xlu0 %1503
        %v1505 = vsel %vm762, %v1502, %v1504
        %v1508 = vsel %vm277, %v1500, 0
        %1510 = vmatprep.subr.mxu0 0.0
        %1511 = vmatpush1.msra.mxu0 0.0
        %1512 = vmatprep.subr.mxu0 0.0
        %1513 = vmatpush1.msra.mxu0 0.0
        %1514 = vmatprep.subr.mxu0 0.0
        %1515 = vmatpush1.msra.mxu0 0.0
        %1516 = vmatprep.subr.mxu0 0.0
        %1517 = vmatpush1.msra.mxu0 0.0
        %1518 = vmatprep.subr.mxu0 0.0
        %1519 = vmatpush1.msra.mxu0 0.0
        %1520 = vmatprep.subr.mxu0 0.0
        %1521 = vmatpush1.msra.mxu0 0.0
        %1522 = vmatprep.subr.mxu0 0.0
        %1523 = vmatpush1.msra.mxu0 0.0
        %1524 = vmatprep.subr.mxu0 0.0
        %1525 = vmatpush1.msra.mxu0 0.0
        %1526 = vmatprep.subr.mxu0 0.0
        %1527 = vmatpush1.msra.mxu0 0.0
        %1528 = vmatprep.subr.mxu0 0.0
        %1529 = vmatpush1.msra.mxu0 0.0
        %1530 = vmatprep.subr.mxu0 0.0
        %1531 = vmatpush1.msra.mxu0 0.0
        %1532 = vmatprep.subr.mxu0 0.0
        %1533 = vmatpush1.msra.mxu0 0.0
        %1534 = vmatprep.subr.mxu0 0.0
        %1535 = vmatpush1.msra.mxu0 0.0
        %1536 = vmatprep.subr.mxu0 0.0
        %1537 = vmatpush1.msra.mxu0 0.0
        %1538 = vmatprep.subr.mxu0 0.0
        %1539 = vmatpush1.msra.mxu0 0.0
        %1540 = vmatprep.subr.mxu0 0.0
        %1541 = vmatpush1.msra.mxu0 %v1505
        %1542 = vmatprep.subr.mxu0 0.0
        %1543 = vmatpush2.msra.mxu0 0.0
        %1544 = vmatprep.subr.mxu0 0.0
        %1545 = vmatpush2.msra.mxu0 0.0
        %1546 = vmatprep.subr.mxu0 0.0
        %1547 = vmatpush2.msra.mxu0 0.0
        %1548 = vmatprep.subr.mxu0 0.0
        %1549 = vmatpush2.msra.mxu0 0.0
        %1550 = vmatprep.subr.mxu0 0.0
        %1551 = vmatpush2.msra.mxu0 0.0
        %1552 = vmatprep.subr.mxu0 0.0
        %1553 = vmatpush2.msra.mxu0 0.0
        %1554 = vmatprep.subr.mxu0 0.0
        %1555 = vmatpush2.msra.mxu0 0.0
        %1556 = vmatprep.subr.mxu0 0.0
        %1557 = vmatpush2.msra.mxu0 0.0
        %1558 = vmatprep.subr.mxu0 0.0
        %1559 = vmatpush2.msra.mxu0 0.0
        %1560 = vmatprep.subr.mxu0 0.0
        %1561 = vmatpush2.msra.mxu0 0.0
        %1562 = vmatprep.subr.mxu0 0.0
        %1563 = vmatpush2.msra.mxu0 0.0
        %1564 = vmatprep.subr.mxu0 0.0
        %1565 = vmatpush2.msra.mxu0 0.0
        %1566 = vmatprep.subr.mxu0 0.0
        %1567 = vmatpush2.msra.mxu0 0.0
        %1568 = vmatprep.subr.mxu0 0.0
        %1569 = vmatpush2.msra.mxu0 0.0
        %1570 = vmatprep.subr.mxu0 0.0
        %1571 = vmatpush2.msra.mxu0 0.0
        %1572 = vmatprep.subr.mxu0 0.0
        %1573 = vmatpush2.msra.mxu0 0.0
        %1574 = vmatprep.mubr.f32.mxu0 0.0
        %1575 = vmatmul.mubr.f32.gmra.mxu0 %v1508
        %v1576 = vpop.f32.mrf.mxu0
        %v1577 = vadd.f32 0.0, %v1576
        %v1578 = vpop.f32.mrf.mxu0
        %1579 = vdwg.mxu0
        %v1580 = vadd.f32 %v1498, %v1577
        %s1581 = scalar_lea.vmem %s1, 128
        %v1582 = vld [vmem:[%s1581] sm:$0xff]
        %1583 = vrot.lane.b32.xlu0 %v1009, 111
        %v1584 = vpop.permute.xlu0 %1583
        %1585 = vrot.lane.b32.xlu0 %v1010, 111
        %v1586 = vpop.permute.xlu0 %1585
        %v1587 = vsel %vm845, %v1584, %v1586
        %v1590 = vsel %vm277, %v1582, 0
        %1592 = vmatprep.subr.mxu0 0.0
        %1593 = vmatpush1.msra.mxu0 0.0
        %1594 = vmatprep.subr.mxu0 0.0
        %1595 = vmatpush1.msra.mxu0 0.0
        %1596 = vmatprep.subr.mxu0 0.0
        %1597 = vmatpush1.msra.mxu0 0.0
        %1598 = vmatprep.subr.mxu0 0.0
        %1599 = vmatpush1.msra.mxu0 0.0
        %1600 = vmatprep.subr.mxu0 0.0
        %1601 = vmatpush1.msra.mxu0 0.0
        %1602 = vmatprep.subr.mxu0 0.0
        %1603 = vmatpush1.msra.mxu0 0.0
        %1604 = vmatprep.subr.mxu0 0.0
        %1605 = vmatpush1.msra.mxu0 0.0
        %1606 = vmatprep.subr.mxu0 0.0
        %1607 = vmatpush1.msra.mxu0 0.0
        %1608 = vmatprep.subr.mxu0 0.0
        %1609 = vmatpush1.msra.mxu0 0.0
        %1610 = vmatprep.subr.mxu0 0.0
        %1611 = vmatpush1.msra.mxu0 0.0
        %1612 = vmatprep.subr.mxu0 0.0
        %1613 = vmatpush1.msra.mxu0 0.0
        %1614 = vmatprep.subr.mxu0 0.0
        %1615 = vmatpush1.msra.mxu0 0.0
        %1616 = vmatprep.subr.mxu0 0.0
        %1617 = vmatpush1.msra.mxu0 0.0
        %1618 = vmatprep.subr.mxu0 0.0
        %1619 = vmatpush1.msra.mxu0 0.0
        %1620 = vmatprep.subr.mxu0 0.0
        %1621 = vmatpush1.msra.mxu0 0.0
        %1622 = vmatprep.subr.mxu0 0.0
        %1623 = vmatpush1.msra.mxu0 %v1587
        %1624 = vmatprep.subr.mxu0 0.0
        %1625 = vmatpush2.msra.mxu0 0.0
        %1626 = vmatprep.subr.mxu0 0.0
        %1627 = vmatpush2.msra.mxu0 0.0
        %1628 = vmatprep.subr.mxu0 0.0
        %1629 = vmatpush2.msra.mxu0 0.0
        %1630 = vmatprep.subr.mxu0 0.0
        %1631 = vmatpush2.msra.mxu0 0.0
        %1632 = vmatprep.subr.mxu0 0.0
        %1633 = vmatpush2.msra.mxu0 0.0
        %1634 = vmatprep.subr.mxu0 0.0
        %1635 = vmatpush2.msra.mxu0 0.0
        %1636 = vmatprep.subr.mxu0 0.0
        %1637 = vmatpush2.msra.mxu0 0.0
        %1638 = vmatprep.subr.mxu0 0.0
        %1639 = vmatpush2.msra.mxu0 0.0
        %1640 = vmatprep.subr.mxu0 0.0
        %1641 = vmatpush2.msra.mxu0 0.0
        %1642 = vmatprep.subr.mxu0 0.0
        %1643 = vmatpush2.msra.mxu0 0.0
        %1644 = vmatprep.subr.mxu0 0.0
        %1645 = vmatpush2.msra.mxu0 0.0
        %1646 = vmatprep.subr.mxu0 0.0
        %1647 = vmatpush2.msra.mxu0 0.0
        %1648 = vmatprep.subr.mxu0 0.0
        %1649 = vmatpush2.msra.mxu0 0.0
        %1650 = vmatprep.subr.mxu0 0.0
        %1651 = vmatpush2.msra.mxu0 0.0
        %1652 = vmatprep.subr.mxu0 0.0
        %1653 = vmatpush2.msra.mxu0 0.0
        %1654 = vmatprep.subr.mxu0 0.0
        %1655 = vmatpush2.msra.mxu0 0.0
        %1656 = vmatprep.mubr.f32.mxu0 0.0
        %1657 = vmatmul.mubr.f32.gmra.mxu0 %v1590
        %v1658 = vpop.f32.mrf.mxu0
        %v1659 = vadd.f32 0.0, %v1658
        %v1660 = vpop.f32.mrf.mxu0
        %1661 = vdwg.mxu0
        %v1662 = vadd.f32 %v1580, %v1659
        %s1663 = scalar_lea.vmem %s1, 136
        %v1664 = vld [vmem:[%s1663] sm:$0xff]
        %1665 = vrot.lane.b32.xlu0 %v1009, 110
        %v1666 = vpop.permute.xlu0 %1665
        %1667 = vrot.lane.b32.xlu0 %v1010, 110
        %v1668 = vpop.permute.xlu0 %1667
        %v1669 = vsel %vm928, %v1666, %v1668
        %v1672 = vsel %vm277, %v1664, 0
        %1674 = vmatprep.subr.mxu0 0.0
        %1675 = vmatpush1.msra.mxu0 0.0
        %1676 = vmatprep.subr.mxu0 0.0
        %1677 = vmatpush1.msra.mxu0 0.0
        %1678 = vmatprep.subr.mxu0 0.0
        %1679 = vmatpush1.msra.mxu0 0.0
        %1680 = vmatprep.subr.mxu0 0.0
        %1681 = vmatpush1.msra.mxu0 0.0
        %1682 = vmatprep.subr.mxu0 0.0
        %1683 = vmatpush1.msra.mxu0 0.0
        %1684 = vmatprep.subr.mxu0 0.0
        %1685 = vmatpush1.msra.mxu0 0.0
        %1686 = vmatprep.subr.mxu0 0.0
        %1687 = vmatpush1.msra.mxu0 0.0
        %1688 = vmatprep.subr.mxu0 0.0
        %1689 = vmatpush1.msra.mxu0 0.0
        %1690 = vmatprep.subr.mxu0 0.0
        %1691 = vmatpush1.msra.mxu0 0.0
        %1692 = vmatprep.subr.mxu0 0.0
        %1693 = vmatpush1.msra.mxu0 0.0
        %1694 = vmatprep.subr.mxu0 0.0
        %1695 = vmatpush1.msra.mxu0 0.0
        %1696 = vmatprep.subr.mxu0 0.0
        %1697 = vmatpush1.msra.mxu0 0.0
        %1698 = vmatprep.subr.mxu0 0.0
        %1699 = vmatpush1.msra.mxu0 0.0
        %1700 = vmatprep.subr.mxu0 0.0
        %1701 = vmatpush1.msra.mxu0 0.0
        %1702 = vmatprep.subr.mxu0 0.0
        %1703 = vmatpush1.msra.mxu0 0.0
        %1704 = vmatprep.subr.mxu0 0.0
        %1705 = vmatpush1.msra.mxu0 %v1669
        %1706 = vmatprep.subr.mxu0 0.0
        %1707 = vmatpush2.msra.mxu0 0.0
        %1708 = vmatprep.subr.mxu0 0.0
        %1709 = vmatpush2.msra.mxu0 0.0
        %1710 = vmatprep.subr.mxu0 0.0
        %1711 = vmatpush2.msra.mxu0 0.0
        %1712 = vmatprep.subr.mxu0 0.0
        %1713 = vmatpush2.msra.mxu0 0.0
        %1714 = vmatprep.subr.mxu0 0.0
        %1715 = vmatpush2.msra.mxu0 0.0
        %1716 = vmatprep.subr.mxu0 0.0
        %1717 = vmatpush2.msra.mxu0 0.0
        %1718 = vmatprep.subr.mxu0 0.0
        %1719 = vmatpush2.msra.mxu0 0.0
        %1720 = vmatprep.subr.mxu0 0.0
        %1721 = vmatpush2.msra.mxu0 0.0
        %1722 = vmatprep.subr.mxu0 0.0
        %1723 = vmatpush2.msra.mxu0 0.0
        %1724 = vmatprep.subr.mxu0 0.0
        %1725 = vmatpush2.msra.mxu0 0.0
        %1726 = vmatprep.subr.mxu0 0.0
        %1727 = vmatpush2.msra.mxu0 0.0
        %1728 = vmatprep.subr.mxu0 0.0
        %1729 = vmatpush2.msra.mxu0 0.0
        %1730 = vmatprep.subr.mxu0 0.0
        %1731 = vmatpush2.msra.mxu0 0.0
        %1732 = vmatprep.subr.mxu0 0.0
        %1733 = vmatpush2.msra.mxu0 0.0
        %1734 = vmatprep.subr.mxu0 0.0
        %1735 = vmatpush2.msra.mxu0 0.0
        %1736 = vmatprep.subr.mxu0 0.0
        %1737 = vmatpush2.msra.mxu0 0.0
        %1738 = vmatprep.mubr.f32.mxu0 0.0
        %1739 = vmatmul.mubr.f32.gmra.mxu0 %v1672
        %v1740 = vpop.f32.mrf.mxu0
        %v1741 = vadd.f32 0.0, %v1740
        %v1742 = vpop.f32.mrf.mxu0
        %1743 = vdwg.mxu0
        %v1744 = vadd.f32 %v1662, %v1741
        %s1745 = sadd.s32 %s24, 2
        %s1746 = smul.u32 %s1745, 2
        %s1747 = smul.addr %s1746, 8
        %s1748 = scalar_lea.vmem %s250, %s1747
        %v1749 = vld [vmem:[%s1748] sm:$0xff]
        %v1750 = vld [vmem:[%s1748 + $0x8] sm:$0xff]
        %s1751 = scalar_lea.vmem %s1, 144
        %v1752 = vld [vmem:[%s1751] sm:$0xff]
        %v1754 = vsel %vm277, %v1752, 0
        %1756 = vmatprep.subr.mxu0 0.0
        %1757 = vmatpush1.msra.mxu0 0.0
        %1758 = vmatprep.subr.mxu0 0.0
        %1759 = vmatpush1.msra.mxu0 0.0
        %1760 = vmatprep.subr.mxu0 0.0
        %1761 = vmatpush1.msra.mxu0 0.0
        %1762 = vmatprep.subr.mxu0 0.0
        %1763 = vmatpush1.msra.mxu0 0.0
        %1764 = vmatprep.subr.mxu0 0.0
        %1765 = vmatpush1.msra.mxu0 0.0
        %1766 = vmatprep.subr.mxu0 0.0
        %1767 = vmatpush1.msra.mxu0 0.0
        %1768 = vmatprep.subr.mxu0 0.0
        %1769 = vmatpush1.msra.mxu0 0.0
        %1770 = vmatprep.subr.mxu0 0.0
        %1771 = vmatpush1.msra.mxu0 0.0
        %1772 = vmatprep.subr.mxu0 0.0
        %1773 = vmatpush1.msra.mxu0 0.0
        %1774 = vmatprep.subr.mxu0 0.0
        %1775 = vmatpush1.msra.mxu0 0.0
        %1776 = vmatprep.subr.mxu0 0.0
        %1777 = vmatpush1.msra.mxu0 0.0
        %1778 = vmatprep.subr.mxu0 0.0
        %1779 = vmatpush1.msra.mxu0 0.0
        %1780 = vmatprep.subr.mxu0 0.0
        %1781 = vmatpush1.msra.mxu0 0.0
        %1782 = vmatprep.subr.mxu0 0.0
        %1783 = vmatpush1.msra.mxu0 0.0
        %1784 = vmatprep.subr.mxu0 0.0
        %1785 = vmatpush1.msra.mxu0 0.0
        %1786 = vmatprep.subr.mxu0 0.0
        %1787 = vmatpush1.msra.mxu0 %v1749
        %1788 = vmatprep.subr.mxu0 0.0
        %1789 = vmatpush2.msra.mxu0 0.0
        %1790 = vmatprep.subr.mxu0 0.0
        %1791 = vmatpush2.msra.mxu0 0.0
        %1792 = vmatprep.subr.mxu0 0.0
        %1793 = vmatpush2.msra.mxu0 0.0
        %1794 = vmatprep.subr.mxu0 0.0
        %1795 = vmatpush2.msra.mxu0 0.0
        %1796 = vmatprep.subr.mxu0 0.0
        %1797 = vmatpush2.msra.mxu0 0.0
        %1798 = vmatprep.subr.mxu0 0.0
        %1799 = vmatpush2.msra.mxu0 0.0
        %1800 = vmatprep.subr.mxu0 0.0
        %1801 = vmatpush2.msra.mxu0 0.0
        %1802 = vmatprep.subr.mxu0 0.0
        %1803 = vmatpush2.msra.mxu0 0.0
        %1804 = vmatprep.subr.mxu0 0.0
        %1805 = vmatpush2.msra.mxu0 0.0
        %1806 = vmatprep.subr.mxu0 0.0
        %1807 = vmatpush2.msra.mxu0 0.0
        %1808 = vmatprep.subr.mxu0 0.0
        %1809 = vmatpush2.msra.mxu0 0.0
        %1810 = vmatprep.subr.mxu0 0.0
        %1811 = vmatpush2.msra.mxu0 0.0
        %1812 = vmatprep.subr.mxu0 0.0
        %1813 = vmatpush2.msra.mxu0 0.0
        %1814 = vmatprep.subr.mxu0 0.0
        %1815 = vmatpush2.msra.mxu0 0.0
        %1816 = vmatprep.subr.mxu0 0.0
        %1817 = vmatpush2.msra.mxu0 0.0
        %1818 = vmatprep.subr.mxu0 0.0
        %1819 = vmatpush2.msra.mxu0 0.0
        %1820 = vmatprep.mubr.f32.mxu0 0.0
        %1821 = vmatmul.mubr.f32.gmra.mxu0 %v1754
        %v1822 = vpop.f32.mrf.mxu0
        %v1823 = vadd.f32 0.0, %v1822
        %v1824 = vpop.f32.mrf.mxu0
        %1825 = vdwg.mxu0
        %v1826 = vadd.f32 %v1744, %v1823
        %s1827 = scalar_lea.vmem %s1, 152
        %v1828 = vld [vmem:[%s1827] sm:$0xff]
        %1831 = vrot.lane.b32.xlu0 %v1749, 127
        %v1832 = vpop.permute.xlu0 %1831
        %1833 = vrot.lane.b32.xlu0 %v1750, 127
        %v1834 = vpop.permute.xlu0 %1833
        %v1835 = vsel %vm274, %v1832, %v1834
        %v1838 = vsel %vm277, %v1828, 0
        %1840 = vmatprep.subr.mxu0 0.0
        %1841 = vmatpush1.msra.mxu0 0.0
        %1842 = vmatprep.subr.mxu0 0.0
        %1843 = vmatpush1.msra.mxu0 0.0
        %1844 = vmatprep.subr.mxu0 0.0
        %1845 = vmatpush1.msra.mxu0 0.0
        %1846 = vmatprep.subr.mxu0 0.0
        %1847 = vmatpush1.msra.mxu0 0.0
        %1848 = vmatprep.subr.mxu0 0.0
        %1849 = vmatpush1.msra.mxu0 0.0
        %1850 = vmatprep.subr.mxu0 0.0
        %1851 = vmatpush1.msra.mxu0 0.0
        %1852 = vmatprep.subr.mxu0 0.0
        %1853 = vmatpush1.msra.mxu0 0.0
        %1854 = vmatprep.subr.mxu0 0.0
        %1855 = vmatpush1.msra.mxu0 0.0
        %1856 = vmatprep.subr.mxu0 0.0
        %1857 = vmatpush1.msra.mxu0 0.0
        %1858 = vmatprep.subr.mxu0 0.0
        %1859 = vmatpush1.msra.mxu0 0.0
        %1860 = vmatprep.subr.mxu0 0.0
        %1861 = vmatpush1.msra.mxu0 0.0
        %1862 = vmatprep.subr.mxu0 0.0
        %1863 = vmatpush1.msra.mxu0 0.0
        %1864 = vmatprep.subr.mxu0 0.0
        %1865 = vmatpush1.msra.mxu0 0.0
        %1866 = vmatprep.subr.mxu0 0.0
        %1867 = vmatpush1.msra.mxu0 0.0
        %1868 = vmatprep.subr.mxu0 0.0
        %1869 = vmatpush1.msra.mxu0 0.0
        %1870 = vmatprep.subr.mxu0 0.0
        %1871 = vmatpush1.msra.mxu0 %v1835
        %1872 = vmatprep.subr.mxu0 0.0
        %1873 = vmatpush2.msra.mxu0 0.0
        %1874 = vmatprep.subr.mxu0 0.0
        %1875 = vmatpush2.msra.mxu0 0.0
        %1876 = vmatprep.subr.mxu0 0.0
        %1877 = vmatpush2.msra.mxu0 0.0
        %1878 = vmatprep.subr.mxu0 0.0
        %1879 = vmatpush2.msra.mxu0 0.0
        %1880 = vmatprep.subr.mxu0 0.0
        %1881 = vmatpush2.msra.mxu0 0.0
        %1882 = vmatprep.subr.mxu0 0.0
        %1883 = vmatpush2.msra.mxu0 0.0
        %1884 = vmatprep.subr.mxu0 0.0
        %1885 = vmatpush2.msra.mxu0 0.0
        %1886 = vmatprep.subr.mxu0 0.0
        %1887 = vmatpush2.msra.mxu0 0.0
        %1888 = vmatprep.subr.mxu0 0.0
        %1889 = vmatpush2.msra.mxu0 0.0
        %1890 = vmatprep.subr.mxu0 0.0
        %1891 = vmatpush2.msra.mxu0 0.0
        %1892 = vmatprep.subr.mxu0 0.0
        %1893 = vmatpush2.msra.mxu0 0.0
        %1894 = vmatprep.subr.mxu0 0.0
        %1895 = vmatpush2.msra.mxu0 0.0
        %1896 = vmatprep.subr.mxu0 0.0
        %1897 = vmatpush2.msra.mxu0 0.0
        %1898 = vmatprep.subr.mxu0 0.0
        %1899 = vmatpush2.msra.mxu0 0.0
        %1900 = vmatprep.subr.mxu0 0.0
        %1901 = vmatpush2.msra.mxu0 0.0
        %1902 = vmatprep.subr.mxu0 0.0
        %1903 = vmatpush2.msra.mxu0 0.0
        %1904 = vmatprep.mubr.f32.mxu0 0.0
        %1905 = vmatmul.mubr.f32.gmra.mxu0 %v1838
        %v1906 = vpop.f32.mrf.mxu0
        %v1907 = vadd.f32 0.0, %v1906
        %v1908 = vpop.f32.mrf.mxu0
        %1909 = vdwg.mxu0
        %v1910 = vadd.f32 %v1826, %v1907
        %s1911 = scalar_lea.vmem %s1, 160
        %v1912 = vld [vmem:[%s1911] sm:$0xff]
        %1913 = vrot.lane.b32.xlu0 %v1749, 126
        %v1914 = vpop.permute.xlu0 %1913
        %1915 = vrot.lane.b32.xlu0 %v1750, 126
        %v1916 = vpop.permute.xlu0 %1915
        %v1917 = vsel %vm430, %v1914, %v1916
        %v1920 = vsel %vm277, %v1912, 0
        %1922 = vmatprep.subr.mxu0 0.0
        %1923 = vmatpush1.msra.mxu0 0.0
        %1924 = vmatprep.subr.mxu0 0.0
        %1925 = vmatpush1.msra.mxu0 0.0
        %1926 = vmatprep.subr.mxu0 0.0
        %1927 = vmatpush1.msra.mxu0 0.0
        %1928 = vmatprep.subr.mxu0 0.0
        %1929 = vmatpush1.msra.mxu0 0.0
        %1930 = vmatprep.subr.mxu0 0.0
        %1931 = vmatpush1.msra.mxu0 0.0
        %1932 = vmatprep.subr.mxu0 0.0
        %1933 = vmatpush1.msra.mxu0 0.0
        %1934 = vmatprep.subr.mxu0 0.0
        %1935 = vmatpush1.msra.mxu0 0.0
        %1936 = vmatprep.subr.mxu0 0.0
        %1937 = vmatpush1.msra.mxu0 0.0
        %1938 = vmatprep.subr.mxu0 0.0
        %1939 = vmatpush1.msra.mxu0 0.0
        %1940 = vmatprep.subr.mxu0 0.0
        %1941 = vmatpush1.msra.mxu0 0.0
        %1942 = vmatprep.subr.mxu0 0.0
        %1943 = vmatpush1.msra.mxu0 0.0
        %1944 = vmatprep.subr.mxu0 0.0
        %1945 = vmatpush1.msra.mxu0 0.0
        %1946 = vmatprep.subr.mxu0 0.0
        %1947 = vmatpush1.msra.mxu0 0.0
        %1948 = vmatprep.subr.mxu0 0.0
        %1949 = vmatpush1.msra.mxu0 0.0
        %1950 = vmatprep.subr.mxu0 0.0
        %1951 = vmatpush1.msra.mxu0 0.0
        %1952 = vmatprep.subr.mxu0 0.0
        %1953 = vmatpush1.msra.mxu0 %v1917
        %1954 = vmatprep.subr.mxu0 0.0
        %1955 = vmatpush2.msra.mxu0 0.0
        %1956 = vmatprep.subr.mxu0 0.0
        %1957 = vmatpush2.msra.mxu0 0.0
        %1958 = vmatprep.subr.mxu0 0.0
        %1959 = vmatpush2.msra.mxu0 0.0
        %1960 = vmatprep.subr.mxu0 0.0
        %1961 = vmatpush2.msra.mxu0 0.0
        %1962 = vmatprep.subr.mxu0 0.0
        %1963 = vmatpush2.msra.mxu0 0.0
        %1964 = vmatprep.subr.mxu0 0.0
        %1965 = vmatpush2.msra.mxu0 0.0
        %1966 = vmatprep.subr.mxu0 0.0
        %1967 = vmatpush2.msra.mxu0 0.0
        %1968 = vmatprep.subr.mxu0 0.0
        %1969 = vmatpush2.msra.mxu0 0.0
        %1970 = vmatprep.subr.mxu0 0.0
        %1971 = vmatpush2.msra.mxu0 0.0
        %1972 = vmatprep.subr.mxu0 0.0
        %1973 = vmatpush2.msra.mxu0 0.0
        %1974 = vmatprep.subr.mxu0 0.0
        %1975 = vmatpush2.msra.mxu0 0.0
        %1976 = vmatprep.subr.mxu0 0.0
        %1977 = vmatpush2.msra.mxu0 0.0
        %1978 = vmatprep.subr.mxu0 0.0
        %1979 = vmatpush2.msra.mxu0 0.0
        %1980 = vmatprep.subr.mxu0 0.0
        %1981 = vmatpush2.msra.mxu0 0.0
        %1982 = vmatprep.subr.mxu0 0.0
        %1983 = vmatpush2.msra.mxu0 0.0
        %1984 = vmatprep.subr.mxu0 0.0
        %1985 = vmatpush2.msra.mxu0 0.0
        %1986 = vmatprep.mubr.f32.mxu0 0.0
        %1987 = vmatmul.mubr.f32.gmra.mxu0 %v1920
        %v1988 = vpop.f32.mrf.mxu0
        %v1989 = vadd.f32 0.0, %v1988
        %v1990 = vpop.f32.mrf.mxu0
        %1991 = vdwg.mxu0
        %v1992 = vadd.f32 %v1910, %v1989
        %s1993 = scalar_lea.vmem %s1, 168
        %v1994 = vld [vmem:[%s1993] sm:$0xff]
        %1995 = vrot.lane.b32.xlu0 %v1749, 120
        %v1996 = vpop.permute.xlu0 %1995
        %1997 = vrot.lane.b32.xlu0 %v1750, 120
        %v1998 = vpop.permute.xlu0 %1997
        %v1999 = vsel %vm513, %v1996, %v1998
        %v2002 = vsel %vm277, %v1994, 0
        %2004 = vmatprep.subr.mxu0 0.0
        %2005 = vmatpush1.msra.mxu0 0.0
        %2006 = vmatprep.subr.mxu0 0.0
        %2007 = vmatpush1.msra.mxu0 0.0
        %2008 = vmatprep.subr.mxu0 0.0
        %2009 = vmatpush1.msra.mxu0 0.0
        %2010 = vmatprep.subr.mxu0 0.0
        %2011 = vmatpush1.msra.mxu0 0.0
        %2012 = vmatprep.subr.mxu0 0.0
        %2013 = vmatpush1.msra.mxu0 0.0
        %2014 = vmatprep.subr.mxu0 0.0
        %2015 = vmatpush1.msra.mxu0 0.0
        %2016 = vmatprep.subr.mxu0 0.0
        %2017 = vmatpush1.msra.mxu0 0.0
        %2018 = vmatprep.subr.mxu0 0.0
        %2019 = vmatpush1.msra.mxu0 0.0
        %2020 = vmatprep.subr.mxu0 0.0
        %2021 = vmatpush1.msra.mxu0 0.0
        %2022 = vmatprep.subr.mxu0 0.0
        %2023 = vmatpush1.msra.mxu0 0.0
        %2024 = vmatprep.subr.mxu0 0.0
        %2025 = vmatpush1.msra.mxu0 0.0
        %2026 = vmatprep.subr.mxu0 0.0
        %2027 = vmatpush1.msra.mxu0 0.0
        %2028 = vmatprep.subr.mxu0 0.0
        %2029 = vmatpush1.msra.mxu0 0.0
        %2030 = vmatprep.subr.mxu0 0.0
        %2031 = vmatpush1.msra.mxu0 0.0
        %2032 = vmatprep.subr.mxu0 0.0
        %2033 = vmatpush1.msra.mxu0 0.0
        %2034 = vmatprep.subr.mxu0 0.0
        %2035 = vmatpush1.msra.mxu0 %v1999
        %2036 = vmatprep.subr.mxu0 0.0
        %2037 = vmatpush2.msra.mxu0 0.0
        %2038 = vmatprep.subr.mxu0 0.0
        %2039 = vmatpush2.msra.mxu0 0.0
        %2040 = vmatprep.subr.mxu0 0.0
        %2041 = vmatpush2.msra.mxu0 0.0
        %2042 = vmatprep.subr.mxu0 0.0
        %2043 = vmatpush2.msra.mxu0 0.0
        %2044 = vmatprep.subr.mxu0 0.0
        %2045 = vmatpush2.msra.mxu0 0.0
        %2046 = vmatprep.subr.mxu0 0.0
        %2047 = vmatpush2.msra.mxu0 0.0
        %2048 = vmatprep.subr.mxu0 0.0
        %2049 = vmatpush2.msra.mxu0 0.0
        %2050 = vmatprep.subr.mxu0 0.0
        %2051 = vmatpush2.msra.mxu0 0.0
        %2052 = vmatprep.subr.mxu0 0.0
        %2053 = vmatpush2.msra.mxu0 0.0
        %2054 = vmatprep.subr.mxu0 0.0
        %2055 = vmatpush2.msra.mxu0 0.0
        %2056 = vmatprep.subr.mxu0 0.0
        %2057 = vmatpush2.msra.mxu0 0.0
        %2058 = vmatprep.subr.mxu0 0.0
        %2059 = vmatpush2.msra.mxu0 0.0
        %2060 = vmatprep.subr.mxu0 0.0
        %2061 = vmatpush2.msra.mxu0 0.0
        %2062 = vmatprep.subr.mxu0 0.0
        %2063 = vmatpush2.msra.mxu0 0.0
        %2064 = vmatprep.subr.mxu0 0.0
        %2065 = vmatpush2.msra.mxu0 0.0
        %2066 = vmatprep.subr.mxu0 0.0
        %2067 = vmatpush2.msra.mxu0 0.0
        %2068 = vmatprep.mubr.f32.mxu0 0.0
        %2069 = vmatmul.mubr.f32.gmra.mxu0 %v2002
        %v2070 = vpop.f32.mrf.mxu0
        %v2071 = vadd.f32 0.0, %v2070
        %v2072 = vpop.f32.mrf.mxu0
        %2073 = vdwg.mxu0
        %v2074 = vadd.f32 %v1992, %v2071
        %s2075 = scalar_lea.vmem %s1, 176
        %v2076 = vld [vmem:[%s2075] sm:$0xff]
        %2077 = vrot.lane.b32.xlu0 %v1749, 119
        %v2078 = vpop.permute.xlu0 %2077
        %2079 = vrot.lane.b32.xlu0 %v1750, 119
        %v2080 = vpop.permute.xlu0 %2079
        %v2081 = vsel %vm596, %v2078, %v2080
        %v2084 = vsel %vm277, %v2076, 0
        %2086 = vmatprep.subr.mxu0 0.0
        %2087 = vmatpush1.msra.mxu0 0.0
        %2088 = vmatprep.subr.mxu0 0.0
        %2089 = vmatpush1.msra.mxu0 0.0
        %2090 = vmatprep.subr.mxu0 0.0
        %2091 = vmatpush1.msra.mxu0 0.0
        %2092 = vmatprep.subr.mxu0 0.0
        %2093 = vmatpush1.msra.mxu0 0.0
        %2094 = vmatprep.subr.mxu0 0.0
        %2095 = vmatpush1.msra.mxu0 0.0
        %2096 = vmatprep.subr.mxu0 0.0
        %2097 = vmatpush1.msra.mxu0 0.0
        %2098 = vmatprep.subr.mxu0 0.0
        %2099 = vmatpush1.msra.mxu0 0.0
        %2100 = vmatprep.subr.mxu0 0.0
        %2101 = vmatpush1.msra.mxu0 0.0
        %2102 = vmatprep.subr.mxu0 0.0
        %2103 = vmatpush1.msra.mxu0 0.0
        %2104 = vmatprep.subr.mxu0 0.0
        %2105 = vmatpush1.msra.mxu0 0.0
        %2106 = vmatprep.subr.mxu0 0.0
        %2107 = vmatpush1.msra.mxu0 0.0
        %2108 = vmatprep.subr.mxu0 0.0
        %2109 = vmatpush1.msra.mxu0 0.0
        %2110 = vmatprep.subr.mxu0 0.0
        %2111 = vmatpush1.msra.mxu0 0.0
        %2112 = vmatprep.subr.mxu0 0.0
        %2113 = vmatpush1.msra.mxu0 0.0
        %2114 = vmatprep.subr.mxu0 0.0
        %2115 = vmatpush1.msra.mxu0 0.0
        %2116 = vmatprep.subr.mxu0 0.0
        %2117 = vmatpush1.msra.mxu0 %v2081
        %2118 = vmatprep.subr.mxu0 0.0
        %2119 = vmatpush2.msra.mxu0 0.0
        %2120 = vmatprep.subr.mxu0 0.0
        %2121 = vmatpush2.msra.mxu0 0.0
        %2122 = vmatprep.subr.mxu0 0.0
        %2123 = vmatpush2.msra.mxu0 0.0
        %2124 = vmatprep.subr.mxu0 0.0
        %2125 = vmatpush2.msra.mxu0 0.0
        %2126 = vmatprep.subr.mxu0 0.0
        %2127 = vmatpush2.msra.mxu0 0.0
        %2128 = vmatprep.subr.mxu0 0.0
        %2129 = vmatpush2.msra.mxu0 0.0
        %2130 = vmatprep.subr.mxu0 0.0
        %2131 = vmatpush2.msra.mxu0 0.0
        %2132 = vmatprep.subr.mxu0 0.0
        %2133 = vmatpush2.msra.mxu0 0.0
        %2134 = vmatprep.subr.mxu0 0.0
        %2135 = vmatpush2.msra.mxu0 0.0
        %2136 = vmatprep.subr.mxu0 0.0
        %2137 = vmatpush2.msra.mxu0 0.0
        %2138 = vmatprep.subr.mxu0 0.0
        %2139 = vmatpush2.msra.mxu0 0.0
        %2140 = vmatprep.subr.mxu0 0.0
        %2141 = vmatpush2.msra.mxu0 0.0
        %2142 = vmatprep.subr.mxu0 0.0
        %2143 = vmatpush2.msra.mxu0 0.0
        %2144 = vmatprep.subr.mxu0 0.0
        %2145 = vmatpush2.msra.mxu0 0.0
        %2146 = vmatprep.subr.mxu0 0.0
        %2147 = vmatpush2.msra.mxu0 0.0
        %2148 = vmatprep.subr.mxu0 0.0
        %2149 = vmatpush2.msra.mxu0 0.0
        %2150 = vmatprep.mubr.f32.mxu0 0.0
        %2151 = vmatmul.mubr.f32.gmra.mxu0 %v2084
        %v2152 = vpop.f32.mrf.mxu0
        %v2153 = vadd.f32 0.0, %v2152
        %v2154 = vpop.f32.mrf.mxu0
        %2155 = vdwg.mxu0
        %v2156 = vadd.f32 %v2074, %v2153
        %s2157 = scalar_lea.vmem %s1, 184
        %v2158 = vld [vmem:[%s2157] sm:$0xff]
        %2159 = vrot.lane.b32.xlu0 %v1749, 118
        %v2160 = vpop.permute.xlu0 %2159
        %2161 = vrot.lane.b32.xlu0 %v1750, 118
        %v2162 = vpop.permute.xlu0 %2161
        %v2163 = vsel %vm679, %v2160, %v2162
        %v2166 = vsel %vm277, %v2158, 0
        %2168 = vmatprep.subr.mxu0 0.0
        %2169 = vmatpush1.msra.mxu0 0.0
        %2170 = vmatprep.subr.mxu0 0.0
        %2171 = vmatpush1.msra.mxu0 0.0
        %2172 = vmatprep.subr.mxu0 0.0
        %2173 = vmatpush1.msra.mxu0 0.0
        %2174 = vmatprep.subr.mxu0 0.0
        %2175 = vmatpush1.msra.mxu0 0.0
        %2176 = vmatprep.subr.mxu0 0.0
        %2177 = vmatpush1.msra.mxu0 0.0
        %2178 = vmatprep.subr.mxu0 0.0
        %2179 = vmatpush1.msra.mxu0 0.0
        %2180 = vmatprep.subr.mxu0 0.0
        %2181 = vmatpush1.msra.mxu0 0.0
        %2182 = vmatprep.subr.mxu0 0.0
        %2183 = vmatpush1.msra.mxu0 0.0
        %2184 = vmatprep.subr.mxu0 0.0
        %2185 = vmatpush1.msra.mxu0 0.0
        %2186 = vmatprep.subr.mxu0 0.0
        %2187 = vmatpush1.msra.mxu0 0.0
        %2188 = vmatprep.subr.mxu0 0.0
        %2189 = vmatpush1.msra.mxu0 0.0
        %2190 = vmatprep.subr.mxu0 0.0
        %2191 = vmatpush1.msra.mxu0 0.0
        %2192 = vmatprep.subr.mxu0 0.0
        %2193 = vmatpush1.msra.mxu0 0.0
        %2194 = vmatprep.subr.mxu0 0.0
        %2195 = vmatpush1.msra.mxu0 0.0
        %2196 = vmatprep.subr.mxu0 0.0
        %2197 = vmatpush1.msra.mxu0 0.0
        %2198 = vmatprep.subr.mxu0 0.0
        %2199 = vmatpush1.msra.mxu0 %v2163
        %2200 = vmatprep.subr.mxu0 0.0
        %2201 = vmatpush2.msra.mxu0 0.0
        %2202 = vmatprep.subr.mxu0 0.0
        %2203 = vmatpush2.msra.mxu0 0.0
        %2204 = vmatprep.subr.mxu0 0.0
        %2205 = vmatpush2.msra.mxu0 0.0
        %2206 = vmatprep.subr.mxu0 0.0
        %2207 = vmatpush2.msra.mxu0 0.0
        %2208 = vmatprep.subr.mxu0 0.0
        %2209 = vmatpush2.msra.mxu0 0.0
        %2210 = vmatprep.subr.mxu0 0.0
        %2211 = vmatpush2.msra.mxu0 0.0
        %2212 = vmatprep.subr.mxu0 0.0
        %2213 = vmatpush2.msra.mxu0 0.0
        %2214 = vmatprep.subr.mxu0 0.0
        %2215 = vmatpush2.msra.mxu0 0.0
        %2216 = vmatprep.subr.mxu0 0.0
        %2217 = vmatpush2.msra.mxu0 0.0
        %2218 = vmatprep.subr.mxu0 0.0
        %2219 = vmatpush2.msra.mxu0 0.0
        %2220 = vmatprep.subr.mxu0 0.0
        %2221 = vmatpush2.msra.mxu0 0.0
        %2222 = vmatprep.subr.mxu0 0.0
        %2223 = vmatpush2.msra.mxu0 0.0
        %2224 = vmatprep.subr.mxu0 0.0
        %2225 = vmatpush2.msra.mxu0 0.0
        %2226 = vmatprep.subr.mxu0 0.0
        %2227 = vmatpush2.msra.mxu0 0.0
        %2228 = vmatprep.subr.mxu0 0.0
        %2229 = vmatpush2.msra.mxu0 0.0
        %2230 = vmatprep.subr.mxu0 0.0
        %2231 = vmatpush2.msra.mxu0 0.0
        %2232 = vmatprep.mubr.f32.mxu0 0.0
        %2233 = vmatmul.mubr.f32.gmra.mxu0 %v2166
        %v2234 = vpop.f32.mrf.mxu0
        %v2235 = vadd.f32 0.0, %v2234
        %v2236 = vpop.f32.mrf.mxu0
        %2237 = vdwg.mxu0
        %v2238 = vadd.f32 %v2156, %v2235
        %s2239 = scalar_lea.vmem %s1, 192
        %v2240 = vld [vmem:[%s2239] sm:$0xff]
        %2241 = vrot.lane.b32.xlu0 %v1749, 112
        %v2242 = vpop.permute.xlu0 %2241
        %2243 = vrot.lane.b32.xlu0 %v1750, 112
        %v2244 = vpop.permute.xlu0 %2243
        %v2245 = vsel %vm762, %v2242, %v2244
        %v2248 = vsel %vm277, %v2240, 0
        %2250 = vmatprep.subr.mxu0 0.0
        %2251 = vmatpush1.msra.mxu0 0.0
        %2252 = vmatprep.subr.mxu0 0.0
        %2253 = vmatpush1.msra.mxu0 0.0
        %2254 = vmatprep.subr.mxu0 0.0
        %2255 = vmatpush1.msra.mxu0 0.0
        %2256 = vmatprep.subr.mxu0 0.0
        %2257 = vmatpush1.msra.mxu0 0.0
        %2258 = vmatprep.subr.mxu0 0.0
        %2259 = vmatpush1.msra.mxu0 0.0
        %2260 = vmatprep.subr.mxu0 0.0
        %2261 = vmatpush1.msra.mxu0 0.0
        %2262 = vmatprep.subr.mxu0 0.0
        %2263 = vmatpush1.msra.mxu0 0.0
        %2264 = vmatprep.subr.mxu0 0.0
        %2265 = vmatpush1.msra.mxu0 0.0
        %2266 = vmatprep.subr.mxu0 0.0
        %2267 = vmatpush1.msra.mxu0 0.0
        %2268 = vmatprep.subr.mxu0 0.0
        %2269 = vmatpush1.msra.mxu0 0.0
        %2270 = vmatprep.subr.mxu0 0.0
        %2271 = vmatpush1.msra.mxu0 0.0
        %2272 = vmatprep.subr.mxu0 0.0
        %2273 = vmatpush1.msra.mxu0 0.0
        %2274 = vmatprep.subr.mxu0 0.0
        %2275 = vmatpush1.msra.mxu0 0.0
        %2276 = vmatprep.subr.mxu0 0.0
        %2277 = vmatpush1.msra.mxu0 0.0
        %2278 = vmatprep.subr.mxu0 0.0
        %2279 = vmatpush1.msra.mxu0 0.0
        %2280 = vmatprep.subr.mxu0 0.0
        %2281 = vmatpush1.msra.mxu0 %v2245
        %2282 = vmatprep.subr.mxu0 0.0
        %2283 = vmatpush2.msra.mxu0 0.0
        %2284 = vmatprep.subr.mxu0 0.0
        %2285 = vmatpush2.msra.mxu0 0.0
        %2286 = vmatprep.subr.mxu0 0.0
        %2287 = vmatpush2.msra.mxu0 0.0
        %2288 = vmatprep.subr.mxu0 0.0
        %2289 = vmatpush2.msra.mxu0 0.0
        %2290 = vmatprep.subr.mxu0 0.0
        %2291 = vmatpush2.msra.mxu0 0.0
        %2292 = vmatprep.subr.mxu0 0.0
        %2293 = vmatpush2.msra.mxu0 0.0
        %2294 = vmatprep.subr.mxu0 0.0
        %2295 = vmatpush2.msra.mxu0 0.0
        %2296 = vmatprep.subr.mxu0 0.0
        %2297 = vmatpush2.msra.mxu0 0.0
        %2298 = vmatprep.subr.mxu0 0.0
        %2299 = vmatpush2.msra.mxu0 0.0
        %2300 = vmatprep.subr.mxu0 0.0
        %2301 = vmatpush2.msra.mxu0 0.0
        %2302 = vmatprep.subr.mxu0 0.0
        %2303 = vmatpush2.msra.mxu0 0.0
        %2304 = vmatprep.subr.mxu0 0.0
        %2305 = vmatpush2.msra.mxu0 0.0
        %2306 = vmatprep.subr.mxu0 0.0
        %2307 = vmatpush2.msra.mxu0 0.0
        %2308 = vmatprep.subr.mxu0 0.0
        %2309 = vmatpush2.msra.mxu0 0.0
        %2310 = vmatprep.subr.mxu0 0.0
        %2311 = vmatpush2.msra.mxu0 0.0
        %2312 = vmatprep.subr.mxu0 0.0
        %2313 = vmatpush2.msra.mxu0 0.0
        %2314 = vmatprep.mubr.f32.mxu0 0.0
        %2315 = vmatmul.mubr.f32.gmra.mxu0 %v2248
        %v2316 = vpop.f32.mrf.mxu0
        %v2317 = vadd.f32 0.0, %v2316
        %v2318 = vpop.f32.mrf.mxu0
        %2319 = vdwg.mxu0
        %v2320 = vadd.f32 %v2238, %v2317
        %s2321 = scalar_lea.vmem %s1, 200
        %v2322 = vld [vmem:[%s2321] sm:$0xff]
        %2323 = vrot.lane.b32.xlu0 %v1749, 111
        %v2324 = vpop.permute.xlu0 %2323
        %2325 = vrot.lane.b32.xlu0 %v1750, 111
        %v2326 = vpop.permute.xlu0 %2325
        %v2327 = vsel %vm845, %v2324, %v2326
        %v2330 = vsel %vm277, %v2322, 0
        %2332 = vmatprep.subr.mxu0 0.0
        %2333 = vmatpush1.msra.mxu0 0.0
        %2334 = vmatprep.subr.mxu0 0.0
        %2335 = vmatpush1.msra.mxu0 0.0
        %2336 = vmatprep.subr.mxu0 0.0
        %2337 = vmatpush1.msra.mxu0 0.0
        %2338 = vmatprep.subr.mxu0 0.0
        %2339 = vmatpush1.msra.mxu0 0.0
        %2340 = vmatprep.subr.mxu0 0.0
        %2341 = vmatpush1.msra.mxu0 0.0
        %2342 = vmatprep.subr.mxu0 0.0
        %2343 = vmatpush1.msra.mxu0 0.0
        %2344 = vmatprep.subr.mxu0 0.0
        %2345 = vmatpush1.msra.mxu0 0.0
        %2346 = vmatprep.subr.mxu0 0.0
        %2347 = vmatpush1.msra.mxu0 0.0
        %2348 = vmatprep.subr.mxu0 0.0
        %2349 = vmatpush1.msra.mxu0 0.0
        %2350 = vmatprep.subr.mxu0 0.0
        %2351 = vmatpush1.msra.mxu0 0.0
        %2352 = vmatprep.subr.mxu0 0.0
        %2353 = vmatpush1.msra.mxu0 0.0
        %2354 = vmatprep.subr.mxu0 0.0
        %2355 = vmatpush1.msra.mxu0 0.0
        %2356 = vmatprep.subr.mxu0 0.0
        %2357 = vmatpush1.msra.mxu0 0.0
        %2358 = vmatprep.subr.mxu0 0.0
        %2359 = vmatpush1.msra.mxu0 0.0
        %2360 = vmatprep.subr.mxu0 0.0
        %2361 = vmatpush1.msra.mxu0 0.0
        %2362 = vmatprep.subr.mxu0 0.0
        %2363 = vmatpush1.msra.mxu0 %v2327
        %2364 = vmatprep.subr.mxu0 0.0
        %2365 = vmatpush2.msra.mxu0 0.0
        %2366 = vmatprep.subr.mxu0 0.0
        %2367 = vmatpush2.msra.mxu0 0.0
        %2368 = vmatprep.subr.mxu0 0.0
        %2369 = vmatpush2.msra.mxu0 0.0
        %2370 = vmatprep.subr.mxu0 0.0
        %2371 = vmatpush2.msra.mxu0 0.0
        %2372 = vmatprep.subr.mxu0 0.0
        %2373 = vmatpush2.msra.mxu0 0.0
        %2374 = vmatprep.subr.mxu0 0.0
        %2375 = vmatpush2.msra.mxu0 0.0
        %2376 = vmatprep.subr.mxu0 0.0
        %2377 = vmatpush2.msra.mxu0 0.0
        %2378 = vmatprep.subr.mxu0 0.0
        %2379 = vmatpush2.msra.mxu0 0.0
        %2380 = vmatprep.subr.mxu0 0.0
        %2381 = vmatpush2.msra.mxu0 0.0
        %2382 = vmatprep.subr.mxu0 0.0
        %2383 = vmatpush2.msra.mxu0 0.0
        %2384 = vmatprep.subr.mxu0 0.0
        %2385 = vmatpush2.msra.mxu0 0.0
        %2386 = vmatprep.subr.mxu0 0.0
        %2387 = vmatpush2.msra.mxu0 0.0
        %2388 = vmatprep.subr.mxu0 0.0
        %2389 = vmatpush2.msra.mxu0 0.0
        %2390 = vmatprep.subr.mxu0 0.0
        %2391 = vmatpush2.msra.mxu0 0.0
        %2392 = vmatprep.subr.mxu0 0.0
        %2393 = vmatpush2.msra.mxu0 0.0
        %2394 = vmatprep.subr.mxu0 0.0
        %2395 = vmatpush2.msra.mxu0 0.0
        %2396 = vmatprep.mubr.f32.mxu0 0.0
        %2397 = vmatmul.mubr.f32.gmra.mxu0 %v2330
        %v2398 = vpop.f32.mrf.mxu0
        %v2399 = vadd.f32 0.0, %v2398
        %v2400 = vpop.f32.mrf.mxu0
        %2401 = vdwg.mxu0
        %v2402 = vadd.f32 %v2320, %v2399
        %s2403 = scalar_lea.vmem %s1, 208
        %v2404 = vld [vmem:[%s2403] sm:$0xff]
        %2405 = vrot.lane.b32.xlu0 %v1749, 110
        %v2406 = vpop.permute.xlu0 %2405
        %2407 = vrot.lane.b32.xlu0 %v1750, 110
        %v2408 = vpop.permute.xlu0 %2407
        %v2409 = vsel %vm928, %v2406, %v2408
        %v2412 = vsel %vm277, %v2404, 0
        %2414 = vmatprep.subr.mxu0 0.0
        %2415 = vmatpush1.msra.mxu0 0.0
        %2416 = vmatprep.subr.mxu0 0.0
        %2417 = vmatpush1.msra.mxu0 0.0
        %2418 = vmatprep.subr.mxu0 0.0
        %2419 = vmatpush1.msra.mxu0 0.0
        %2420 = vmatprep.subr.mxu0 0.0
        %2421 = vmatpush1.msra.mxu0 0.0
        %2422 = vmatprep.subr.mxu0 0.0
        %2423 = vmatpush1.msra.mxu0 0.0
        %2424 = vmatprep.subr.mxu0 0.0
        %2425 = vmatpush1.msra.mxu0 0.0
        %2426 = vmatprep.subr.mxu0 0.0
        %2427 = vmatpush1.msra.mxu0 0.0
        %2428 = vmatprep.subr.mxu0 0.0
        %2429 = vmatpush1.msra.mxu0 0.0
        %2430 = vmatprep.subr.mxu0 0.0
        %2431 = vmatpush1.msra.mxu0 0.0
        %2432 = vmatprep.subr.mxu0 0.0
        %2433 = vmatpush1.msra.mxu0 0.0
        %2434 = vmatprep.subr.mxu0 0.0
        %2435 = vmatpush1.msra.mxu0 0.0
        %2436 = vmatprep.subr.mxu0 0.0
        %2437 = vmatpush1.msra.mxu0 0.0
        %2438 = vmatprep.subr.mxu0 0.0
        %2439 = vmatpush1.msra.mxu0 0.0
        %2440 = vmatprep.subr.mxu0 0.0
        %2441 = vmatpush1.msra.mxu0 0.0
        %2442 = vmatprep.subr.mxu0 0.0
        %2443 = vmatpush1.msra.mxu0 0.0
        %2444 = vmatprep.subr.mxu0 0.0
        %2445 = vmatpush1.msra.mxu0 %v2409
        %2446 = vmatprep.subr.mxu0 0.0
        %2447 = vmatpush2.msra.mxu0 0.0
        %2448 = vmatprep.subr.mxu0 0.0
        %2449 = vmatpush2.msra.mxu0 0.0
        %2450 = vmatprep.subr.mxu0 0.0
        %2451 = vmatpush2.msra.mxu0 0.0
        %2452 = vmatprep.subr.mxu0 0.0
        %2453 = vmatpush2.msra.mxu0 0.0
        %2454 = vmatprep.subr.mxu0 0.0
        %2455 = vmatpush2.msra.mxu0 0.0
        %2456 = vmatprep.subr.mxu0 0.0
        %2457 = vmatpush2.msra.mxu0 0.0
        %2458 = vmatprep.subr.mxu0 0.0
        %2459 = vmatpush2.msra.mxu0 0.0
        %2460 = vmatprep.subr.mxu0 0.0
        %2461 = vmatpush2.msra.mxu0 0.0
        %2462 = vmatprep.subr.mxu0 0.0
        %2463 = vmatpush2.msra.mxu0 0.0
        %2464 = vmatprep.subr.mxu0 0.0
        %2465 = vmatpush2.msra.mxu0 0.0
        %2466 = vmatprep.subr.mxu0 0.0
        %2467 = vmatpush2.msra.mxu0 0.0
        %2468 = vmatprep.subr.mxu0 0.0
        %2469 = vmatpush2.msra.mxu0 0.0
        %2470 = vmatprep.subr.mxu0 0.0
        %2471 = vmatpush2.msra.mxu0 0.0
        %2472 = vmatprep.subr.mxu0 0.0
        %2473 = vmatpush2.msra.mxu0 0.0
        %2474 = vmatprep.subr.mxu0 0.0
        %2475 = vmatpush2.msra.mxu0 0.0
        %2476 = vmatprep.subr.mxu0 0.0
        %2477 = vmatpush2.msra.mxu0 0.0
        %2478 = vmatprep.mubr.f32.mxu0 0.0
        %2479 = vmatmul.mubr.f32.gmra.mxu0 %v2412
        %v2480 = vpop.f32.mrf.mxu0
        %v2481 = vadd.f32 0.0, %v2480
        %v2482 = vpop.f32.mrf.mxu0
        %2483 = vdwg.mxu0
        %v2484 = vadd.f32 %v2402, %v2481
        %s2485 = smul.u32 %s23, 6
        %s2486 = sadd.s32 %s2485, %s24
        %s2487 = smul.u32 %s2486, 8
        %s2488 = scalar_lea.vmem [#allocation5], %s2487
        %2489 = vst [vmem:[%s2488] sm:$0xff] %v2484
        %v2490 = vld [vmem:[%s2] sm:$0x1]
        %v2492 = vlaneseq
        %v2493 = vshrl.u32 %v2492, 7
        %v2494 = vsub.s32 0, %v2493
        %v2495 = vrot.slane %v2490, %v2494
        %v2497 = vmul.f32 %v2484, %v2495
        %v2498 = vld [vmem:[#allocation2] sm:$0xff]
        %2499 = vadd.xlane.f32.xlu0 %v2497
        %v2500 = vpop.xlane.xlu0 %2499
        %v2501 = vadd.f32 %v2498, %v2500
        %vm2502 = vcmask 7168
        %2503 = vst.msk [vmem:[#allocation2] sm:$0xff] %vm2502, %v2501
        %v2504 = vld [vmem:[#allocation3] sm:$0xff]
        %v2505 = vmul.f32 %v2497, %v2497
        %2506 = vadd.xlane.f32.xlu0 %v2505
        %v2507 = vpop.xlane.xlu0 %2506
        %v2508 = vadd.f32 %v2504, %v2507
        %2509 = vst.msk [vmem:[#allocation3] sm:$0xff] %vm2502, %v2508
        %p2510 = scmp.eq.s32.totalorder %s23, 1
        %p2511 = scmp.eq.s32.totalorder %s24, 5
        %p2512 = pnand %p2510, %p2511
        %p2513 = pneg %p2512
        // Predicated region
        $region49: #{tpu_custom_call.1} parent=43 // pred_check
          _
        $region50: #{tpu_custom_call.1} parent=43 // pred_check_branch
          %2515 = sbr.rel (%p2512) target = $region52
        $region51: #{tpu_custom_call.1} parent=43 // pred_region
          %v2516 = vld [vmem:[#allocation2] sm:$0xff]
          %v2517 = vmul.f32 %v2516, 0.0023148148
          %v2518 = vld [vmem:[#allocation3] sm:$0xff]
          %v2519 = vmul.f32 %v2518, 0.0023148148
          %v2520 = vmul.f32 %v2517, %v2517
          %v2521 = vsub.f32 %v2519, %v2520
          %v2522 = vld [vmem:[%s3] sm:$0xff]
          %v2523 = vadd.f32 %v2521, 1e-05
          %v2524 = vrsqrt.pop %v2523
          %v2525 = vmul.f32 %v2522, %v2524
          %v2526 = vld [vmem:[%s4] sm:$0xff]
          %v2527 = vmul.f32 %v2517, %v2525
          %v2528 = vsub.f32 %v2526, %v2527
          %s2529 = sld [smem:[#allocation4]]
          loop: start=0, step=1, limit=12
          $region53: #{tpu_custom_call.1} parent=51 // loop_pre_header
            _
          $region54: #{tpu_custom_call.1} parent=51 // loop_header
            %s2531 = sphi 0, %s2535
            %p2532 = scmp.ge.s32.totalorder %s2531, 12
          $region55: #{tpu_custom_call.1} parent=51 // loop_header_branch
            %2534 = sbr.rel (%p2532) target = $region59
          $region56: #{tpu_custom_call.1} parent=51 // loop_body
            %s2536 = smul.u32 %s2531, 8
            %s2537 = scalar_lea.vmem [#allocation5], %s2536
            %v2538 = vld [vmem:[%s2537] sm:$0xff]
            %2540 = vset.pattern.permute.xlu0 0
            %2541 = vperm.xlu0 %2540, %v2525
            %v2542 = vpop.permute.xlu0 %2541
            %v2544 = vmul.f32 %v2538, %v2542
            %2546 = vset.pattern.permute.xlu0 0
            %2547 = vperm.xlu0 %2546, %v2528
            %v2548 = vpop.permute.xlu0 %2547
            %v2550 = vadd.f32 %v2544, %v2548
            %vm2551 = vcmp.ge.f32.partialorder %v2550, 0.0
            %v2552 = vstv %s2529
            %v2553 = vmul.f32 %v2552, %v2550
            %v2554 = vsel %vm2551, %v2550, %v2553
            %2555 = vst [vmem:[%s2537] sm:$0xff] %v2554
          $region57: #{tpu_custom_call.1} parent=51 // loop_footer
            %s2535 = sadd.s32 1, %s2531
          $region58: #{tpu_custom_call.1} parent=51 // loop_footer_branch
            %2530 = sbr.rel target = $region54
          $region59: #{tpu_custom_call.1} parent=51 // loop_exit
            _
        $region52: #{tpu_custom_call.1} parent=43 // pred_fallthru
          _
        // Predicated region
        $region60: #{tpu_custom_call.1} parent=43 // pred_check
          %p2556 = pneg %p175
        $region61: #{tpu_custom_call.1} parent=43 // pred_check_branch
          %2558 = sbr.rel (%p2556) target = $region63
        $region62: #{tpu_custom_call.1} parent=43 // pred_region
          %s2560 = ssub.s32 1536, 1536
          %2561 = vsyncadd [#allocation6], %s2560
          %s2562 = sshll.u32 [#allocation5], 4
          %s2563 = int_to_ptr.vmem [resolvable:$true] %s2562
          %2568 = dma.vmem_to_hbm [thread:$0]  %s2563, 1536, %s6, [#allocation6], 128, 128, 8
        $region63: #{tpu_custom_call.1} parent=43 // pred_fallthru
          _
        // Predicated region
        $region64: #{tpu_custom_call.1} parent=43 // pred_check
          %p2569 = pneg %p175
        $region65: #{tpu_custom_call.1} parent=43 // pred_check_branch
          %2571 = sbr.rel (%p2569) target = $region67
        $region66: #{tpu_custom_call.1} parent=43 // pred_region
          %2572 = dma.done [#allocation6], 1536
        $region67: #{tpu_custom_call.1} parent=43 // pred_fallthru
          _
      $region44: #{tpu_custom_call.1} parent=5 // pred_fallthru
        _
      %p2573 = scmp.le.s32.totalorder 2, %s14
      // Predicated region
      $region68: #{tpu_custom_call.1} parent=5 // pred_check
        %p2574 = pneg %p2573
      $region69: #{tpu_custom_call.1} parent=5 // pred_check_branch
        %2576 = sbr.rel (%p2574) target = $region71
      $region70: #{tpu_custom_call.1} parent=5 // pred_region
        %s2577 = ssub.s32 %s14, 2
      $region71: #{tpu_custom_call.1} parent=5 // pred_fallthru
        _
    $region6: #{tpu_custom_call.1} parent=1 // loop_footer
      %s18 = sadd.s32 1, %s14
    $region7: #{tpu_custom_call.1} parent=1 // loop_footer_branch
      %13 = sbr.rel target = $region3
    $region8: #{tpu_custom_call.1} parent=1 // loop_exit
      _
    %2578 = vsyncpa [#allocation6], 1
    %s2579 = scalar_lea.sflag [#allocation6], 1
    %2580 = vsyncpa %s2579, 1

</llo_original>
